<compile_context>
chip_gen: v6e
topology: v6e:2x2x1
jax: 0.10.0
libtpu: 0.0.40
codegen_flags: <defaults>
</compile_context>

<pallas_src>
import functools
import math

import jax
import jax.numpy as jnp
from jax.experimental import pallas as pl
from jax.experimental.pallas import tpu as pltpu


# ----------------------------- in-kernel helpers -----------------------------

def _layer_norm(x, gamma, beta, eps=1e-5):
    # x: (N, D) f32, gamma/beta: (1, D)   (PyTorch LayerNorm semantics, eps=1e-5)
    mean = jnp.mean(x, axis=-1, keepdims=True)
    var = jnp.mean((x - mean) ** 2, axis=-1, keepdims=True)
    return (x - mean) * jax.lax.rsqrt(var + eps) * gamma + beta


# ----------------------------- fused encoder-stack kernel --------------------

def encoder_stack_kernel(x_ref,
                         wq_ref, bq_ref, wk_ref, bk_ref, wv_ref, bv_ref,
                         wo_ref, bo_ref,
                         g1_ref, be1_ref,
                         w1_ref, b1_ref, w2_ref, b2_ref,
                         g2_ref, be2_ref,
                         gf_ref, bf_ref,
                         o_ref,
                         x_vmem,
                         *, batch, seq, num_heads):
    layer = pl.program_id(0)
    num_layers = pl.num_programs(0)

    # Load the embedded input once; afterwards the activation is carried in VMEM.
    @pl.when(layer == 0)
    def _():
        x_vmem[...] = x_ref[...]

    x = x_vmem[...]                              # (B*S, D) f32
    BS, D = x.shape
    H = num_heads
    dk = D // H
    scale = 1.0 / math.sqrt(dk)

    # --- multi-headed self attention (bf16 MXU inputs, f32 accumulation) ---
    xb = x.astype(jnp.bfloat16)
    q = jnp.dot(xb, wq_ref[0], preferred_element_type=jnp.float32) + bq_ref[0]
    k = jnp.dot(xb, wk_ref[0], preferred_element_type=jnp.float32) + bk_ref[0]
    v = jnp.dot(xb, wv_ref[0], preferred_element_type=jnp.float32) + bv_ref[0]
    q = q * scale                                # fold 1/sqrt(dk) into q once

    def split_heads(t):
        # (B*S, D) f32 -> (B*H, S, dk) bf16
        return (t.reshape(batch, seq, H, dk)
                 .transpose(0, 2, 1, 3)
                 .reshape(batch * H, seq, dk)
                 .astype(jnp.bfloat16))

    qh, kh, vh = split_heads(q), split_heads(k), split_heads(v)

    # Batched score / PV contractions instead of a per-head loop + concatenate.
    scores = jnp.einsum('nqd,nkd->nqk', qh, kh,
                        preferred_element_type=jnp.float32)      # (B*H, S, S)
    scores = scores - jnp.max(scores, axis=-1, keepdims=True)
    p = jnp.exp(scores)
    p = p * pl.reciprocal(jnp.sum(p, axis=-1, keepdims=True), approx=True)

    ctx = jnp.einsum('nqk,nkd->nqd', p.astype(jnp.bfloat16), vh,
                     preferred_element_type=jnp.float32)         # (B*H, S, dk)
    ctx = (ctx.reshape(batch, H, seq, dk)
              .transpose(0, 2, 1, 3)
              .reshape(BS, D))
    att = jnp.dot(ctx.astype(jnp.bfloat16), wo_ref[0],
                  preferred_element_type=jnp.float32) + bo_ref[0]

    # --- add & norm 1 (f32) ---
    h1 = _layer_norm(x + att, g1_ref[0], be1_ref[0])

    # --- feed forward (Linear -> ReLU -> Linear), bf16 MXU inputs ---
    ff = jnp.dot(h1.astype(jnp.bfloat16), w1_ref[0],
                 preferred_element_type=jnp.float32) + b1_ref[0]
    ff = jnp.maximum(ff, 0.0)
    ff = jnp.dot(ff.astype(jnp.bfloat16), w2_ref[0],
                 preferred_element_type=jnp.float32) + b2_ref[0]

    # --- add & norm 2 ---
    out = _layer_norm(h1 + ff, g2_ref[0], be2_ref[0])
    x_vmem[...] = out                             # carry to next layer

    # --- fused final LayerNorm on the last layer only ---
    @pl.when(layer == num_layers - 1)
    def _():
        o_ref[...] = _layer_norm(out, gf_ref[...], bf_ref[...])


def encoder_stack(x2d, layers, norm_g, norm_b, *, batch, seq, num_heads):
    L, D, _ = layers["wq"].shape
    F = layers["w1"].shape[2]
    BS = batch * seq
    assert D % num_heads == 0, "d_model must be divisible by num_heads"
    assert x2d.shape == (BS, D)

    def per_layer(shape):
        nrest = len(shape) - 1
        return pl.BlockSpec((1,) + tuple(shape[1:]),
                            lambda l: (l,) + (0,) * nrest)

    def const(shape):
        n = len(shape)
        return pl.BlockSpec(tuple(shape), lambda l: (0,) * n)

    in_specs = [
        const((BS, D)),                                 # x (read at layer 0)
        per_layer((L, D, D)), per_layer((L, 1, D)),     # wq, bq
        per_layer((L, D, D)), per_layer((L, 1, D)),     # wk, bk
        per_layer((L, D, D)), per_layer((L, 1, D)),     # wv, bv
        per_layer((L, D, D)), per_layer((L, 1, D)),     # wo, bo
        per_layer((L, 1, D)), per_layer((L, 1, D)),     # ln1 gamma, beta
        per_layer((L, D, F)), per_layer((L, 1, F)),     # w1, b1
        per_layer((L, F, D)), per_layer((L, 1, D)),     # w2, b2
        per_layer((L, 1, D)), per_layer((L, 1, D)),     # ln2 gamma, beta
        const((1, D)), const((1, D)),                   # final norm gamma, beta
    ]

    kernel = functools.partial(encoder_stack_kernel,
                               batch=batch, seq=seq, num_heads=num_heads)

    return pl.pallas_call(
        kernel,
        out_shape=jax.ShapeDtypeStruct((BS, D), jnp.float32),
        grid=(L,),
        in_specs=in_specs,
        out_specs=const((BS, D)),
        scratch_shapes=[pltpu.VMEM((BS, D), jnp.float32)],
        compiler_params=pltpu.CompilerParams(
            dimension_semantics=("arbitrary",),          # layers are sequential
            vmem_limit_bytes=32 * 1024 * 1024,
        ),
    )(x2d,
      layers["wq"], layers["bq"], layers["wk"], layers["bk"],
      layers["wv"], layers["bv"], layers["wo"], layers["bo"],
      layers["g1"], layers["be1"],
      layers["w1"], layers["b1"], layers["w2"], layers["b2"],
      layers["g2"], layers["be2"],
      norm_g, norm_b)


# ----------------------------- glue: embedding + pos-enc ---------------------

def sinusoidal_pos_enc(seq_len, d_model):
    pos = jnp.arange(seq_len, dtype=jnp.float32)[:, None]
    i = jnp.arange(0, d_model, 2, dtype=jnp.float32)
    div = jnp.exp(-math.log(10000.0) * i / d_model)
    pe = jnp.zeros((seq_len, d_model), jnp.float32)
    pe = pe.at[:, 0::2].set(jnp.sin(pos * div))
    pe = pe.at[:, 1::2].set(jnp.cos(pos * div))
    return pe


def encoder_basic_forward(tokens, params, num_heads):
    B, S = tokens.shape
    D = params["embedding"].shape[1]
    x = jnp.take(params["embedding"], tokens, axis=0)          # (B, S, D)
    x = x + params["pos_enc"][None, :S, :]
    out2d = encoder_stack(x.reshape(B * S, D), params["layers"],
                          params["norm_g"], params["norm_b"],
                          batch=B, seq=S, num_heads=num_heads)
    return out2d.reshape(B, S, D)


# ----------------------------- deterministic param init ----------------------

def init_params(key, num_embeds, d_model, n_layer, d_ff, max_seq):
    keys = jax.random.split(key, 1 + n_layer)

    def linear(k, din, dout):
        kw, kb = jax.random.split(k)
        w = jax.random.normal(kw, (din, dout), jnp.float32) * 0.05
        b = jax.random.normal(kb, (1, dout), jnp.float32) * 0.01
        return w, b

    per_layer = []
    for li in range(n_layer):
        lk = jax.random.split(keys[1 + li], 6)
        wq, bq = linear(lk[0], d_model, d_model)
        wk, bk = linear(lk[1], d_model, d_model)
        wv, bv = linear(lk[2], d_model, d_model)
        wo, bo = linear(lk[3], d_model, d_model)
        w1, b1 = linear(lk[4], d_model, d_ff)
        w2, b2 = linear(lk[5], d_ff, d_model)
        per_layer.append(dict(
            wq=wq, bq=bq, wk=wk, bk=bk, wv=wv, bv=bv, wo=wo, bo=bo,
            g1=jnp.ones((1, d_model), jnp.float32),
            be1=jnp.zeros((1, d_model), jnp.float32),
            w1=w1, b1=b1, w2=w2, b2=b2,
            g2=jnp.ones((1, d_model), jnp.float32),
            be2=jnp.zeros((1, d_model), jnp.float32),
        ))

    # Stack the per-layer params along a leading layer axis for the layer grid.
    stacked = {k: jnp.stack([lp[k] for lp in per_layer], axis=0)
               for k in per_layer[0]}
    # MXU-friendly storage: weight matrices in bf16 (accumulation stays f32).
    for name in ("wq", "wk", "wv", "wo", "w1", "w2"):
        stacked[name] = stacked[name].astype(jnp.bfloat16)

    return dict(
        embedding=jax.random.normal(keys[0], (num_embeds, d_model), jnp.float32) * 0.1,
        pos_enc=sinusoidal_pos_enc(max_seq, d_model),
        layers=stacked,
        norm_g=jnp.ones((1, d_model), jnp.float32),
        norm_b=jnp.zeros((1, d_model), jnp.float32),
    )


# ----------------------------- main -----------------------------------------

if __name__ == "__main__":
    num_embeds, d_model, n_layer, h, d_ff = 50, 32, 2, 4, 64
    batch, seq = 2, 8

    key = jax.random.PRNGKey(0)
    pkey, tkey = jax.random.split(key)
    params = init_params(pkey, num_embeds, d_model, n_layer, d_ff, max_seq=seq)
    tokens = jax.random.randint(tkey, (batch, seq), 0, num_embeds, dtype=jnp.int32)

    out = encoder_basic_forward(tokens, params, num_heads=h)
    out = jax.block_until_ready(out)
    assert out.shape == (batch, seq, d_model)
    assert jnp.all(jnp.isfinite(out))
    print("KERNEL_OK")
</pallas_src>

<mosaic_0001>
module attributes {stable_mosaic.version = 11 : i64} {
  func.func @encoder_stack_kernel(%arg0: i32, %arg1: memref<16x32xf32, #tpu.memory_space<vmem>>, %arg2: memref<1x32x32xbf16, #tpu.memory_space<vmem>>, %arg3: memref<1x1x32xf32, #tpu.memory_space<vmem>>, %arg4: memref<1x32x32xbf16, #tpu.memory_space<vmem>>, %arg5: memref<1x1x32xf32, #tpu.memory_space<vmem>>, %arg6: memref<1x32x32xbf16, #tpu.memory_space<vmem>>, %arg7: memref<1x1x32xf32, #tpu.memory_space<vmem>>, %arg8: memref<1x32x32xbf16, #tpu.memory_space<vmem>>, %arg9: memref<1x1x32xf32, #tpu.memory_space<vmem>>, %arg10: memref<1x1x32xf32, #tpu.memory_space<vmem>>, %arg11: memref<1x1x32xf32, #tpu.memory_space<vmem>>, %arg12: memref<1x32x64xbf16, #tpu.memory_space<vmem>>, %arg13: memref<1x1x64xf32, #tpu.memory_space<vmem>>, %arg14: memref<1x64x32xbf16, #tpu.memory_space<vmem>>, %arg15: memref<1x1x32xf32, #tpu.memory_space<vmem>>, %arg16: memref<1x1x32xf32, #tpu.memory_space<vmem>>, %arg17: memref<1x1x32xf32, #tpu.memory_space<vmem>>, %arg18: memref<1x32xf32, #tpu.memory_space<vmem>>, %arg19: memref<1x32xf32, #tpu.memory_space<vmem>>, %arg20: memref<16x32xf32, #tpu.memory_space<vmem>>, %arg21: memref<16x32xf32, #tpu.memory_space<vmem>>) attributes {dimension_semantics = [#tpu.dimension_semantics<arbitrary>], iteration_bounds = array<i64: 2>, scalar_prefetch = 0 : i64, scratch_operands = 1 : i64, tpu.core_type = #tpu.core_type<tc>, window_params = [{pipeline_mode = #tpu.pipeline_mode<synchronous>, transform_indices = @transform_0, window_bounds = array<i64: 16, 32>}, {transform_indices = @transform_1, window_bounds = array<i64: 1, 32, 32>}, {transform_indices = @transform_2, window_bounds = array<i64: 1, 1, 32>}, {transform_indices = @transform_3, window_bounds = array<i64: 1, 32, 32>}, {transform_indices = @transform_4, window_bounds = array<i64: 1, 1, 32>}, {transform_indices = @transform_5, window_bounds = array<i64: 1, 32, 32>}, {transform_indices = @transform_6, window_bounds = array<i64: 1, 1, 32>}, {transform_indices = @transform_7, window_bounds = array<i64: 1, 32, 32>}, {transform_indices = @transform_8, window_bounds = array<i64: 1, 1, 32>}, {transform_indices = @transform_9, window_bounds = array<i64: 1, 1, 32>}, {transform_indices = @transform_10, window_bounds = array<i64: 1, 1, 32>}, {transform_indices = @transform_11, window_bounds = array<i64: 1, 32, 64>}, {transform_indices = @transform_12, window_bounds = array<i64: 1, 1, 64>}, {transform_indices = @transform_13, window_bounds = array<i64: 1, 64, 32>}, {transform_indices = @transform_14, window_bounds = array<i64: 1, 1, 32>}, {transform_indices = @transform_15, window_bounds = array<i64: 1, 1, 32>}, {transform_indices = @transform_16, window_bounds = array<i64: 1, 1, 32>}, {pipeline_mode = #tpu.pipeline_mode<synchronous>, transform_indices = @transform_17, window_bounds = array<i64: 1, 32>}, {pipeline_mode = #tpu.pipeline_mode<synchronous>, transform_indices = @transform_18, window_bounds = array<i64: 1, 32>}, {pipeline_mode = #tpu.pipeline_mode<synchronous>, transform_indices = @transform_19, window_bounds = array<i64: 16, 32>}]} {
    %c0_i32 = arith.constant 0 : i32
    %0 = arith.cmpi eq, %arg0, %c0_i32 : i32
    %1 = arith.extui %0 : i1 to i32
    %c0_i32_0 = arith.constant 0 : i32
    %2 = arith.cmpi ne, %1, %c0_i32_0 : i32
    scf.if %2 {
      %c0_74 = arith.constant 0 : index
      %c0_75 = arith.constant 0 : index
      %140 = vector.load %arg1[%c0_74, %c0_75] : memref<16x32xf32, #tpu.memory_space<vmem>>, vector<16x32xf32>
      %c0_76 = arith.constant 0 : index
      %c0_77 = arith.constant 0 : index
      %141 = vector.load %arg21[%c0_76, %c0_77] : memref<16x32xf32, #tpu.memory_space<vmem>>, vector<16x32xf32>
      tpu.vector_store %arg21[%c0_76, %c0_77], %140 {strides = array<i32>} : memref<16x32xf32, #tpu.memory_space<vmem>>, vector<16x32xf32>,
    } else {
    }
    %c0 = arith.constant 0 : index
    %c0_1 = arith.constant 0 : index
    %3 = vector.load %arg21[%c0, %c0_1] : memref<16x32xf32, #tpu.memory_space<vmem>>, vector<16x32xf32>
    %4 = arith.truncf %3 : vector<16x32xf32> to vector<16x32xbf16>
    %c0_2 = arith.constant 0 : index
    %c0_3 = arith.constant 0 : index
    %c0_4 = arith.constant 0 : index
    %5 = vector.load %arg2[%c0_2, %c0_3, %c0_4] : memref<1x32x32xbf16, #tpu.memory_space<vmem>>, vector<1x32x32xbf16>
    %6 = vector.shape_cast %5 : vector<1x32x32xbf16> to vector<32x32xbf16>
    %cst = arith.constant dense<0.000000e+00> : vector<16x32xf32>
    %7 = tpu.matmul %4, %6, %cst {dimension_numbers = #tpu.dot_dimension_numbers<[1], [0], [0], [1], [0, 0, 1, 1], [], []>} : vector<16x32xbf16>, vector<32x32xbf16>, vector<16x32xf32> -> vector<16x32xf32>
    %c0_5 = arith.constant 0 : index
    %c0_6 = arith.constant 0 : index
    %c0_7 = arith.constant 0 : index
    %8 = vector.load %arg3[%c0_5, %c0_6, %c0_7] : memref<1x1x32xf32, #tpu.memory_space<vmem>>, vector<1x1x32xf32>
    %9 = vector.shape_cast %8 : vector<1x1x32xf32> to vector<1x32xf32>
    %10 = vector.broadcast %9 : vector<1x32xf32> to vector<16x32xf32>
    %11 = arith.addf %7, %10 : vector<16x32xf32>
    %c0_8 = arith.constant 0 : index
    %c0_9 = arith.constant 0 : index
    %c0_10 = arith.constant 0 : index
    %12 = vector.load %arg4[%c0_8, %c0_9, %c0_10] : memref<1x32x32xbf16, #tpu.memory_space<vmem>>, vector<1x32x32xbf16>
    %13 = vector.shape_cast %12 : vector<1x32x32xbf16> to vector<32x32xbf16>
    %cst_11 = arith.constant dense<0.000000e+00> : vector<16x32xf32>
    %14 = tpu.matmul %4, %13, %cst_11 {dimension_numbers = #tpu.dot_dimension_numbers<[1], [0], [0], [1], [0, 0, 1, 1], [], []>} : vector<16x32xbf16>, vector<32x32xbf16>, vector<16x32xf32> -> vector<16x32xf32>
    %c0_12 = arith.constant 0 : index
    %c0_13 = arith.constant 0 : index
    %c0_14 = arith.constant 0 : index
    %15 = vector.load %arg5[%c0_12, %c0_13, %c0_14] : memref<1x1x32xf32, #tpu.memory_space<vmem>>, vector<1x1x32xf32>
    %16 = vector.shape_cast %15 : vector<1x1x32xf32> to vector<1x32xf32>
    %17 = vector.broadcast %16 : vector<1x32xf32> to vector<16x32xf32>
    %18 = arith.addf %14, %17 : vector<16x32xf32>
    %c0_15 = arith.constant 0 : index
    %c0_16 = arith.constant 0 : index
    %c0_17 = arith.constant 0 : index
    %19 = vector.load %arg6[%c0_15, %c0_16, %c0_17] : memref<1x32x32xbf16, #tpu.memory_space<vmem>>, vector<1x32x32xbf16>
    %20 = vector.shape_cast %19 : vector<1x32x32xbf16> to vector<32x32xbf16>
    %cst_18 = arith.constant dense<0.000000e+00> : vector<16x32xf32>
    %21 = tpu.matmul %4, %20, %cst_18 {dimension_numbers = #tpu.dot_dimension_numbers<[1], [0], [0], [1], [0, 0, 1, 1], [], []>} : vector<16x32xbf16>, vector<32x32xbf16>, vector<16x32xf32> -> vector<16x32xf32>
    %c0_19 = arith.constant 0 : index
    %c0_20 = arith.constant 0 : index
    %c0_21 = arith.constant 0 : index
    %22 = vector.load %arg7[%c0_19, %c0_20, %c0_21] : memref<1x1x32xf32, #tpu.memory_space<vmem>>, vector<1x1x32xf32>
    %23 = vector.shape_cast %22 : vector<1x1x32xf32> to vector<1x32xf32>
    %24 = vector.broadcast %23 : vector<1x32xf32> to vector<16x32xf32>
    %25 = arith.addf %21, %24 : vector<16x32xf32>
    %cst_22 = arith.constant 0.353553385 : f32
    %26 = vector.broadcast %cst_22 : f32 to vector<16x32xf32>
    %27 = arith.mulf %11, %26 : vector<16x32xf32>
    %28 = vector.shape_cast %27 : vector<16x32xf32> to vector<2x8x4x8xf32>
    %29 = tpu.transpose %28, [0, 2, 1, 3] : vector<2x8x4x8xf32> -> vector<2x4x8x8xf32>
    %30 = vector.shape_cast %29 : vector<2x4x8x8xf32> to vector<8x8x8xf32>
    %31 = arith.truncf %30 : vector<8x8x8xf32> to vector<8x8x8xbf16>
    %32 = vector.shape_cast %18 : vector<16x32xf32> to vector<2x8x4x8xf32>
    %33 = tpu.transpose %32, [0, 2, 1, 3] : vector<2x8x4x8xf32> -> vector<2x4x8x8xf32>
    %34 = vector.shape_cast %33 : vector<2x4x8x8xf32> to vector<8x8x8xf32>
    %35 = arith.truncf %34 : vector<8x8x8xf32> to vector<8x8x8xbf16>
    %36 = vector.shape_cast %25 : vector<16x32xf32> to vector<2x8x4x8xf32>
    %37 = tpu.transpose %36, [0, 2, 1, 3] : vector<2x8x4x8xf32> -> vector<2x4x8x8xf32>
    %38 = vector.shape_cast %37 : vector<2x4x8x8xf32> to vector<8x8x8xf32>
    %39 = arith.truncf %38 : vector<8x8x8xf32> to vector<8x8x8xbf16>
    "tpu.trace_start"() <{level = 10 : i32, message = "nqd,nkd->nqk"}> : () -> ()
    %cst_23 = arith.constant dense<0.000000e+00> : vector<8x8x8xf32>
    %40 = tpu.matmul %31, %35, %cst_23 {dimension_numbers = #tpu.dot_dimension_numbers<[2], [2], [1], [1], [0, 0, 0, 1, 1, 1], [0], [0]>} : vector<8x8x8xbf16>, vector<8x8x8xbf16>, vector<8x8x8xf32> -> vector<8x8x8xf32>
    "tpu.trace_stop"() : () -> ()
    %cst_24 = arith.constant dense<0xFF800000> : vector<8x8xf32>
    %41 = vector.multi_reduction <maximumf>, %40, %cst_24 [2] : vector<8x8x8xf32> to vector<8x8xf32>
    %42 = vector.shape_cast %41 : vector<8x8xf32> to vector<8x8x1xf32>
    %43 = vector.broadcast %42 : vector<8x8x1xf32> to vector<8x8x8xf32>
    %44 = arith.subf %40, %43 : vector<8x8x8xf32>
    %45 = math.exp %44 : vector<8x8x8xf32>
    %cst_25 = arith.constant dense<0.000000e+00> : vector<8x8xf32>
    %46 = vector.multi_reduction <add>, %45, %cst_25 [2] : vector<8x8x8xf32> to vector<8x8xf32>
    %47 = vector.shape_cast %46 : vector<8x8xf32> to vector<8x8x1xf32>
    %48 = tpu.reciprocal %47 {approx = true} : vector<8x8x1xf32> -> vector<8x8x1xf32>
    %49 = vector.broadcast %48 : vector<8x8x1xf32> to vector<8x8x8xf32>
    %50 = arith.mulf %45, %49 : vector<8x8x8xf32>
    %51 = arith.truncf %50 : vector<8x8x8xf32> to vector<8x8x8xbf16>
    "tpu.trace_start"() <{level = 10 : i32, message = "nqk,nkd->nqd"}> : () -> ()
    %cst_26 = arith.constant dense<0.000000e+00> : vector<8x8x8xf32>
    %52 = tpu.matmul %51, %39, %cst_26 {dimension_numbers = #tpu.dot_dimension_numbers<[2], [1], [1], [2], [0, 0, 0, 1, 1, 2], [0], [0]>} : vector<8x8x8xbf16>, vector<8x8x8xbf16>, vector<8x8x8xf32> -> vector<8x8x8xf32>
    "tpu.trace_stop"() : () -> ()
    %53 = vector.shape_cast %52 : vector<8x8x8xf32> to vector<2x4x8x8xf32>
    %54 = tpu.transpose %53, [0, 2, 1, 3] : vector<2x4x8x8xf32> -> vector<2x8x4x8xf32>
    %55 = vector.shape_cast %54 : vector<2x8x4x8xf32> to vector<16x32xf32>
    %56 = arith.truncf %55 : vector<16x32xf32> to vector<16x32xbf16>
    %c0_27 = arith.constant 0 : index
    %c0_28 = arith.constant 0 : index
    %c0_29 = arith.constant 0 : index
    %57 = vector.load %arg8[%c0_27, %c0_28, %c0_29] : memref<1x32x32xbf16, #tpu.memory_space<vmem>>, vector<1x32x32xbf16>
    %58 = vector.shape_cast %57 : vector<1x32x32xbf16> to vector<32x32xbf16>
    %cst_30 = arith.constant dense<0.000000e+00> : vector<16x32xf32>
    %59 = tpu.matmul %56, %58, %cst_30 {dimension_numbers = #tpu.dot_dimension_numbers<[1], [0], [0], [1], [0, 0, 1, 1], [], []>} : vector<16x32xbf16>, vector<32x32xbf16>, vector<16x32xf32> -> vector<16x32xf32>
    %c0_31 = arith.constant 0 : index
    %c0_32 = arith.constant 0 : index
    %c0_33 = arith.constant 0 : index
    %60 = vector.load %arg9[%c0_31, %c0_32, %c0_33] : memref<1x1x32xf32, #tpu.memory_space<vmem>>, vector<1x1x32xf32>
    %61 = vector.shape_cast %60 : vector<1x1x32xf32> to vector<1x32xf32>
    %62 = vector.broadcast %61 : vector<1x32xf32> to vector<16x32xf32>
    %63 = arith.addf %59, %62 : vector<16x32xf32>
    %64 = arith.addf %3, %63 : vector<16x32xf32>
    %c0_34 = arith.constant 0 : index
    %c0_35 = arith.constant 0 : index
    %c0_36 = arith.constant 0 : index
    %65 = vector.load %arg10[%c0_34, %c0_35, %c0_36] : memref<1x1x32xf32, #tpu.memory_space<vmem>>, vector<1x1x32xf32>
    %66 = vector.shape_cast %65 : vector<1x1x32xf32> to vector<1x32xf32>
    %c0_37 = arith.constant 0 : index
    %c0_38 = arith.constant 0 : index
    %c0_39 = arith.constant 0 : index
    %67 = vector.load %arg11[%c0_37, %c0_38, %c0_39] : memref<1x1x32xf32, #tpu.memory_space<vmem>>, vector<1x1x32xf32>
    %68 = vector.shape_cast %67 : vector<1x1x32xf32> to vector<1x32xf32>
    %cst_40 = arith.constant dense<0.000000e+00> : vector<16xf32>
    %69 = vector.multi_reduction <add>, %64, %cst_40 [1] : vector<16x32xf32> to vector<16xf32>
    %70 = vector.shape_cast %69 : vector<16xf32> to vector<16x1xf32>
    %cst_41 = arith.constant 3.200000e+01 : f32
    %71 = vector.broadcast %cst_41 : f32 to vector<16x1xf32>
    %72 = arith.divf %70, %71 : vector<16x1xf32>
    %73 = vector.broadcast %72 : vector<16x1xf32> to vector<16x32xf32>
    %74 = arith.subf %64, %73 : vector<16x32xf32>
    %75 = arith.mulf %74, %74 : vector<16x32xf32>
    %cst_42 = arith.constant dense<0.000000e+00> : vector<16xf32>
    %76 = vector.multi_reduction <add>, %75, %cst_42 [1] : vector<16x32xf32> to vector<16xf32>
    %77 = vector.shape_cast %76 : vector<16xf32> to vector<16x1xf32>
    %cst_43 = arith.constant 3.200000e+01 : f32
    %78 = vector.broadcast %cst_43 : f32 to vector<16x1xf32>
    %79 = arith.divf %77, %78 : vector<16x1xf32>
    %80 = vector.broadcast %72 : vector<16x1xf32> to vector<16x32xf32>
    %81 = arith.subf %64, %80 : vector<16x32xf32>
    %cst_44 = arith.constant 9.99999974E-6 : f32
    %82 = vector.broadcast %cst_44 : f32 to vector<16x1xf32>
    %83 = arith.addf %79, %82 : vector<16x1xf32>
    %84 = math.rsqrt %83 : vector<16x1xf32>
    %85 = vector.broadcast %84 : vector<16x1xf32> to vector<16x32xf32>
    %86 = arith.mulf %81, %85 : vector<16x32xf32>
    %87 = vector.broadcast %66 : vector<1x32xf32> to vector<16x32xf32>
    %88 = arith.mulf %86, %87 : vector<16x32xf32>
    %89 = vector.broadcast %68 : vector<1x32xf32> to vector<16x32xf32>
    %90 = arith.addf %88, %89 : vector<16x32xf32>
    %91 = arith.truncf %90 : vector<16x32xf32> to vector<16x32xbf16>
    %c0_45 = arith.constant 0 : index
    %c0_46 = arith.constant 0 : index
    %c0_47 = arith.constant 0 : index
    %92 = vector.load %arg12[%c0_45, %c0_46, %c0_47] : memref<1x32x64xbf16, #tpu.memory_space<vmem>>, vector<1x32x64xbf16>
    %93 = vector.shape_cast %92 : vector<1x32x64xbf16> to vector<32x64xbf16>
    %cst_48 = arith.constant dense<0.000000e+00> : vector<16x64xf32>
    %94 = tpu.matmul %91, %93, %cst_48 {dimension_numbers = #tpu.dot_dimension_numbers<[1], [0], [0], [1], [0, 0, 1, 1], [], []>} : vector<16x32xbf16>, vector<32x64xbf16>, vector<16x64xf32> -> vector<16x64xf32>
    %c0_49 = arith.constant 0 : index
    %c0_50 = arith.constant 0 : index
    %c0_51 = arith.constant 0 : index
    %95 = vector.load %arg13[%c0_49, %c0_50, %c0_51] : memref<1x1x64xf32, #tpu.memory_space<vmem>>, vector<1x1x64xf32>
    %96 = vector.shape_cast %95 : vector<1x1x64xf32> to vector<1x64xf32>
    %97 = vector.broadcast %96 : vector<1x64xf32> to vector<16x64xf32>
    %98 = arith.addf %94, %97 : vector<16x64xf32>
    %cst_52 = arith.constant 0.000000e+00 : f32
    %99 = vector.broadcast %cst_52 : f32 to vector<16x64xf32>
    %100 = arith.maximumf %98, %99 : vector<16x64xf32>
    %101 = arith.truncf %100 : vector<16x64xf32> to vector<16x64xbf16>
    %c0_53 = arith.constant 0 : index
    %c0_54 = arith.constant 0 : index
    %c0_55 = arith.constant 0 : index
    %102 = vector.load %arg14[%c0_53, %c0_54, %c0_55] : memref<1x64x32xbf16, #tpu.memory_space<vmem>>, vector<1x64x32xbf16>
    %103 = vector.shape_cast %102 : vector<1x64x32xbf16> to vector<64x32xbf16>
    %cst_56 = arith.constant dense<0.000000e+00> : vector<16x32xf32>
    %104 = tpu.matmul %101, %103, %cst_56 {dimension_numbers = #tpu.dot_dimension_numbers<[1], [0], [0], [1], [0, 0, 1, 1], [], []>} : vector<16x64xbf16>, vector<64x32xbf16>, vector<16x32xf32> -> vector<16x32xf32>
    %c0_57 = arith.constant 0 : index
    %c0_58 = arith.constant 0 : index
    %c0_59 = arith.constant 0 : index
    %105 = vector.load %arg15[%c0_57, %c0_58, %c0_59] : memref<1x1x32xf32, #tpu.memory_space<vmem>>, vector<1x1x32xf32>
    %106 = vector.shape_cast %105 : vector<1x1x32xf32> to vector<1x32xf32>
    %107 = vector.broadcast %106 : vector<1x32xf32> to vector<16x32xf32>
    %108 = arith.addf %104, %107 : vector<16x32xf32>
    %109 = arith.addf %90, %108 : vector<16x32xf32>
    %c0_60 = arith.constant 0 : index
    %c0_61 = arith.constant 0 : index
    %c0_62 = arith.constant 0 : index
    %110 = vector.load %arg16[%c0_60, %c0_61, %c0_62] : memref<1x1x32xf32, #tpu.memory_space<vmem>>, vector<1x1x32xf32>
    %111 = vector.shape_cast %110 : vector<1x1x32xf32> to vector<1x32xf32>
    %c0_63 = arith.constant 0 : index
    %c0_64 = arith.constant 0 : index
    %c0_65 = arith.constant 0 : index
    %112 = vector.load %arg17[%c0_63, %c0_64, %c0_65] : memref<1x1x32xf32, #tpu.memory_space<vmem>>, vector<1x1x32xf32>
    %113 = vector.shape_cast %112 : vector<1x1x32xf32> to vector<1x32xf32>
    %cst_66 = arith.constant dense<0.000000e+00> : vector<16xf32>
    %114 = vector.multi_reduction <add>, %109, %cst_66 [1] : vector<16x32xf32> to vector<16xf32>
    %115 = vector.shape_cast %114 : vector<16xf32> to vector<16x1xf32>
    %cst_67 = arith.constant 3.200000e+01 : f32
    %116 = vector.broadcast %cst_67 : f32 to vector<16x1xf32>
    %117 = arith.divf %115, %116 : vector<16x1xf32>
    %118 = vector.broadcast %117 : vector<16x1xf32> to vector<16x32xf32>
    %119 = arith.subf %109, %118 : vector<16x32xf32>
    %120 = arith.mulf %119, %119 : vector<16x32xf32>
    %cst_68 = arith.constant dense<0.000000e+00> : vector<16xf32>
    %121 = vector.multi_reduction <add>, %120, %cst_68 [1] : vector<16x32xf32> to vector<16xf32>
    %122 = vector.shape_cast %121 : vector<16xf32> to vector<16x1xf32>
    %cst_69 = arith.constant 3.200000e+01 : f32
    %123 = vector.broadcast %cst_69 : f32 to vector<16x1xf32>
    %124 = arith.divf %122, %123 : vector<16x1xf32>
    %125 = vector.broadcast %117 : vector<16x1xf32> to vector<16x32xf32>
    %126 = arith.subf %109, %125 : vector<16x32xf32>
    %cst_70 = arith.constant 9.99999974E-6 : f32
    %127 = vector.broadcast %cst_70 : f32 to vector<16x1xf32>
    %128 = arith.addf %124, %127 : vector<16x1xf32>
    %129 = math.rsqrt %128 : vector<16x1xf32>
    %130 = vector.broadcast %129 : vector<16x1xf32> to vector<16x32xf32>
    %131 = arith.mulf %126, %130 : vector<16x32xf32>
    %132 = vector.broadcast %111 : vector<1x32xf32> to vector<16x32xf32>
    %133 = arith.mulf %131, %132 : vector<16x32xf32>
    %134 = vector.broadcast %113 : vector<1x32xf32> to vector<16x32xf32>
    %135 = arith.addf %133, %134 : vector<16x32xf32>
    %c0_71 = arith.constant 0 : index
    %c0_72 = arith.constant 0 : index
    %136 = vector.load %arg21[%c0_71, %c0_72] : memref<16x32xf32, #tpu.memory_space<vmem>>, vector<16x32xf32>
    tpu.vector_store %arg21[%c0_71, %c0_72], %135 {strides = array<i32>} : memref<16x32xf32, #tpu.memory_space<vmem>>, vector<16x32xf32>,
    %c1_i32 = arith.constant 1 : i32
    %137 = arith.cmpi eq, %arg0, %c1_i32 : i32
    %138 = arith.extui %137 : i1 to i32
    %c0_i32_73 = arith.constant 0 : i32
    %139 = arith.cmpi ne, %138, %c0_i32_73 : i32
    scf.if %139 {
      %c0_74 = arith.constant 0 : index
      %c0_75 = arith.constant 0 : index
      %140 = vector.load %arg18[%c0_74, %c0_75] : memref<1x32xf32, #tpu.memory_space<vmem>>, vector<1x32xf32>
      %c0_76 = arith.constant 0 : index
      %c0_77 = arith.constant 0 : index
      %141 = vector.load %arg19[%c0_76, %c0_77] : memref<1x32xf32, #tpu.memory_space<vmem>>, vector<1x32xf32>
      %cst_78 = arith.constant dense<0.000000e+00> : vector<16xf32>
      %142 = vector.multi_reduction <add>, %135, %cst_78 [1] : vector<16x32xf32> to vector<16xf32>
      %143 = vector.shape_cast %142 : vector<16xf32> to vector<16x1xf32>
      %cst_79 = arith.constant 3.200000e+01 : f32
      %144 = vector.broadcast %cst_79 : f32 to vector<16x1xf32>
      %145 = arith.divf %143, %144 : vector<16x1xf32>
      %146 = vector.broadcast %145 : vector<16x1xf32> to vector<16x32xf32>
      %147 = arith.subf %135, %146 : vector<16x32xf32>
      %148 = arith.mulf %147, %147 : vector<16x32xf32>
      %cst_80 = arith.constant dense<0.000000e+00> : vector<16xf32>
      %149 = vector.multi_reduction <add>, %148, %cst_80 [1] : vector<16x32xf32> to vector<16xf32>
      %150 = vector.shape_cast %149 : vector<16xf32> to vector<16x1xf32>
      %cst_81 = arith.constant 3.200000e+01 : f32
      %151 = vector.broadcast %cst_81 : f32 to vector<16x1xf32>
      %152 = arith.divf %150, %151 : vector<16x1xf32>
      %153 = vector.broadcast %145 : vector<16x1xf32> to vector<16x32xf32>
      %154 = arith.subf %135, %153 : vector<16x32xf32>
      %cst_82 = arith.constant 9.99999974E-6 : f32
      %155 = vector.broadcast %cst_82 : f32 to vector<16x1xf32>
      %156 = arith.addf %152, %155 : vector<16x1xf32>
      %157 = math.rsqrt %156 : vector<16x1xf32>
      %158 = vector.broadcast %157 : vector<16x1xf32> to vector<16x32xf32>
      %159 = arith.mulf %154, %158 : vector<16x32xf32>
      %160 = vector.broadcast %140 : vector<1x32xf32> to vector<16x32xf32>
      %161 = arith.mulf %159, %160 : vector<16x32xf32>
      %162 = vector.broadcast %141 : vector<1x32xf32> to vector<16x32xf32>
      %163 = arith.addf %161, %162 : vector<16x32xf32>
      %c0_83 = arith.constant 0 : index
      %c0_84 = arith.constant 0 : index
      %164 = vector.load %arg20[%c0_83, %c0_84] : memref<16x32xf32, #tpu.memory_space<vmem>>, vector<16x32xf32>
      tpu.vector_store %arg20[%c0_83, %c0_84], %163 {strides = array<i32>} : memref<16x32xf32, #tpu.memory_space<vmem>>, vector<16x32xf32>,
    } else {
    }
    return
  }
  func.func @transform_0(%arg0: i32) -> (i32, i32) {
    %c0_i32 = arith.constant 0 : i32
    %c0_i32_0 = arith.constant 0 : i32
    %c0_i32_1 = arith.constant 0 : i32
    return %c0_i32, %c0_i32_0 : i32, i32
  }
  func.func @transform_1(%arg0: i32) -> (i32, i32, i32) {
    %c0_i32 = arith.constant 0 : i32
    %c0_i32_0 = arith.constant 0 : i32
    %c0_i32_1 = arith.constant 0 : i32
    return %arg0, %c0_i32, %c0_i32_0 : i32, i32, i32
  }
  func.func @transform_2(%arg0: i32) -> (i32, i32, i32) {
    %c0_i32 = arith.constant 0 : i32
    %c0_i32_0 = arith.constant 0 : i32
    %c0_i32_1 = arith.constant 0 : i32
    return %arg0, %c0_i32, %c0_i32_0 : i32, i32, i32
  }
  func.func @transform_3(%arg0: i32) -> (i32, i32, i32) {
    %c0_i32 = arith.constant 0 : i32
    %c0_i32_0 = arith.constant 0 : i32
    %c0_i32_1 = arith.constant 0 : i32
    return %arg0, %c0_i32, %c0_i32_0 : i32, i32, i32
  }
  func.func @transform_4(%arg0: i32) -> (i32, i32, i32) {
    %c0_i32 = arith.constant 0 : i32
    %c0_i32_0 = arith.constant 0 : i32
    %c0_i32_1 = arith.constant 0 : i32
    return %arg0, %c0_i32, %c0_i32_0 : i32, i32, i32
  }
  func.func @transform_5(%arg0: i32) -> (i32, i32, i32) {
    %c0_i32 = arith.constant 0 : i32
    %c0_i32_0 = arith.constant 0 : i32
    %c0_i32_1 = arith.constant 0 : i32
    return %arg0, %c0_i32, %c0_i32_0 : i32, i32, i32
  }
  func.func @transform_6(%arg0: i32) -> (i32, i32, i32) {
    %c0_i32 = arith.constant 0 : i32
    %c0_i32_0 = arith.constant 0 : i32
    %c0_i32_1 = arith.constant 0 : i32
    return %arg0, %c0_i32, %c0_i32_0 : i32, i32, i32
  }
  func.func @transform_7(%arg0: i32) -> (i32, i32, i32) {
    %c0_i32 = arith.constant 0 : i32
    %c0_i32_0 = arith.constant 0 : i32
    %c0_i32_1 = arith.constant 0 : i32
    return %arg0, %c0_i32, %c0_i32_0 : i32, i32, i32
  }
  func.func @transform_8(%arg0: i32) -> (i32, i32, i32) {
    %c0_i32 = arith.constant 0 : i32
    %c0_i32_0 = arith.constant 0 : i32
    %c0_i32_1 = arith.constant 0 : i32
    return %arg0, %c0_i32, %c0_i32_0 : i32, i32, i32
  }
  func.func @transform_9(%arg0: i32) -> (i32, i32, i32) {
    %c0_i32 = arith.constant 0 : i32
    %c0_i32_0 = arith.constant 0 : i32
    %c0_i32_1 = arith.constant 0 : i32
    return %arg0, %c0_i32, %c0_i32_0 : i32, i32, i32
  }
  func.func @transform_10(%arg0: i32) -> (i32, i32, i32) {
    %c0_i32 = arith.constant 0 : i32
    %c0_i32_0 = arith.constant 0 : i32
    %c0_i32_1 = arith.constant 0 : i32
    return %arg0, %c0_i32, %c0_i32_0 : i32, i32, i32
  }
  func.func @transform_11(%arg0: i32) -> (i32, i32, i32) {
    %c0_i32 = arith.constant 0 : i32
    %c0_i32_0 = arith.constant 0 : i32
    %c0_i32_1 = arith.constant 0 : i32
    return %arg0, %c0_i32, %c0_i32_0 : i32, i32, i32
  }
  func.func @transform_12(%arg0: i32) -> (i32, i32, i32) {
    %c0_i32 = arith.constant 0 : i32
    %c0_i32_0 = arith.constant 0 : i32
    %c0_i32_1 = arith.constant 0 : i32
    return %arg0, %c0_i32, %c0_i32_0 : i32, i32, i32
  }
  func.func @transform_13(%arg0: i32) -> (i32, i32, i32) {
    %c0_i32 = arith.constant 0 : i32
    %c0_i32_0 = arith.constant 0 : i32
    %c0_i32_1 = arith.constant 0 : i32
    return %arg0, %c0_i32, %c0_i32_0 : i32, i32, i32
  }
  func.func @transform_14(%arg0: i32) -> (i32, i32, i32) {
    %c0_i32 = arith.constant 0 : i32
    %c0_i32_0 = arith.constant 0 : i32
    %c0_i32_1 = arith.constant 0 : i32
    return %arg0, %c0_i32, %c0_i32_0 : i32, i32, i32
  }
  func.func @transform_15(%arg0: i32) -> (i32, i32, i32) {
    %c0_i32 = arith.constant 0 : i32
    %c0_i32_0 = arith.constant 0 : i32
    %c0_i32_1 = arith.constant 0 : i32
    return %arg0, %c0_i32, %c0_i32_0 : i32, i32, i32
  }
  func.func @transform_16(%arg0: i32) -> (i32, i32, i32) {
    %c0_i32 = arith.constant 0 : i32
    %c0_i32_0 = arith.constant 0 : i32
    %c0_i32_1 = arith.constant 0 : i32
    return %arg0, %c0_i32, %c0_i32_0 : i32, i32, i32
  }
  func.func @transform_17(%arg0: i32) -> (i32, i32) {
    %c0_i32 = arith.constant 0 : i32
    %c0_i32_0 = arith.constant 0 : i32
    %c0_i32_1 = arith.constant 0 : i32
    return %c0_i32, %c0_i32_0 : i32, i32
  }
  func.func @transform_18(%arg0: i32) -> (i32, i32) {
    %c0_i32 = arith.constant 0 : i32
    %c0_i32_0 = arith.constant 0 : i32
    %c0_i32_1 = arith.constant 0 : i32
    return %c0_i32, %c0_i32_0 : i32, i32
  }
  func.func @transform_19(%arg0: i32) -> (i32, i32) {
    %c0_i32 = arith.constant 0 : i32
    %c0_i32_0 = arith.constant 0 : i32
    %c0_i32_1 = arith.constant 0 : i32
    return %c0_i32, %c0_i32_0 : i32, i32
  }
}

</mosaic_0001>

<llo_original>
// kernel: tpu_custom_call.1
$region0: #{tpu_custom_call.1}
  #allocation0 [shape = 'u32[]', space=smem, size = 0x4, offset = 0x4, fixed_abs, tag = 'smem constant byte address 0x4 - core index']
  #allocation1 [shape = 'u32[144,128]{1,0:T(1,128)}', space=vmem, size = 0x12000, scoped, tag = 'internal scratch']
  #allocation2 [shape = 'f32[16,32]{1,0:T(8,128)}', space=vmem, size = 0x2000, scoped, tag = 'scratch operand']
  %s0 = inlined_call_operand.hbm [shape: f32[16,32], index: 0, kind: input, shape index: {}]
  %s1 = inlined_call_operand.vmem [shape: bf16[2,32,32], index: 1, kind: input, shape index: {}]
  %s2 = inlined_call_operand.vmem [shape: f32[2,1,32], index: 2, kind: input, shape index: {}]
  %s3 = inlined_call_operand.vmem [shape: bf16[2,32,32], index: 3, kind: input, shape index: {}]
  %s4 = inlined_call_operand.vmem [shape: f32[2,1,32], index: 4, kind: input, shape index: {}]
  %s5 = inlined_call_operand.vmem [shape: bf16[2,32,32], index: 5, kind: input, shape index: {}]
  %s6 = inlined_call_operand.vmem [shape: f32[2,1,32], index: 6, kind: input, shape index: {}]
  %s7 = inlined_call_operand.hbm [shape: bf16[2,32,32], index: 7, kind: input, shape index: {}]
  %s8 = inlined_call_operand.vmem [shape: f32[2,1,32], index: 8, kind: input, shape index: {}]
  %s9 = inlined_call_operand.vmem [shape: f32[2,1,32], index: 9, kind: input, shape index: {}]
  %s10 = inlined_call_operand.vmem [shape: f32[2,1,32], index: 10, kind: input, shape index: {}]
  %s11 = inlined_call_operand.hbm [shape: bf16[2,32,64], index: 11, kind: input, shape index: {}]
  %s12 = inlined_call_operand.vmem [shape: f32[2,1,64], index: 12, kind: input, shape index: {}]
  %s13 = inlined_call_operand.vmem [shape: bf16[2,64,32], index: 13, kind: input, shape index: {}]
  %s14 = inlined_call_operand.vmem [shape: f32[2,1,32], index: 14, kind: input, shape index: {}]
  %s15 = inlined_call_operand.vmem [shape: f32[2,1,32], index: 15, kind: input, shape index: {}]
  %s16 = inlined_call_operand.vmem [shape: f32[2,1,32], index: 16, kind: input, shape index: {}]
  %s17 = inlined_call_operand.vmem [shape: f32[1,32], index: 17, kind: input, shape index: {}]
  %s18 = inlined_call_operand.vmem [shape: f32[1,32], index: 18, kind: input, shape index: {}]
  %s19 = inlined_call_operand.hbm [shape: f32[16,32], index: 19, kind: output, shape index: {}]
  %s20 = sld [smem:[#allocation0]]
  $region129: #{tpu_custom_call.1} parent=0
    _
  %s22 = ssub.s32 1, %s20
  %s23 = scalar_select 0, %s22, %s20
  $region1: #{tpu_custom_call.1} parent=0
    #allocation3 [shape = 'u8[8192]{0}', space=vmem, size = 0x2000, scoped, tag = 'input window, operand 0, single buffered']
    #allocation4 [shape = 's32[2]{0}', space=sflag, size = 0x8, scoped, tag = 'scoped memory for tpu_custom_call.1']
    #allocation5 [shape = 's32[2]{0}', space=sflag, size = 0x8, scoped, tag = 'scoped memory for tpu_custom_call.1']
    #allocation6 [shape = 'u8[16384]{0}', space=vmem, size = 0x4000, scoped, tag = 'input window, operand 7']
    #allocation7 [shape = 's32[2]{0}', space=sflag, size = 0x8, scoped, tag = 'scoped memory for tpu_custom_call.1']
    #allocation8 [shape = 'u8[16384]{0}', space=vmem, size = 0x4000, scoped, tag = 'input window, operand 11']
    #allocation9 [shape = 'u8[8192]{0}', space=vmem, size = 0x2000, scoped, tag = 'output window, operand 0, single buffered']
    %24 = vsyncpa [#allocation4], 0
    %25 = vsyncpa [#allocation7], 0
    %s26 = scalar_lea.sflag [#allocation7], 1
    %27 = vsyncpa %s26, 0
    %28 = vsyncpa [#allocation5], 0
    loop: start=0, step=1, limit=4
    $region2: #{tpu_custom_call.1} parent=1 // loop_pre_header
      _
    $region3: #{tpu_custom_call.1} parent=1 // loop_header
      %s30 = sphi 0, %s34
      %p31 = scmp.ge.s32.totalorder %s30, 4
      %s38 = sphi 0, %s38
      %s40 = sphi 0, %s38
      %s41 = sphi 0, %s40
      %s55 = sphi 0, %s41
      %s61 = sphi 0, %s63
      %s64 = sphi 0, %s61
      %s65 = sphi 0, %s64
      %s81 = sphi 0, %s65
      %s87 = sphi 0, %s89
      %s90 = sphi 0, %s87
      %s91 = sphi 0, %s90
      %s107 = sphi 0, %s91
      %s113 = sphi 0, %s115
      %s116 = sphi 0, %s113
      %s117 = sphi 0, %s116
      %s133 = sphi 0, %s117
      %s139 = sphi 0, %s141
      %s142 = sphi 0, %s139
      %s143 = sphi 0, %s142
      %s159 = sphi 0, %s143
      %s165 = sphi 0, %s167
      %s168 = sphi 0, %s165
      %s169 = sphi 0, %s168
      %s185 = sphi 0, %s169
      %s191 = sphi 0, %s193
      %s194 = sphi 0, %s191
      %s195 = sphi 0, %s194
      %s211 = sphi 0, %s195
      %s217 = sphi 0, %s219
      %s220 = sphi 0, %s217
      %s221 = sphi 0, %s220
      %s237 = sphi 0, %s221
      %s243 = sphi 0, %s245
      %s246 = sphi 0, %s243
      %s247 = sphi 0, %s246
      %s263 = sphi 0, %s247
      %s269 = sphi 0, %s271
      %s272 = sphi 0, %s269
      %s273 = sphi 0, %s272
      %s289 = sphi 0, %s273
      %s295 = sphi 0, %s297
      %s298 = sphi 0, %s295
      %s299 = sphi 0, %s298
      %s315 = sphi 0, %s299
      %s321 = sphi 0, %s323
      %s324 = sphi 0, %s321
      %s325 = sphi 0, %s324
      %s341 = sphi 0, %s325
      %s347 = sphi 0, %s349
      %s350 = sphi 0, %s347
      %s351 = sphi 0, %s350
      %s367 = sphi 0, %s351
      %s373 = sphi 0, %s375
      %s376 = sphi 0, %s373
      %s377 = sphi 0, %s376
      %s393 = sphi 0, %s377
      %s399 = sphi 0, %s401
      %s402 = sphi 0, %s399
      %s403 = sphi 0, %s402
      %s419 = sphi 0, %s403
      %s425 = sphi 0, %s427
      %s428 = sphi 0, %s425
      %s429 = sphi 0, %s428
      %s445 = sphi 0, %s429
      %s451 = sphi 0, %s453
      %s454 = sphi 0, %s451
      %s455 = sphi 0, %s454
      %s471 = sphi 0, %s455
      %s475 = sphi 0, %s475
      %s477 = sphi 0, %s475
      %s478 = sphi 0, %s477
      %s492 = sphi 0, %s478
      %s496 = sphi 0, %s496
      %s498 = sphi 0, %s496
      %s499 = sphi 0, %s498
      %s513 = sphi 0, %s499
      %s517 = sphi 0, %s517
      %s519 = sphi 0, %s517
      %s520 = sphi 0, %s519
      %s534 = sphi 0, %s520
    $region4: #{tpu_custom_call.1} parent=1 // loop_header_branch
      %33 = sbr.rel (%p31) target = $region8
    $region5: #{tpu_custom_call.1} parent=1 // loop_body
      %s35 = ssub.s32 %s30, 1
      %s36 = ssub.s32 %s30, 2
      %s37 = sadd.s32 %s30, 1
      %s39 = sadd.s32 %s38, 1
      %p42 = scmp.eq.s32.totalorder %s30, 1
      %p43 = scmp.ne.s32.totalorder %s38, %s40
      %p44 = scmp.eq.s32.totalorder %s30, 0
      %p45 = por %p43, %p44
      %p46 = scmp.ne.s32.totalorder %s38, %s40
      %p47 = scmp.eq.s32.totalorder %s35, 1
      %p48 = por %p46, %p47
      %p49 = scmp.ne.s32.totalorder %s40, %s41
      %p50 = scmp.eq.s32.totalorder %s35, 0
      %p51 = por %p49, %p50
      %p52 = scmp.ne.s32.totalorder %s40, %s41
      %p53 = scmp.eq.s32.totalorder %s36, 1
      %p54 = por %p52, %p53
      %p56 = scmp.ne.s32.totalorder %s41, %s55
      %p57 = scmp.eq.s32.totalorder %s36, 0
      %p58 = por %p56, %p57
      %s59 = ssub.s32 %s30, %s37
      %p60 = scmp.eq.s32.totalorder %s59, 0
      %s62 = sadd.s32 %s61, 1
      %s63 = scalar_select %p60, %s61, %s62
      %p66 = pneg %p60
      %p67 = scmp.eq.s32.totalorder %s30, 1
      %p68 = por %p66, %p67
      %p69 = scmp.ne.s32.totalorder %s61, %s64
      %p70 = scmp.eq.s32.totalorder %s30, 0
      %p71 = por %p69, %p70
      %p72 = scmp.ne.s32.totalorder %s61, %s64
      %p73 = scmp.eq.s32.totalorder %s35, 1
      %p74 = por %p72, %p73
      %p75 = scmp.ne.s32.totalorder %s64, %s65
      %p76 = scmp.eq.s32.totalorder %s35, 0
      %p77 = por %p75, %p76
      %p78 = scmp.ne.s32.totalorder %s64, %s65
      %p79 = scmp.eq.s32.totalorder %s36, 1
      %p80 = por %p78, %p79
      %p82 = scmp.ne.s32.totalorder %s65, %s81
      %p83 = scmp.eq.s32.totalorder %s36, 0
      %p84 = por %p82, %p83
      %s85 = ssub.s32 %s30, %s37
      %p86 = scmp.eq.s32.totalorder %s85, 0
      %s88 = sadd.s32 %s87, 1
      %s89 = scalar_select %p86, %s87, %s88
      %p92 = pneg %p86
      %p93 = scmp.eq.s32.totalorder %s30, 1
      %p94 = por %p92, %p93
      %p95 = scmp.ne.s32.totalorder %s87, %s90
      %p96 = scmp.eq.s32.totalorder %s30, 0
      %p97 = por %p95, %p96
      %p98 = scmp.ne.s32.totalorder %s87, %s90
      %p99 = scmp.eq.s32.totalorder %s35, 1
      %p100 = por %p98, %p99
      %p101 = scmp.ne.s32.totalorder %s90, %s91
      %p102 = scmp.eq.s32.totalorder %s35, 0
      %p103 = por %p101, %p102
      %p104 = scmp.ne.s32.totalorder %s90, %s91
      %p105 = scmp.eq.s32.totalorder %s36, 1
      %p106 = por %p104, %p105
      %p108 = scmp.ne.s32.totalorder %s91, %s107
      %p109 = scmp.eq.s32.totalorder %s36, 0
      %p110 = por %p108, %p109
      %s111 = ssub.s32 %s30, %s37
      %p112 = scmp.eq.s32.totalorder %s111, 0
      %s114 = sadd.s32 %s113, 1
      %s115 = scalar_select %p112, %s113, %s114
      %p118 = pneg %p112
      %p119 = scmp.eq.s32.totalorder %s30, 1
      %p120 = por %p118, %p119
      %p121 = scmp.ne.s32.totalorder %s113, %s116
      %p122 = scmp.eq.s32.totalorder %s30, 0
      %p123 = por %p121, %p122
      %p124 = scmp.ne.s32.totalorder %s113, %s116
      %p125 = scmp.eq.s32.totalorder %s35, 1
      %p126 = por %p124, %p125
      %p127 = scmp.ne.s32.totalorder %s116, %s117
      %p128 = scmp.eq.s32.totalorder %s35, 0
      %p129 = por %p127, %p128
      %p130 = scmp.ne.s32.totalorder %s116, %s117
      %p131 = scmp.eq.s32.totalorder %s36, 1
      %p132 = por %p130, %p131
      %p134 = scmp.ne.s32.totalorder %s117, %s133
      %p135 = scmp.eq.s32.totalorder %s36, 0
      %p136 = por %p134, %p135
      %s137 = ssub.s32 %s30, %s37
      %p138 = scmp.eq.s32.totalorder %s137, 0
      %s140 = sadd.s32 %s139, 1
      %s141 = scalar_select %p138, %s139, %s140
      %p144 = pneg %p138
      %p145 = scmp.eq.s32.totalorder %s30, 1
      %p146 = por %p144, %p145
      %p147 = scmp.ne.s32.totalorder %s139, %s142
      %p148 = scmp.eq.s32.totalorder %s30, 0
      %p149 = por %p147, %p148
      %p150 = scmp.ne.s32.totalorder %s139, %s142
      %p151 = scmp.eq.s32.totalorder %s35, 1
      %p152 = por %p150, %p151
      %p153 = scmp.ne.s32.totalorder %s142, %s143
      %p154 = scmp.eq.s32.totalorder %s35, 0
      %p155 = por %p153, %p154
      %p156 = scmp.ne.s32.totalorder %s142, %s143
      %p157 = scmp.eq.s32.totalorder %s36, 1
      %p158 = por %p156, %p157
      %p160 = scmp.ne.s32.totalorder %s143, %s159
      %p161 = scmp.eq.s32.totalorder %s36, 0
      %p162 = por %p160, %p161
      %s163 = ssub.s32 %s30, %s37
      %p164 = scmp.eq.s32.totalorder %s163, 0
      %s166 = sadd.s32 %s165, 1
      %s167 = scalar_select %p164, %s165, %s166
      %p170 = pneg %p164
      %p171 = scmp.eq.s32.totalorder %s30, 1
      %p172 = por %p170, %p171
      %p173 = scmp.ne.s32.totalorder %s165, %s168
      %p174 = scmp.eq.s32.totalorder %s30, 0
      %p175 = por %p173, %p174
      %p176 = scmp.ne.s32.totalorder %s165, %s168
      %p177 = scmp.eq.s32.totalorder %s35, 1
      %p178 = por %p176, %p177
      %p179 = scmp.ne.s32.totalorder %s168, %s169
      %p180 = scmp.eq.s32.totalorder %s35, 0
      %p181 = por %p179, %p180
      %p182 = scmp.ne.s32.totalorder %s168, %s169
      %p183 = scmp.eq.s32.totalorder %s36, 1
      %p184 = por %p182, %p183
      %p186 = scmp.ne.s32.totalorder %s169, %s185
      %p187 = scmp.eq.s32.totalorder %s36, 0
      %p188 = por %p186, %p187
      %s189 = ssub.s32 %s30, %s37
      %p190 = scmp.eq.s32.totalorder %s189, 0
      %s192 = sadd.s32 %s191, 1
      %s193 = scalar_select %p190, %s191, %s192
      %p196 = pneg %p190
      %p197 = scmp.eq.s32.totalorder %s30, 1
      %p198 = por %p196, %p197
      %p199 = scmp.ne.s32.totalorder %s191, %s194
      %p200 = scmp.eq.s32.totalorder %s30, 0
      %p201 = por %p199, %p200
      %p202 = scmp.ne.s32.totalorder %s191, %s194
      %p203 = scmp.eq.s32.totalorder %s35, 1
      %p204 = por %p202, %p203
      %p205 = scmp.ne.s32.totalorder %s194, %s195
      %p206 = scmp.eq.s32.totalorder %s35, 0
      %p207 = por %p205, %p206
      %p208 = scmp.ne.s32.totalorder %s194, %s195
      %p209 = scmp.eq.s32.totalorder %s36, 1
      %p210 = por %p208, %p209
      %p212 = scmp.ne.s32.totalorder %s195, %s211
      %p213 = scmp.eq.s32.totalorder %s36, 0
      %p214 = por %p212, %p213
      %s215 = ssub.s32 %s30, %s37
      %p216 = scmp.eq.s32.totalorder %s215, 0
      %s218 = sadd.s32 %s217, 1
      %s219 = scalar_select %p216, %s217, %s218
      %p222 = pneg %p216
      %p223 = scmp.eq.s32.totalorder %s30, 1
      %p224 = por %p222, %p223
      %p225 = scmp.ne.s32.totalorder %s217, %s220
      %p226 = scmp.eq.s32.totalorder %s30, 0
      %p227 = por %p225, %p226
      %p228 = scmp.ne.s32.totalorder %s217, %s220
      %p229 = scmp.eq.s32.totalorder %s35, 1
      %p230 = por %p228, %p229
      %p231 = scmp.ne.s32.totalorder %s220, %s221
      %p232 = scmp.eq.s32.totalorder %s35, 0
      %p233 = por %p231, %p232
      %p234 = scmp.ne.s32.totalorder %s220, %s221
      %p235 = scmp.eq.s32.totalorder %s36, 1
      %p236 = por %p234, %p235
      %p238 = scmp.ne.s32.totalorder %s221, %s237
      %p239 = scmp.eq.s32.totalorder %s36, 0
      %p240 = por %p238, %p239
      %s241 = ssub.s32 %s30, %s37
      %p242 = scmp.eq.s32.totalorder %s241, 0
      %s244 = sadd.s32 %s243, 1
      %s245 = scalar_select %p242, %s243, %s244
      %p248 = pneg %p242
      %p249 = scmp.eq.s32.totalorder %s30, 1
      %p250 = por %p248, %p249
      %p251 = scmp.ne.s32.totalorder %s243, %s246
      %p252 = scmp.eq.s32.totalorder %s30, 0
      %p253 = por %p251, %p252
      %p254 = scmp.ne.s32.totalorder %s243, %s246
      %p255 = scmp.eq.s32.totalorder %s35, 1
      %p256 = por %p254, %p255
      %p257 = scmp.ne.s32.totalorder %s246, %s247
      %p258 = scmp.eq.s32.totalorder %s35, 0
      %p259 = por %p257, %p258
      %p260 = scmp.ne.s32.totalorder %s246, %s247
      %p261 = scmp.eq.s32.totalorder %s36, 1
      %p262 = por %p260, %p261
      %p264 = scmp.ne.s32.totalorder %s247, %s263
      %p265 = scmp.eq.s32.totalorder %s36, 0
      %p266 = por %p264, %p265
      %s267 = ssub.s32 %s30, %s37
      %p268 = scmp.eq.s32.totalorder %s267, 0
      %s270 = sadd.s32 %s269, 1
      %s271 = scalar_select %p268, %s269, %s270
      %p274 = pneg %p268
      %p275 = scmp.eq.s32.totalorder %s30, 1
      %p276 = por %p274, %p275
      %p277 = scmp.ne.s32.totalorder %s269, %s272
      %p278 = scmp.eq.s32.totalorder %s30, 0
      %p279 = por %p277, %p278
      %p280 = scmp.ne.s32.totalorder %s269, %s272
      %p281 = scmp.eq.s32.totalorder %s35, 1
      %p282 = por %p280, %p281
      %p283 = scmp.ne.s32.totalorder %s272, %s273
      %p284 = scmp.eq.s32.totalorder %s35, 0
      %p285 = por %p283, %p284
      %p286 = scmp.ne.s32.totalorder %s272, %s273
      %p287 = scmp.eq.s32.totalorder %s36, 1
      %p288 = por %p286, %p287
      %p290 = scmp.ne.s32.totalorder %s273, %s289
      %p291 = scmp.eq.s32.totalorder %s36, 0
      %p292 = por %p290, %p291
      %s293 = ssub.s32 %s30, %s37
      %p294 = scmp.eq.s32.totalorder %s293, 0
      %s296 = sadd.s32 %s295, 1
      %s297 = scalar_select %p294, %s295, %s296
      %p300 = pneg %p294
      %p301 = scmp.eq.s32.totalorder %s30, 1
      %p302 = por %p300, %p301
      %p303 = scmp.ne.s32.totalorder %s295, %s298
      %p304 = scmp.eq.s32.totalorder %s30, 0
      %p305 = por %p303, %p304
      %p306 = scmp.ne.s32.totalorder %s295, %s298
      %p307 = scmp.eq.s32.totalorder %s35, 1
      %p308 = por %p306, %p307
      %p309 = scmp.ne.s32.totalorder %s298, %s299
      %p310 = scmp.eq.s32.totalorder %s35, 0
      %p311 = por %p309, %p310
      %p312 = scmp.ne.s32.totalorder %s298, %s299
      %p313 = scmp.eq.s32.totalorder %s36, 1
      %p314 = por %p312, %p313
      %p316 = scmp.ne.s32.totalorder %s299, %s315
      %p317 = scmp.eq.s32.totalorder %s36, 0
      %p318 = por %p316, %p317
      %s319 = ssub.s32 %s30, %s37
      %p320 = scmp.eq.s32.totalorder %s319, 0
      %s322 = sadd.s32 %s321, 1
      %s323 = scalar_select %p320, %s321, %s322
      %p326 = pneg %p320
      %p327 = scmp.eq.s32.totalorder %s30, 1
      %p328 = por %p326, %p327
      %p329 = scmp.ne.s32.totalorder %s321, %s324
      %p330 = scmp.eq.s32.totalorder %s30, 0
      %p331 = por %p329, %p330
      %p332 = scmp.ne.s32.totalorder %s321, %s324
      %p333 = scmp.eq.s32.totalorder %s35, 1
      %p334 = por %p332, %p333
      %p335 = scmp.ne.s32.totalorder %s324, %s325
      %p336 = scmp.eq.s32.totalorder %s35, 0
      %p337 = por %p335, %p336
      %p338 = scmp.ne.s32.totalorder %s324, %s325
      %p339 = scmp.eq.s32.totalorder %s36, 1
      %p340 = por %p338, %p339
      %p342 = scmp.ne.s32.totalorder %s325, %s341
      %p343 = scmp.eq.s32.totalorder %s36, 0
      %p344 = por %p342, %p343
      %s345 = ssub.s32 %s30, %s37
      %p346 = scmp.eq.s32.totalorder %s345, 0
      %s348 = sadd.s32 %s347, 1
      %s349 = scalar_select %p346, %s347, %s348
      %p352 = pneg %p346
      %p353 = scmp.eq.s32.totalorder %s30, 1
      %p354 = por %p352, %p353
      %p355 = scmp.ne.s32.totalorder %s347, %s350
      %p356 = scmp.eq.s32.totalorder %s30, 0
      %p357 = por %p355, %p356
      %p358 = scmp.ne.s32.totalorder %s347, %s350
      %p359 = scmp.eq.s32.totalorder %s35, 1
      %p360 = por %p358, %p359
      %p361 = scmp.ne.s32.totalorder %s350, %s351
      %p362 = scmp.eq.s32.totalorder %s35, 0
      %p363 = por %p361, %p362
      %p364 = scmp.ne.s32.totalorder %s350, %s351
      %p365 = scmp.eq.s32.totalorder %s36, 1
      %p366 = por %p364, %p365
      %p368 = scmp.ne.s32.totalorder %s351, %s367
      %p369 = scmp.eq.s32.totalorder %s36, 0
      %p370 = por %p368, %p369
      %s371 = ssub.s32 %s30, %s37
      %p372 = scmp.eq.s32.totalorder %s371, 0
      %s374 = sadd.s32 %s373, 1
      %s375 = scalar_select %p372, %s373, %s374
      %p378 = pneg %p372
      %p379 = scmp.eq.s32.totalorder %s30, 1
      %p380 = por %p378, %p379
      %p381 = scmp.ne.s32.totalorder %s373, %s376
      %p382 = scmp.eq.s32.totalorder %s30, 0
      %p383 = por %p381, %p382
      %p384 = scmp.ne.s32.totalorder %s373, %s376
      %p385 = scmp.eq.s32.totalorder %s35, 1
      %p386 = por %p384, %p385
      %p387 = scmp.ne.s32.totalorder %s376, %s377
      %p388 = scmp.eq.s32.totalorder %s35, 0
      %p389 = por %p387, %p388
      %p390 = scmp.ne.s32.totalorder %s376, %s377
      %p391 = scmp.eq.s32.totalorder %s36, 1
      %p392 = por %p390, %p391
      %p394 = scmp.ne.s32.totalorder %s377, %s393
      %p395 = scmp.eq.s32.totalorder %s36, 0
      %p396 = por %p394, %p395
      %s397 = ssub.s32 %s30, %s37
      %p398 = scmp.eq.s32.totalorder %s397, 0
      %s400 = sadd.s32 %s399, 1
      %s401 = scalar_select %p398, %s399, %s400
      %p404 = pneg %p398
      %p405 = scmp.eq.s32.totalorder %s30, 1
      %p406 = por %p404, %p405
      %p407 = scmp.ne.s32.totalorder %s399, %s402
      %p408 = scmp.eq.s32.totalorder %s30, 0
      %p409 = por %p407, %p408
      %p410 = scmp.ne.s32.totalorder %s399, %s402
      %p411 = scmp.eq.s32.totalorder %s35, 1
      %p412 = por %p410, %p411
      %p413 = scmp.ne.s32.totalorder %s402, %s403
      %p414 = scmp.eq.s32.totalorder %s35, 0
      %p415 = por %p413, %p414
      %p416 = scmp.ne.s32.totalorder %s402, %s403
      %p417 = scmp.eq.s32.totalorder %s36, 1
      %p418 = por %p416, %p417
      %p420 = scmp.ne.s32.totalorder %s403, %s419
      %p421 = scmp.eq.s32.totalorder %s36, 0
      %p422 = por %p420, %p421
      %s423 = ssub.s32 %s30, %s37
      %p424 = scmp.eq.s32.totalorder %s423, 0
      %s426 = sadd.s32 %s425, 1
      %s427 = scalar_select %p424, %s425, %s426
      %p430 = pneg %p424
      %p431 = scmp.eq.s32.totalorder %s30, 1
      %p432 = por %p430, %p431
      %p433 = scmp.ne.s32.totalorder %s425, %s428
      %p434 = scmp.eq.s32.totalorder %s30, 0
      %p435 = por %p433, %p434
      %p436 = scmp.ne.s32.totalorder %s425, %s428
      %p437 = scmp.eq.s32.totalorder %s35, 1
      %p438 = por %p436, %p437
      %p439 = scmp.ne.s32.totalorder %s428, %s429
      %p440 = scmp.eq.s32.totalorder %s35, 0
      %p441 = por %p439, %p440
      %p442 = scmp.ne.s32.totalorder %s428, %s429
      %p443 = scmp.eq.s32.totalorder %s36, 1
      %p444 = por %p442, %p443
      %p446 = scmp.ne.s32.totalorder %s429, %s445
      %p447 = scmp.eq.s32.totalorder %s36, 0
      %p448 = por %p446, %p447
      %s449 = ssub.s32 %s30, %s37
      %p450 = scmp.eq.s32.totalorder %s449, 0
      %s452 = sadd.s32 %s451, 1
      %s453 = scalar_select %p450, %s451, %s452
      %p456 = pneg %p450
      %p457 = scmp.eq.s32.totalorder %s30, 1
      %p458 = por %p456, %p457
      %p459 = scmp.ne.s32.totalorder %s451, %s454
      %p460 = scmp.eq.s32.totalorder %s30, 0
      %p461 = por %p459, %p460
      %p462 = scmp.ne.s32.totalorder %s451, %s454
      %p463 = scmp.eq.s32.totalorder %s35, 1
      %p464 = por %p462, %p463
      %p465 = scmp.ne.s32.totalorder %s454, %s455
      %p466 = scmp.eq.s32.totalorder %s35, 0
      %p467 = por %p465, %p466
      %p468 = scmp.ne.s32.totalorder %s454, %s455
      %p469 = scmp.eq.s32.totalorder %s36, 1
      %p470 = por %p468, %p469
      %p472 = scmp.ne.s32.totalorder %s455, %s471
      %p473 = scmp.eq.s32.totalorder %s36, 0
      %p474 = por %p472, %p473
      %s476 = sadd.s32 %s475, 1
      %p479 = scmp.eq.s32.totalorder %s30, 1
      %p480 = scmp.ne.s32.totalorder %s475, %s477
      %p481 = scmp.eq.s32.totalorder %s30, 0
      %p482 = por %p480, %p481
      %p483 = scmp.ne.s32.totalorder %s475, %s477
      %p484 = scmp.eq.s32.totalorder %s35, 1
      %p485 = por %p483, %p484
      %p486 = scmp.ne.s32.totalorder %s477, %s478
      %p487 = scmp.eq.s32.totalorder %s35, 0
      %p488 = por %p486, %p487
      %p489 = scmp.ne.s32.totalorder %s477, %s478
      %p490 = scmp.eq.s32.totalorder %s36, 1
      %p491 = por %p489, %p490
      %p493 = scmp.ne.s32.totalorder %s478, %s492
      %p494 = scmp.eq.s32.totalorder %s36, 0
      %p495 = por %p493, %p494
      %s497 = sadd.s32 %s496, 1
      %p500 = scmp.eq.s32.totalorder %s30, 1
      %p501 = scmp.ne.s32.totalorder %s496, %s498
      %p502 = scmp.eq.s32.totalorder %s30, 0
      %p503 = por %p501, %p502
      %p504 = scmp.ne.s32.totalorder %s496, %s498
      %p505 = scmp.eq.s32.totalorder %s35, 1
      %p506 = por %p504, %p505
      %p507 = scmp.ne.s32.totalorder %s498, %s499
      %p508 = scmp.eq.s32.totalorder %s35, 0
      %p509 = por %p507, %p508
      %p510 = scmp.ne.s32.totalorder %s498, %s499
      %p511 = scmp.eq.s32.totalorder %s36, 1
      %p512 = por %p510, %p511
      %p514 = scmp.ne.s32.totalorder %s499, %s513
      %p515 = scmp.eq.s32.totalorder %s36, 0
      %p516 = por %p514, %p515
      %s518 = sadd.s32 %s517, 1
      %p521 = scmp.eq.s32.totalorder %s30, 1
      %p522 = scmp.ne.s32.totalorder %s517, %s519
      %p523 = scmp.eq.s32.totalorder %s30, 0
      %p524 = por %p522, %p523
      %p525 = scmp.ne.s32.totalorder %s517, %s519
      %p526 = scmp.eq.s32.totalorder %s35, 1
      %p527 = por %p525, %p526
      %p528 = scmp.ne.s32.totalorder %s519, %s520
      %p529 = scmp.eq.s32.totalorder %s35, 0
      %p530 = por %p528, %p529
      %p531 = scmp.ne.s32.totalorder %s519, %s520
      %p532 = scmp.eq.s32.totalorder %s36, 1
      %p533 = por %p531, %p532
      %p535 = scmp.ne.s32.totalorder %s520, %s534
      %p536 = scmp.eq.s32.totalorder %s36, 0
      %p537 = por %p535, %p536
      %p538 = scmp.le.s32.totalorder 1, %s30
      %p539 = scmp.lt.s32.totalorder %s30, 3
      %p540 = pnand %p538, %p539
      %p541 = pneg %p540
      // Predicated region
      $region9: #{tpu_custom_call.1} parent=5 // pred_check
        _
      $region10: #{tpu_custom_call.1} parent=5 // pred_check_branch
        %543 = sbr.rel (%p540) target = $region12
      $region11: #{tpu_custom_call.1} parent=5 // pred_region
        %s544 = ssub.s32 %s30, 1
        // Predicated region
        $region13: #{tpu_custom_call.1} parent=11 // pred_check
          %p545 = pneg %p51
        $region14: #{tpu_custom_call.1} parent=11 // pred_check_branch
          %547 = sbr.rel (%p545) target = $region16
        $region15: #{tpu_custom_call.1} parent=11 // pred_region
          %s549 = ssub.s32 256, 256
          %550 = vsyncadd [#allocation4], %s549
          %s551 = sshll.u32 [#allocation3], 4
          %s552 = int_to_ptr.vmem [resolvable:$true] %s551
          %557 = dma.hbm_to_vmem [thread:$0]  %s0, 256, %s552, [#allocation4], 128, 128, 8
        $region16: #{tpu_custom_call.1} parent=11 // pred_fallthru
          _
        // Predicated region
        $region17: #{tpu_custom_call.1} parent=11 // pred_check
          %p558 = pneg %p488
        $region18: #{tpu_custom_call.1} parent=11 // pred_check_branch
          %560 = sbr.rel (%p558) target = $region20
        $region19: #{tpu_custom_call.1} parent=11 // pred_region
          _
        $region20: #{tpu_custom_call.1} parent=11 // pred_fallthru
          _
        // Predicated region
        $region21: #{tpu_custom_call.1} parent=11 // pred_check
          %p561 = pneg %p509
        $region22: #{tpu_custom_call.1} parent=11 // pred_check_branch
          %563 = sbr.rel (%p561) target = $region24
        $region23: #{tpu_custom_call.1} parent=11 // pred_region
          _
        $region24: #{tpu_custom_call.1} parent=11 // pred_fallthru
          _
      $region12: #{tpu_custom_call.1} parent=5 // pred_fallthru
        _
      %p564 = scmp.lt.s32.totalorder %s30, 2
      // Predicated region
      $region25: #{tpu_custom_call.1} parent=5 // pred_check
        %p565 = pneg %p564
      $region26: #{tpu_custom_call.1} parent=5 // pred_check_branch
        %567 = sbr.rel (%p565) target = $region28
      $region27: #{tpu_custom_call.1} parent=5 // pred_region
        // Predicated region
        $region29: #{tpu_custom_call.1} parent=27 // pred_check
          %p568 = pneg %p71
        $region30: #{tpu_custom_call.1} parent=27 // pred_check_branch
          %570 = sbr.rel (%p568) target = $region32
        $region31: #{tpu_custom_call.1} parent=27 // pred_region
          %p571 = scmp.lt.s32.totalorder %s30, 1
          %s572 = scalar_select %p571, %s30, 1
          %s573 = smul.addr %s572, 4
          %s574 = smul.addr %s573, 4
          %s575 = scalar_lea.vmem %s1, %s574
        $region32: #{tpu_custom_call.1} parent=27 // pred_fallthru
          _
        // Predicated region
        $region33: #{tpu_custom_call.1} parent=27 // pred_check
          %p576 = pneg %p97
        $region34: #{tpu_custom_call.1} parent=27 // pred_check_branch
          %578 = sbr.rel (%p576) target = $region36
        $region35: #{tpu_custom_call.1} parent=27 // pred_region
          %p579 = scmp.lt.s32.totalorder %s30, 1
          %s580 = scalar_select %p579, %s30, 1
          %s581 = scalar_lea.vmem %s2, %s580
        $region36: #{tpu_custom_call.1} parent=27 // pred_fallthru
          _
        // Predicated region
        $region37: #{tpu_custom_call.1} parent=27 // pred_check
          %p582 = pneg %p123
        $region38: #{tpu_custom_call.1} parent=27 // pred_check_branch
          %584 = sbr.rel (%p582) target = $region40
        $region39: #{tpu_custom_call.1} parent=27 // pred_region
          %p585 = scmp.lt.s32.totalorder %s30, 1
          %s586 = scalar_select %p585, %s30, 1
          %s587 = smul.addr %s586, 4
          %s588 = smul.addr %s587, 4
          %s589 = scalar_lea.vmem %s3, %s588
        $region40: #{tpu_custom_call.1} parent=27 // pred_fallthru
          _
        // Predicated region
        $region41: #{tpu_custom_call.1} parent=27 // pred_check
          %p590 = pneg %p149
        $region42: #{tpu_custom_call.1} parent=27 // pred_check_branch
          %592 = sbr.rel (%p590) target = $region44
        $region43: #{tpu_custom_call.1} parent=27 // pred_region
          %p593 = scmp.lt.s32.totalorder %s30, 1
          %s594 = scalar_select %p593, %s30, 1
          %s595 = scalar_lea.vmem %s4, %s594
        $region44: #{tpu_custom_call.1} parent=27 // pred_fallthru
          _
        // Predicated region
        $region45: #{tpu_custom_call.1} parent=27 // pred_check
          %p596 = pneg %p175
        $region46: #{tpu_custom_call.1} parent=27 // pred_check_branch
          %598 = sbr.rel (%p596) target = $region48
        $region47: #{tpu_custom_call.1} parent=27 // pred_region
          %p599 = scmp.lt.s32.totalorder %s30, 1
          %s600 = scalar_select %p599, %s30, 1
          %s601 = smul.addr %s600, 4
          %s602 = smul.addr %s601, 4
          %s603 = scalar_lea.vmem %s5, %s602
        $region48: #{tpu_custom_call.1} parent=27 // pred_fallthru
          _
        // Predicated region
        $region49: #{tpu_custom_call.1} parent=27 // pred_check
          %p604 = pneg %p201
        $region50: #{tpu_custom_call.1} parent=27 // pred_check_branch
          %606 = sbr.rel (%p604) target = $region52
        $region51: #{tpu_custom_call.1} parent=27 // pred_region
          %p607 = scmp.lt.s32.totalorder %s30, 1
          %s608 = scalar_select %p607, %s30, 1
          %s609 = scalar_lea.vmem %s6, %s608
        $region52: #{tpu_custom_call.1} parent=27 // pred_fallthru
          _
        // Predicated region
        $region53: #{tpu_custom_call.1} parent=27 // pred_check
          %p610 = pneg %p227
        $region54: #{tpu_custom_call.1} parent=27 // pred_check_branch
          %612 = sbr.rel (%p610) target = $region56
        $region55: #{tpu_custom_call.1} parent=27 // pred_region
          %s613 = sand.u32 %s30, 1
          %s614 = scalar_lea.sflag [#allocation7], %s613
          %s615 = sand.u32 %s217, 1
          %s616 = smul.addr %s615, 16
          %s617 = scalar_lea.vmem [#allocation6], %s616
          %s619 = ssub.s32 256, 256
          %620 = vsyncadd %s614, %s619
          %s621 = smul.addr %s30, 4
          %s622 = smul.addr %s621, 64
          %s623 = scalar_lea.hbm %s7, %s622
          %s624 = sshll.u32 %s617, 4
          %s625 = int_to_ptr.vmem [resolvable:$true] %s624
          %630 = dma.hbm_to_vmem [thread:$0]  %s623, 256, %s625, %s614, 64, 64, 4
        $region56: #{tpu_custom_call.1} parent=27 // pred_fallthru
          _
        // Predicated region
        $region57: #{tpu_custom_call.1} parent=27 // pred_check
          %p631 = pneg %p253
        $region58: #{tpu_custom_call.1} parent=27 // pred_check_branch
          %633 = sbr.rel (%p631) target = $region60
        $region59: #{tpu_custom_call.1} parent=27 // pred_region
          %p634 = scmp.lt.s32.totalorder %s30, 1
          %s635 = scalar_select %p634, %s30, 1
          %s636 = scalar_lea.vmem %s8, %s635
        $region60: #{tpu_custom_call.1} parent=27 // pred_fallthru
          _
        // Predicated region
        $region61: #{tpu_custom_call.1} parent=27 // pred_check
          %p637 = pneg %p279
        $region62: #{tpu_custom_call.1} parent=27 // pred_check_branch
          %639 = sbr.rel (%p637) target = $region64
        $region63: #{tpu_custom_call.1} parent=27 // pred_region
          %p640 = scmp.lt.s32.totalorder %s30, 1
          %s641 = scalar_select %p640, %s30, 1
          %s642 = scalar_lea.vmem %s9, %s641
        $region64: #{tpu_custom_call.1} parent=27 // pred_fallthru
          _
        // Predicated region
        $region65: #{tpu_custom_call.1} parent=27 // pred_check
          %p643 = pneg %p305
        $region66: #{tpu_custom_call.1} parent=27 // pred_check_branch
          %645 = sbr.rel (%p643) target = $region68
        $region67: #{tpu_custom_call.1} parent=27 // pred_region
          %p646 = scmp.lt.s32.totalorder %s30, 1
          %s647 = scalar_select %p646, %s30, 1
          %s648 = scalar_lea.vmem %s10, %s647
        $region68: #{tpu_custom_call.1} parent=27 // pred_fallthru
          _
        // Predicated region
        $region69: #{tpu_custom_call.1} parent=27 // pred_check
          %p649 = pneg %p331
        $region70: #{tpu_custom_call.1} parent=27 // pred_check_branch
          %651 = sbr.rel (%p649) target = $region72
        $region71: #{tpu_custom_call.1} parent=27 // pred_region
          %s652 = sand.u32 %s30, 1
          %s653 = scalar_lea.sflag [#allocation7], %s652
          %s654 = sand.u32 %s321, 1
          %s655 = smul.addr %s654, 16
          %s656 = scalar_lea.vmem [#allocation8], %s655
          %s658 = ssub.s32 256, 256
          %659 = vsyncadd %s653, %s658
          %s660 = smul.addr %s30, 4
          %s661 = smul.addr %s660, 64
          %s662 = scalar_lea.hbm %s11, %s661
          %s663 = sshll.u32 %s656, 4
          %s664 = int_to_ptr.vmem [resolvable:$true] %s663
          %669 = dma.hbm_to_vmem [thread:$0]  %s662, 256, %s664, %s653, 64, 64, 4
        $region72: #{tpu_custom_call.1} parent=27 // pred_fallthru
          _
        // Predicated region
        $region73: #{tpu_custom_call.1} parent=27 // pred_check
          %p670 = pneg %p357
        $region74: #{tpu_custom_call.1} parent=27 // pred_check_branch
          %672 = sbr.rel (%p670) target = $region76
        $region75: #{tpu_custom_call.1} parent=27 // pred_region
          %p673 = scmp.lt.s32.totalorder %s30, 1
          %s674 = scalar_select %p673, %s30, 1
          %s675 = scalar_lea.vmem %s12, %s674
        $region76: #{tpu_custom_call.1} parent=27 // pred_fallthru
          _
        // Predicated region
        $region77: #{tpu_custom_call.1} parent=27 // pred_check
          %p676 = pneg %p383
        $region78: #{tpu_custom_call.1} parent=27 // pred_check_branch
          %678 = sbr.rel (%p676) target = $region80
        $region79: #{tpu_custom_call.1} parent=27 // pred_region
          %p679 = scmp.lt.s32.totalorder %s30, 1
          %s680 = scalar_select %p679, %s30, 1
          %s681 = smul.addr %s680, 8
          %s682 = smul.addr %s681, 4
          %s683 = scalar_lea.vmem %s13, %s682
        $region80: #{tpu_custom_call.1} parent=27 // pred_fallthru
          _
        // Predicated region
        $region81: #{tpu_custom_call.1} parent=27 // pred_check
          %p684 = pneg %p409
        $region82: #{tpu_custom_call.1} parent=27 // pred_check_branch
          %686 = sbr.rel (%p684) target = $region84
        $region83: #{tpu_custom_call.1} parent=27 // pred_region
          %p687 = scmp.lt.s32.totalorder %s30, 1
          %s688 = scalar_select %p687, %s30, 1
          %s689 = scalar_lea.vmem %s14, %s688
        $region84: #{tpu_custom_call.1} parent=27 // pred_fallthru
          _
        // Predicated region
        $region85: #{tpu_custom_call.1} parent=27 // pred_check
          %p690 = pneg %p435
        $region86: #{tpu_custom_call.1} parent=27 // pred_check_branch
          %692 = sbr.rel (%p690) target = $region88
        $region87: #{tpu_custom_call.1} parent=27 // pred_region
          %p693 = scmp.lt.s32.totalorder %s30, 1
          %s694 = scalar_select %p693, %s30, 1
          %s695 = scalar_lea.vmem %s15, %s694
        $region88: #{tpu_custom_call.1} parent=27 // pred_fallthru
          _
        // Predicated region
        $region89: #{tpu_custom_call.1} parent=27 // pred_check
          %p696 = pneg %p461
        $region90: #{tpu_custom_call.1} parent=27 // pred_check_branch
          %698 = sbr.rel (%p696) target = $region92
        $region91: #{tpu_custom_call.1} parent=27 // pred_region
          %p699 = scmp.lt.s32.totalorder %s30, 1
          %s700 = scalar_select %p699, %s30, 1
          %s701 = scalar_lea.vmem %s16, %s700
        $region92: #{tpu_custom_call.1} parent=27 // pred_fallthru
          _
      $region28: #{tpu_custom_call.1} parent=5 // pred_fallthru
        _
      %p702 = scmp.le.s32.totalorder 1, %s30
      %p703 = scmp.lt.s32.totalorder %s30, 3
      %p704 = pnand %p702, %p703
      %p705 = pneg %p704
      // Predicated region
      $region93: #{tpu_custom_call.1} parent=5 // pred_check
        _
      $region94: #{tpu_custom_call.1} parent=5 // pred_check_branch
        %707 = sbr.rel (%p704) target = $region96
      $region95: #{tpu_custom_call.1} parent=5 // pred_region
        %s708 = ssub.s32 %s30, 1
        // Predicated region
        $region97: #{tpu_custom_call.1} parent=95 // pred_check
          %p709 = pneg %p51
        $region98: #{tpu_custom_call.1} parent=95 // pred_check_branch
          %711 = sbr.rel (%p709) target = $region100
        $region99: #{tpu_custom_call.1} parent=95 // pred_region
          %712 = dma.done [#allocation4], 256
        $region100: #{tpu_custom_call.1} parent=95 // pred_fallthru
          _
        %s713 = sand.u32 %s35, 1
        %s714 = scalar_lea.sflag [#allocation7], %s713
        %s715 = sand.u32 %s220, 1
        %s716 = smul.addr %s715, 16
        %s717 = scalar_lea.vmem [#allocation6], %s716
        // Predicated region
        $region101: #{tpu_custom_call.1} parent=95 // pred_check
          %p718 = pneg %p233
        $region102: #{tpu_custom_call.1} parent=95 // pred_check_branch
          %720 = sbr.rel (%p718) target = $region104
        $region103: #{tpu_custom_call.1} parent=95 // pred_region
          %721 = dma.done %s714, 256
        $region104: #{tpu_custom_call.1} parent=95 // pred_fallthru
          _
        %s722 = sand.u32 %s35, 1
        %s723 = scalar_lea.sflag [#allocation7], %s722
        %s724 = sand.u32 %s324, 1
        %s725 = smul.addr %s724, 16
        %s726 = scalar_lea.vmem [#allocation8], %s725
        // Predicated region
        $region105: #{tpu_custom_call.1} parent=95 // pred_check
          %p727 = pneg %p337
        $region106: #{tpu_custom_call.1} parent=95 // pred_check_branch
          %729 = sbr.rel (%p727) target = $region108
        $region107: #{tpu_custom_call.1} parent=95 // pred_region
          %730 = dma.done %s723, 256
        $region108: #{tpu_custom_call.1} parent=95 // pred_fallthru
          _
        %p731 = pneg %p51
        %p732 = pneg %p48
        %p733 = scmp.lt.s32.totalorder %s35, 1
        %s734 = scalar_select %p733, %s35, 1
        %s735 = smul.addr %s734, 4
        %s736 = smul.addr %s735, 4
        %s737 = scalar_lea.vmem %s1, %s736
        %p738 = pneg %p77
        %p739 = pneg %p74
        %p740 = scmp.lt.s32.totalorder %s35, 1
        %s741 = scalar_select %p740, %s35, 1
        %s742 = scalar_lea.vmem %s2, %s741
        %p743 = pneg %p103
        %p744 = pneg %p100
        %p745 = scmp.lt.s32.totalorder %s35, 1
        %s746 = scalar_select %p745, %s35, 1
        %s747 = smul.addr %s746, 4
        %s748 = smul.addr %s747, 4
        %s749 = scalar_lea.vmem %s3, %s748
        %p750 = pneg %p129
        %p751 = pneg %p126
        %p752 = scmp.lt.s32.totalorder %s35, 1
        %s753 = scalar_select %p752, %s35, 1
        %s754 = scalar_lea.vmem %s4, %s753
        %p755 = pneg %p155
        %p756 = pneg %p152
        %p757 = scmp.lt.s32.totalorder %s35, 1
        %s758 = scalar_select %p757, %s35, 1
        %s759 = smul.addr %s758, 4
        %s760 = smul.addr %s759, 4
        %s761 = scalar_lea.vmem %s5, %s760
        %p762 = pneg %p181
        %p763 = pneg %p178
        %p764 = scmp.lt.s32.totalorder %s35, 1
        %s765 = scalar_select %p764, %s35, 1
        %s766 = scalar_lea.vmem %s6, %s765
        %p767 = pneg %p207
        %p768 = pneg %p204
        %s769 = sand.u32 %s35, 1
        %s770 = scalar_lea.sflag [#allocation7], %s769
        %s771 = sand.u32 %s220, 1
        %s772 = smul.addr %s771, 16
        %s773 = scalar_lea.vmem [#allocation6], %s772
        %p774 = pneg %p233
        %p775 = pneg %p230
        %p776 = scmp.lt.s32.totalorder %s35, 1
        %s777 = scalar_select %p776, %s35, 1
        %s778 = scalar_lea.vmem %s8, %s777
        %p779 = pneg %p259
        %p780 = pneg %p256
        %p781 = scmp.lt.s32.totalorder %s35, 1
        %s782 = scalar_select %p781, %s35, 1
        %s783 = scalar_lea.vmem %s9, %s782
        %p784 = pneg %p285
        %p785 = pneg %p282
        %p786 = scmp.lt.s32.totalorder %s35, 1
        %s787 = scalar_select %p786, %s35, 1
        %s788 = scalar_lea.vmem %s10, %s787
        %p789 = pneg %p311
        %p790 = pneg %p308
        %s791 = sand.u32 %s35, 1
        %s792 = scalar_lea.sflag [#allocation7], %s791
        %s793 = sand.u32 %s324, 1
        %s794 = smul.addr %s793, 16
        %s795 = scalar_lea.vmem [#allocation8], %s794
        %p796 = pneg %p337
        %p797 = pneg %p334
        %p798 = scmp.lt.s32.totalorder %s35, 1
        %s799 = scalar_select %p798, %s35, 1
        %s800 = scalar_lea.vmem %s12, %s799
        %p801 = pneg %p363
        %p802 = pneg %p360
        %p803 = scmp.lt.s32.totalorder %s35, 1
        %s804 = scalar_select %p803, %s35, 1
        %s805 = smul.addr %s804, 8
        %s806 = smul.addr %s805, 4
        %s807 = scalar_lea.vmem %s13, %s806
        %p808 = pneg %p389
        %p809 = pneg %p386
        %p810 = scmp.lt.s32.totalorder %s35, 1
        %s811 = scalar_select %p810, %s35, 1
        %s812 = scalar_lea.vmem %s14, %s811
        %p813 = pneg %p415
        %p814 = pneg %p412
        %p815 = scmp.lt.s32.totalorder %s35, 1
        %s816 = scalar_select %p815, %s35, 1
        %s817 = scalar_lea.vmem %s15, %s816
        %p818 = pneg %p441
        %p819 = pneg %p438
        %p820 = scmp.lt.s32.totalorder %s35, 1
        %s821 = scalar_select %p820, %s35, 1
        %s822 = scalar_lea.vmem %s16, %s821
        %p823 = pneg %p467
        %p824 = pneg %p464
        %p825 = pneg %p488
        %p826 = pneg %p485
        %p827 = pneg %p509
        %p828 = pneg %p506
        %p829 = pneg %p530
        %p830 = pneg %p527
        %p831 = scmp.lt.s32.totalorder %s35, 1
        %s832 = scalar_select %p831, %s35, 1
        %s833 = smul.addr %s832, 4
        %s834 = smul.addr %s833, 4
        %s835 = scalar_lea.vmem %s1, %s834
        %p836 = scmp.lt.s32.totalorder %s35, 1
        %s837 = scalar_select %p836, %s35, 1
        %s838 = scalar_lea.vmem %s2, %s837
        %p839 = scmp.lt.s32.totalorder %s35, 1
        %s840 = scalar_select %p839, %s35, 1
        %s841 = smul.addr %s840, 4
        %s842 = smul.addr %s841, 4
        %s843 = scalar_lea.vmem %s3, %s842
        %p844 = scmp.lt.s32.totalorder %s35, 1
        %s845 = scalar_select %p844, %s35, 1
        %s846 = scalar_lea.vmem %s4, %s845
        %p847 = scmp.lt.s32.totalorder %s35, 1
        %s848 = scalar_select %p847, %s35, 1
        %s849 = smul.addr %s848, 4
        %s850 = smul.addr %s849, 4
        %s851 = scalar_lea.vmem %s5, %s850
        %p852 = scmp.lt.s32.totalorder %s35, 1
        %s853 = scalar_select %p852, %s35, 1
        %s854 = scalar_lea.vmem %s6, %s853
        %p855 = scmp.lt.s32.totalorder %s35, 1
        %s856 = scalar_select %p855, %s35, 1
        %s857 = scalar_lea.vmem %s8, %s856
        %p858 = scmp.lt.s32.totalorder %s35, 1
        %s859 = scalar_select %p858, %s35, 1
        %s860 = scalar_lea.vmem %s9, %s859
        %p861 = scmp.lt.s32.totalorder %s35, 1
        %s862 = scalar_select %p861, %s35, 1
        %s863 = scalar_lea.vmem %s10, %s862
        %p864 = scmp.lt.s32.totalorder %s35, 1
        %s865 = scalar_select %p864, %s35, 1
        %s866 = scalar_lea.vmem %s12, %s865
        %p867 = scmp.lt.s32.totalorder %s35, 1
        %s868 = scalar_select %p867, %s35, 1
        %s869 = smul.addr %s868, 8
        %s870 = smul.addr %s869, 4
        %s871 = scalar_lea.vmem %s13, %s870
        %p872 = scmp.lt.s32.totalorder %s35, 1
        %s873 = scalar_select %p872, %s35, 1
        %s874 = scalar_lea.vmem %s14, %s873
        %p875 = scmp.lt.s32.totalorder %s35, 1
        %s876 = scalar_select %p875, %s35, 1
        %s877 = scalar_lea.vmem %s15, %s876
        %p878 = scmp.lt.s32.totalorder %s35, 1
        %s879 = scalar_select %p878, %s35, 1
        %s880 = scalar_lea.vmem %s16, %s879
        %p882 = scmp.eq.s32.totalorder %s35, 0
        // Predicated region
        $region109: #{tpu_custom_call.1} parent=95 // pred_check
          %p883 = pneg %p882
        $region110: #{tpu_custom_call.1} parent=95 // pred_check_branch
          %885 = sbr.rel (%p883) target = $region112
        $region111: #{tpu_custom_call.1} parent=95 // pred_region
          %v886 = vld [vmem:[#allocation3] sm:$0xff]
          %v887 = vld [vmem:[#allocation3 + $0x8] sm:$0xff]
          %vm888 = vcmask 261120
          %889 = vst.msk [vmem:[#allocation2] sm:$0xff] %vm888, %v886
          %890 = vst.msk [vmem:[#allocation2 + $0x8] sm:$0xff] %vm888, %v887
        $region112: #{tpu_custom_call.1} parent=95 // pred_fallthru
          _
        %v891 = vld [vmem:[#allocation2] sm:$0xff]
        %v892 = vld [vmem:[#allocation2 + $0x8] sm:$0xff]
        %v893 = vpack.c.bf16 %v892, %v891
        %v894 = vld [vmem:[%s835] sm:$0xf]
        %v895 = vld [vmem:[%s835 + $0x4] sm:$0xf]
        %v896 = vld [vmem:[%s835 + $0x8] sm:$0xf]
        %v897 = vld [vmem:[%s835 + $0xc] sm:$0xf]
        %v898 = vld [vmem:[%s838] sm:$0x1]
        %v900 = vlaneseq
        %v901 = vshrl.u32 %v900, 7
        %v902 = vsub.s32 0, %v901
        %v903 = vrot.slane %v898, %v902
        %v909 = vunpack.c.l.b16 %v894
        %v910 = vunpack.c.l.b16 %v895
        %v911 = vunpack.c.l.b16 %v896
        %v912 = vunpack.c.l.b16 %v897
        %v913 = vpack.c.b16 %v910, %v909
        %v914 = vpack.c.b16 %v912, %v911
        %vm917 = vcmask 261120
        %v919 = vsel %vm917, %v893, 0
        %921 = vmatprep.subr.bf16.mxu0 0
        %922 = vmatpush1.bf16.msra.mxu0 0
        %923 = vmatprep.subr.bf16.mxu0 0
        %924 = vmatpush1.bf16.msra.mxu0 0
        %925 = vmatprep.subr.bf16.mxu0 0
        %926 = vmatpush1.bf16.msra.mxu0 0
        %927 = vmatprep.subr.bf16.mxu0 0
        %928 = vmatpush1.bf16.msra.mxu0 0
        %929 = vmatprep.subr.bf16.mxu0 0
        %930 = vmatpush1.bf16.msra.mxu0 0
        %931 = vmatprep.subr.bf16.mxu0 0
        %932 = vmatpush1.bf16.msra.mxu0 0
        %933 = vmatprep.subr.bf16.mxu0 0
        %934 = vmatpush1.bf16.msra.mxu0 %v914
        %935 = vmatprep.subr.bf16.mxu0 0
        %936 = vmatpush1.bf16.msra.mxu0 %v913
        %937 = vmatprep.subr.bf16.mxu0 0
        %938 = vmatpush2.bf16.msra.mxu0 0
        %939 = vmatprep.subr.bf16.mxu0 0
        %940 = vmatpush2.bf16.msra.mxu0 0
        %941 = vmatprep.subr.bf16.mxu0 0
        %942 = vmatpush2.bf16.msra.mxu0 0
        %943 = vmatprep.subr.bf16.mxu0 0
        %944 = vmatpush2.bf16.msra.mxu0 0
        %945 = vmatprep.subr.bf16.mxu0 0
        %946 = vmatpush2.bf16.msra.mxu0 0
        %947 = vmatprep.subr.bf16.mxu0 0
        %948 = vmatpush2.bf16.msra.mxu0 0
        %949 = vmatprep.subr.bf16.mxu0 0
        %950 = vmatpush2.bf16.msra.mxu0 0
        %951 = vmatprep.subr.bf16.mxu0 0
        %952 = vmatpush2.bf16.msra.mxu0 0
        %953 = vmatprep.mubr.bf16.mxu0 0
        %954 = vmatmul.mubr.bf16.gmra.mxu0 %v919
        %v955 = vpop.f32.mrf.mxu0
        %v956 = vadd.f32 %v903, %v955
        %v957 = vpop.f32.mrf.mxu0
        %v958 = vpop.f32.mrf.mxu0
        %v959 = vadd.f32 %v903, %v958
        %v960 = vpop.f32.mrf.mxu0
        %961 = vdwg.mxu0
        %v962 = vld [vmem:[%s843] sm:$0xf]
        %v963 = vld [vmem:[%s843 + $0x4] sm:$0xf]
        %v964 = vld [vmem:[%s843 + $0x8] sm:$0xf]
        %v965 = vld [vmem:[%s843 + $0xc] sm:$0xf]
        %v966 = vld [vmem:[%s846] sm:$0x1]
        %v968 = vlaneseq
        %v969 = vshrl.u32 %v968, 7
        %v970 = vsub.s32 0, %v969
        %v971 = vrot.slane %v966, %v970
        %v977 = vunpack.c.l.b16 %v962
        %v978 = vunpack.c.l.b16 %v963
        %v979 = vunpack.c.l.b16 %v964
        %v980 = vunpack.c.l.b16 %v965
        %v981 = vpack.c.b16 %v978, %v977
        %v982 = vpack.c.b16 %v980, %v979
        %985 = vmatprep.subr.bf16.mxu0 0
        %986 = vmatpush1.bf16.msra.mxu0 0
        %987 = vmatprep.subr.bf16.mxu0 0
        %988 = vmatpush1.bf16.msra.mxu0 0
        %989 = vmatprep.subr.bf16.mxu0 0
        %990 = vmatpush1.bf16.msra.mxu0 0
        %991 = vmatprep.subr.bf16.mxu0 0
        %992 = vmatpush1.bf16.msra.mxu0 0
        %993 = vmatprep.subr.bf16.mxu0 0
        %994 = vmatpush1.bf16.msra.mxu0 0
        %995 = vmatprep.subr.bf16.mxu0 0
        %996 = vmatpush1.bf16.msra.mxu0 0
        %997 = vmatprep.subr.bf16.mxu0 0
        %998 = vmatpush1.bf16.msra.mxu0 %v982
        %999 = vmatprep.subr.bf16.mxu0 0
        %1000 = vmatpush1.bf16.msra.mxu0 %v981
        %1001 = vmatprep.subr.bf16.mxu0 0
        %1002 = vmatpush2.bf16.msra.mxu0 0
        %1003 = vmatprep.subr.bf16.mxu0 0
        %1004 = vmatpush2.bf16.msra.mxu0 0
        %1005 = vmatprep.subr.bf16.mxu0 0
        %1006 = vmatpush2.bf16.msra.mxu0 0
        %1007 = vmatprep.subr.bf16.mxu0 0
        %1008 = vmatpush2.bf16.msra.mxu0 0
        %1009 = vmatprep.subr.bf16.mxu0 0
        %1010 = vmatpush2.bf16.msra.mxu0 0
        %1011 = vmatprep.subr.bf16.mxu0 0
        %1012 = vmatpush2.bf16.msra.mxu0 0
        %1013 = vmatprep.subr.bf16.mxu0 0
        %1014 = vmatpush2.bf16.msra.mxu0 0
        %1015 = vmatprep.subr.bf16.mxu0 0
        %1016 = vmatpush2.bf16.msra.mxu0 0
        %1017 = vmatprep.mubr.bf16.mxu0 0
        %1018 = vmatmul.mubr.bf16.gmra.mxu0 %v919
        %v1019 = vpop.f32.mrf.mxu0
        %v1020 = vadd.f32 %v971, %v1019
        %v1021 = vpop.f32.mrf.mxu0
        %v1022 = vpop.f32.mrf.mxu0
        %v1023 = vadd.f32 %v971, %v1022
        %v1024 = vpop.f32.mrf.mxu0
        %1025 = vdwg.mxu0
        %v1026 = vld [vmem:[%s851] sm:$0xf]
        %v1027 = vld [vmem:[%s851 + $0x4] sm:$0xf]
        %v1028 = vld [vmem:[%s851 + $0x8] sm:$0xf]
        %v1029 = vld [vmem:[%s851 + $0xc] sm:$0xf]
        %v1030 = vld [vmem:[%s854] sm:$0x1]
        %v1032 = vlaneseq
        %v1033 = vshrl.u32 %v1032, 7
        %v1034 = vsub.s32 0, %v1033
        %v1035 = vrot.slane %v1030, %v1034
        %v1041 = vunpack.c.l.b16 %v1026
        %v1042 = vunpack.c.l.b16 %v1027
        %v1043 = vunpack.c.l.b16 %v1028
        %v1044 = vunpack.c.l.b16 %v1029
        %v1045 = vpack.c.b16 %v1042, %v1041
        %v1046 = vpack.c.b16 %v1044, %v1043
        %1049 = vmatprep.subr.bf16.mxu0 0
        %1050 = vmatpush1.bf16.msra.mxu0 0
        %1051 = vmatprep.subr.bf16.mxu0 0
        %1052 = vmatpush1.bf16.msra.mxu0 0
        %1053 = vmatprep.subr.bf16.mxu0 0
        %1054 = vmatpush1.bf16.msra.mxu0 0
        %1055 = vmatprep.subr.bf16.mxu0 0
        %1056 = vmatpush1.bf16.msra.mxu0 0
        %1057 = vmatprep.subr.bf16.mxu0 0
        %1058 = vmatpush1.bf16.msra.mxu0 0
        %1059 = vmatprep.subr.bf16.mxu0 0
        %1060 = vmatpush1.bf16.msra.mxu0 0
        %1061 = vmatprep.subr.bf16.mxu0 0
        %1062 = vmatpush1.bf16.msra.mxu0 %v1046
        %1063 = vmatprep.subr.bf16.mxu0 0
        %1064 = vmatpush1.bf16.msra.mxu0 %v1045
        %1065 = vmatprep.subr.bf16.mxu0 0
        %1066 = vmatpush2.bf16.msra.mxu0 0
        %1067 = vmatprep.subr.bf16.mxu0 0
        %1068 = vmatpush2.bf16.msra.mxu0 0
        %1069 = vmatprep.subr.bf16.mxu0 0
        %1070 = vmatpush2.bf16.msra.mxu0 0
        %1071 = vmatprep.subr.bf16.mxu0 0
        %1072 = vmatpush2.bf16.msra.mxu0 0
        %1073 = vmatprep.subr.bf16.mxu0 0
        %1074 = vmatpush2.bf16.msra.mxu0 0
        %1075 = vmatprep.subr.bf16.mxu0 0
        %1076 = vmatpush2.bf16.msra.mxu0 0
        %1077 = vmatprep.subr.bf16.mxu0 0
        %1078 = vmatpush2.bf16.msra.mxu0 0
        %1079 = vmatprep.subr.bf16.mxu0 0
        %1080 = vmatpush2.bf16.msra.mxu0 0
        %1081 = vmatprep.mubr.bf16.mxu0 0
        %1082 = vmatmul.mubr.bf16.gmra.mxu0 %v919
        %v1083 = vpop.f32.mrf.mxu0
        %v1084 = vadd.f32 %v1035, %v1083
        %v1085 = vpop.f32.mrf.mxu0
        %v1086 = vpop.f32.mrf.mxu0
        %v1087 = vadd.f32 %v1035, %v1086
        %v1088 = vpop.f32.mrf.mxu0
        %1089 = vdwg.mxu0
        %v1090 = vmul.f32 %v956, 0.35355338
        %v1091 = vmul.f32 %v959, 0.35355338
        %1094 = vrot.lane.b32.xlu0 %v1090, 120
        %v1095 = vpop.permute.xlu0 %1094
        %1096 = vrot.lane.b32.xlu0 %v1091, 120
        %v1097 = vpop.permute.xlu0 %1096
        %1100 = vrot.lane.b32.xlu0 %v1090, 112
        %v1101 = vpop.permute.xlu0 %1100
        %1102 = vrot.lane.b32.xlu0 %v1091, 112
        %v1103 = vpop.permute.xlu0 %1102
        %1106 = vrot.lane.b32.xlu0 %v1090, 104
        %v1107 = vpop.permute.xlu0 %1106
        %1108 = vrot.lane.b32.xlu0 %v1091, 104
        %v1109 = vpop.permute.xlu0 %1108
        %v1112 = vcombine.low %v1090, %v1101
        %v1113 = vcombine.high %v1090, %v1101
        %v1115 = vunpack.c.l.s4 1983009808
        %v1116 = vunpack.c.0.s8 %v1115
        %v1117 = vlaneseq
        %v1118 = vshrl.u32 %v1117, 7
        %v1119 = vsub.s32 %v1116, %v1118
        %v1120 = vrot.slane %v1112, %v1119
        %v1122 = vunpack.c.l.s4 1983009808
        %v1123 = vunpack.c.0.s8 %v1122
        %v1124 = vlaneseq
        %v1125 = vshrl.u32 %v1124, 7
        %v1126 = vsub.s32 %v1123, %v1125
        %v1127 = vrot.slane %v1113, %v1126
        %v1128 = vcombine.low %v1095, %v1107
        %v1129 = vcombine.high %v1095, %v1107
        %v1131 = vunpack.c.l.s4 1983009808
        %v1132 = vunpack.c.0.s8 %v1131
        %v1133 = vlaneseq
        %v1134 = vshrl.u32 %v1133, 7
        %v1135 = vsub.s32 %v1132, %v1134
        %v1136 = vrot.slane %v1128, %v1135
        %v1138 = vunpack.c.l.s4 1983009808
        %v1139 = vunpack.c.0.s8 %v1138
        %v1140 = vlaneseq
        %v1141 = vshrl.u32 %v1140, 7
        %v1142 = vsub.s32 %v1139, %v1141
        %v1143 = vrot.slane %v1129, %v1142
        %v1144 = vcombine.low %v1120, %v1136
        %v1145 = vcombine.high %v1120, %v1136
        %v1147 = vunpack.c.l.s4 1934713408
        %v1148 = vunpack.c.0.s8 %v1147
        %v1149 = vlaneseq
        %v1150 = vshrl.u32 %v1149, 7
        %v1151 = vsub.s32 %v1148, %v1150
        %v1152 = vrot.slane %v1144, %v1151
        %v1154 = vunpack.c.l.s4 1934713408
        %v1155 = vunpack.c.0.s8 %v1154
        %v1156 = vlaneseq
        %v1157 = vshrl.u32 %v1156, 7
        %v1158 = vsub.s32 %v1155, %v1157
        %v1159 = vrot.slane %v1145, %v1158
        %v1160 = vcombine.low %v1127, %v1143
        %v1161 = vcombine.high %v1127, %v1143
        %v1163 = vunpack.c.l.s4 1934713408
        %v1164 = vunpack.c.0.s8 %v1163
        %v1165 = vlaneseq
        %v1166 = vshrl.u32 %v1165, 7
        %v1167 = vsub.s32 %v1164, %v1166
        %v1168 = vrot.slane %v1160, %v1167
        %v1170 = vunpack.c.l.s4 1934713408
        %v1171 = vunpack.c.0.s8 %v1170
        %v1172 = vlaneseq
        %v1173 = vshrl.u32 %v1172, 7
        %v1174 = vsub.s32 %v1171, %v1173
        %v1175 = vrot.slane %v1161, %v1174
        %v1176 = vcombine.high %v1152, 0.0
        %v1177 = vcombine.high %v1159, 0.0
        %v1178 = vcombine.high %v1168, 0.0
        %v1179 = vcombine.high %v1175, 0.0
        %v1180 = vcombine.low %v1091, %v1103
        %v1181 = vcombine.high %v1091, %v1103
        %v1183 = vunpack.c.l.s4 1983009808
        %v1184 = vunpack.c.0.s8 %v1183
        %v1185 = vlaneseq
        %v1186 = vshrl.u32 %v1185, 7
        %v1187 = vsub.s32 %v1184, %v1186
        %v1188 = vrot.slane %v1180, %v1187
        %v1190 = vunpack.c.l.s4 1983009808
        %v1191 = vunpack.c.0.s8 %v1190
        %v1192 = vlaneseq
        %v1193 = vshrl.u32 %v1192, 7
        %v1194 = vsub.s32 %v1191, %v1193
        %v1195 = vrot.slane %v1181, %v1194
        %v1196 = vcombine.low %v1097, %v1109
        %v1197 = vcombine.high %v1097, %v1109
        %v1199 = vunpack.c.l.s4 1983009808
        %v1200 = vunpack.c.0.s8 %v1199
        %v1201 = vlaneseq
        %v1202 = vshrl.u32 %v1201, 7
        %v1203 = vsub.s32 %v1200, %v1202
        %v1204 = vrot.slane %v1196, %v1203
        %v1206 = vunpack.c.l.s4 1983009808
        %v1207 = vunpack.c.0.s8 %v1206
        %v1208 = vlaneseq
        %v1209 = vshrl.u32 %v1208, 7
        %v1210 = vsub.s32 %v1207, %v1209
        %v1211 = vrot.slane %v1197, %v1210
        %v1212 = vcombine.low %v1188, %v1204
        %v1213 = vcombine.high %v1188, %v1204
        %v1215 = vunpack.c.l.s4 1934713408
        %v1216 = vunpack.c.0.s8 %v1215
        %v1217 = vlaneseq
        %v1218 = vshrl.u32 %v1217, 7
        %v1219 = vsub.s32 %v1216, %v1218
        %v1220 = vrot.slane %v1212, %v1219
        %v1222 = vunpack.c.l.s4 1934713408
        %v1223 = vunpack.c.0.s8 %v1222
        %v1224 = vlaneseq
        %v1225 = vshrl.u32 %v1224, 7
        %v1226 = vsub.s32 %v1223, %v1225
        %v1227 = vrot.slane %v1213, %v1226
        %v1228 = vcombine.low %v1195, %v1211
        %v1229 = vcombine.high %v1195, %v1211
        %v1231 = vunpack.c.l.s4 1934713408
        %v1232 = vunpack.c.0.s8 %v1231
        %v1233 = vlaneseq
        %v1234 = vshrl.u32 %v1233, 7
        %v1235 = vsub.s32 %v1232, %v1234
        %v1236 = vrot.slane %v1228, %v1235
        %v1238 = vunpack.c.l.s4 1934713408
        %v1239 = vunpack.c.0.s8 %v1238
        %v1240 = vlaneseq
        %v1241 = vshrl.u32 %v1240, 7
        %v1242 = vsub.s32 %v1239, %v1241
        %v1243 = vrot.slane %v1229, %v1242
        %v1244 = vcombine.high %v1220, 0.0
        %v1245 = vcombine.high %v1227, 0.0
        %v1246 = vcombine.high %v1236, 0.0
        %v1247 = vcombine.high %v1243, 0.0
        %v1248 = vcombine.low %v1152, %v1159
        %v1250 = vunpack.c.l.s4 1983009808
        %v1251 = vunpack.c.0.s8 %v1250
        %v1252 = vlaneseq
        %v1253 = vshrl.u32 %v1252, 7
        %v1254 = vsub.s32 %v1251, %v1253
        %v1255 = vrot.slane %v1248, %v1254
        %v1256 = vcombine.low %v1176, %v1177
        %v1258 = vunpack.c.l.s4 1983009808
        %v1259 = vunpack.c.0.s8 %v1258
        %v1260 = vlaneseq
        %v1261 = vshrl.u32 %v1260, 7
        %v1262 = vsub.s32 %v1259, %v1261
        %v1263 = vrot.slane %v1256, %v1262
        %v1264 = vcombine.low %v1168, %v1175
        %v1266 = vunpack.c.l.s4 1983009808
        %v1267 = vunpack.c.0.s8 %v1266
        %v1268 = vlaneseq
        %v1269 = vshrl.u32 %v1268, 7
        %v1270 = vsub.s32 %v1267, %v1269
        %v1271 = vrot.slane %v1264, %v1270
        %v1272 = vcombine.low %v1178, %v1179
        %v1274 = vunpack.c.l.s4 1983009808
        %v1275 = vunpack.c.0.s8 %v1274
        %v1276 = vlaneseq
        %v1277 = vshrl.u32 %v1276, 7
        %v1278 = vsub.s32 %v1275, %v1277
        %v1279 = vrot.slane %v1272, %v1278
        %v1280 = vcombine.low %v1255, %v1263
        %v1281 = vcombine.high %v1255, %v1263
        %v1283 = vunpack.c.l.s4 1934713408
        %v1284 = vunpack.c.0.s8 %v1283
        %v1285 = vlaneseq
        %v1286 = vshrl.u32 %v1285, 7
        %v1287 = vsub.s32 %v1284, %v1286
        %v1288 = vrot.slane %v1280, %v1287
        %v1290 = vunpack.c.l.s4 1934713408
        %v1291 = vunpack.c.0.s8 %v1290
        %v1292 = vlaneseq
        %v1293 = vshrl.u32 %v1292, 7
        %v1294 = vsub.s32 %v1291, %v1293
        %v1295 = vrot.slane %v1281, %v1294
        %v1296 = vcombine.low %v1271, %v1279
        %v1297 = vcombine.high %v1271, %v1279
        %v1299 = vunpack.c.l.s4 1934713408
        %v1300 = vunpack.c.0.s8 %v1299
        %v1301 = vlaneseq
        %v1302 = vshrl.u32 %v1301, 7
        %v1303 = vsub.s32 %v1300, %v1302
        %v1304 = vrot.slane %v1296, %v1303
        %v1306 = vunpack.c.l.s4 1934713408
        %v1307 = vunpack.c.0.s8 %v1306
        %v1308 = vlaneseq
        %v1309 = vshrl.u32 %v1308, 7
        %v1310 = vsub.s32 %v1307, %v1309
        %v1311 = vrot.slane %v1297, %v1310
        %v1312 = vcombine.low %v1288, %v1304
        %v1313 = vcombine.high %v1288, %v1304
        %v1314 = vcombine.low %v1295, %v1311
        %v1315 = vcombine.high %v1295, %v1311
        %v1316 = vcombine.low %v1220, %v1227
        %v1318 = vunpack.c.l.s4 1983009808
        %v1319 = vunpack.c.0.s8 %v1318
        %v1320 = vlaneseq
        %v1321 = vshrl.u32 %v1320, 7
        %v1322 = vsub.s32 %v1319, %v1321
        %v1323 = vrot.slane %v1316, %v1322
        %v1324 = vcombine.low %v1244, %v1245
        %v1326 = vunpack.c.l.s4 1983009808
        %v1327 = vunpack.c.0.s8 %v1326
        %v1328 = vlaneseq
        %v1329 = vshrl.u32 %v1328, 7
        %v1330 = vsub.s32 %v1327, %v1329
        %v1331 = vrot.slane %v1324, %v1330
        %v1332 = vcombine.low %v1236, %v1243
        %v1334 = vunpack.c.l.s4 1983009808
        %v1335 = vunpack.c.0.s8 %v1334
        %v1336 = vlaneseq
        %v1337 = vshrl.u32 %v1336, 7
        %v1338 = vsub.s32 %v1335, %v1337
        %v1339 = vrot.slane %v1332, %v1338
        %v1340 = vcombine.low %v1246, %v1247
        %v1342 = vunpack.c.l.s4 1983009808
        %v1343 = vunpack.c.0.s8 %v1342
        %v1344 = vlaneseq
        %v1345 = vshrl.u32 %v1344, 7
        %v1346 = vsub.s32 %v1343, %v1345
        %v1347 = vrot.slane %v1340, %v1346
        %v1348 = vcombine.low %v1323, %v1331
        %v1349 = vcombine.high %v1323, %v1331
        %v1351 = vunpack.c.l.s4 1934713408
        %v1352 = vunpack.c.0.s8 %v1351
        %v1353 = vlaneseq
        %v1354 = vshrl.u32 %v1353, 7
        %v1355 = vsub.s32 %v1352, %v1354
        %v1356 = vrot.slane %v1348, %v1355
        %v1358 = vunpack.c.l.s4 1934713408
        %v1359 = vunpack.c.0.s8 %v1358
        %v1360 = vlaneseq
        %v1361 = vshrl.u32 %v1360, 7
        %v1362 = vsub.s32 %v1359, %v1361
        %v1363 = vrot.slane %v1349, %v1362
        %v1364 = vcombine.low %v1339, %v1347
        %v1365 = vcombine.high %v1339, %v1347
        %v1367 = vunpack.c.l.s4 1934713408
        %v1368 = vunpack.c.0.s8 %v1367
        %v1369 = vlaneseq
        %v1370 = vshrl.u32 %v1369, 7
        %v1371 = vsub.s32 %v1368, %v1370
        %v1372 = vrot.slane %v1364, %v1371
        %v1374 = vunpack.c.l.s4 1934713408
        %v1375 = vunpack.c.0.s8 %v1374
        %v1376 = vlaneseq
        %v1377 = vshrl.u32 %v1376, 7
        %v1378 = vsub.s32 %v1375, %v1377
        %v1379 = vrot.slane %v1365, %v1378
        %v1380 = vcombine.low %v1356, %v1372
        %v1381 = vcombine.high %v1356, %v1372
        %v1382 = vcombine.low %v1363, %v1379
        %v1383 = vcombine.high %v1363, %v1379
        %v1384 = vpack.c.bf16 %v1312, %v1312
        %v1385 = vpack.c.bf16 %v1313, %v1313
        %v1386 = vpack.c.bf16 %v1314, %v1314
        %v1387 = vpack.c.bf16 %v1315, %v1315
        %v1388 = vpack.c.bf16 %v1380, %v1380
        %v1389 = vpack.c.bf16 %v1381, %v1381
        %v1390 = vpack.c.bf16 %v1382, %v1382
        %v1391 = vpack.c.bf16 %v1383, %v1383
        %1394 = vrot.lane.b32.xlu0 %v1020, 120
        %v1395 = vpop.permute.xlu0 %1394
        %1396 = vrot.lane.b32.xlu0 %v1023, 120
        %v1397 = vpop.permute.xlu0 %1396
        %1400 = vrot.lane.b32.xlu0 %v1020, 112
        %v1401 = vpop.permute.xlu0 %1400
        %1402 = vrot.lane.b32.xlu0 %v1023, 112
        %v1403 = vpop.permute.xlu0 %1402
        %1406 = vrot.lane.b32.xlu0 %v1020, 104
        %v1407 = vpop.permute.xlu0 %1406
        %1408 = vrot.lane.b32.xlu0 %v1023, 104
        %v1409 = vpop.permute.xlu0 %1408
        %v1412 = vcombine.low %v1020, %v1401
        %v1413 = vcombine.high %v1020, %v1401
        %v1415 = vunpack.c.l.s4 1983009808
        %v1416 = vunpack.c.0.s8 %v1415
        %v1417 = vlaneseq
        %v1418 = vshrl.u32 %v1417, 7
        %v1419 = vsub.s32 %v1416, %v1418
        %v1420 = vrot.slane %v1412, %v1419
        %v1422 = vunpack.c.l.s4 1983009808
        %v1423 = vunpack.c.0.s8 %v1422
        %v1424 = vlaneseq
        %v1425 = vshrl.u32 %v1424, 7
        %v1426 = vsub.s32 %v1423, %v1425
        %v1427 = vrot.slane %v1413, %v1426
        %v1428 = vcombine.low %v1395, %v1407
        %v1429 = vcombine.high %v1395, %v1407
        %v1431 = vunpack.c.l.s4 1983009808
        %v1432 = vunpack.c.0.s8 %v1431
        %v1433 = vlaneseq
        %v1434 = vshrl.u32 %v1433, 7
        %v1435 = vsub.s32 %v1432, %v1434
        %v1436 = vrot.slane %v1428, %v1435
        %v1438 = vunpack.c.l.s4 1983009808
        %v1439 = vunpack.c.0.s8 %v1438
        %v1440 = vlaneseq
        %v1441 = vshrl.u32 %v1440, 7
        %v1442 = vsub.s32 %v1439, %v1441
        %v1443 = vrot.slane %v1429, %v1442
        %v1444 = vcombine.low %v1420, %v1436
        %v1445 = vcombine.high %v1420, %v1436
        %v1447 = vunpack.c.l.s4 1934713408
        %v1448 = vunpack.c.0.s8 %v1447
        %v1449 = vlaneseq
        %v1450 = vshrl.u32 %v1449, 7
        %v1451 = vsub.s32 %v1448, %v1450
        %v1452 = vrot.slane %v1444, %v1451
        %v1454 = vunpack.c.l.s4 1934713408
        %v1455 = vunpack.c.0.s8 %v1454
        %v1456 = vlaneseq
        %v1457 = vshrl.u32 %v1456, 7
        %v1458 = vsub.s32 %v1455, %v1457
        %v1459 = vrot.slane %v1445, %v1458
        %v1460 = vcombine.low %v1427, %v1443
        %v1461 = vcombine.high %v1427, %v1443
        %v1463 = vunpack.c.l.s4 1934713408
        %v1464 = vunpack.c.0.s8 %v1463
        %v1465 = vlaneseq
        %v1466 = vshrl.u32 %v1465, 7
        %v1467 = vsub.s32 %v1464, %v1466
        %v1468 = vrot.slane %v1460, %v1467
        %v1470 = vunpack.c.l.s4 1934713408
        %v1471 = vunpack.c.0.s8 %v1470
        %v1472 = vlaneseq
        %v1473 = vshrl.u32 %v1472, 7
        %v1474 = vsub.s32 %v1471, %v1473
        %v1475 = vrot.slane %v1461, %v1474
        %v1476 = vcombine.high %v1452, 0.0
        %v1477 = vcombine.high %v1459, 0.0
        %v1478 = vcombine.high %v1468, 0.0
        %v1479 = vcombine.high %v1475, 0.0
        %v1480 = vcombine.low %v1023, %v1403
        %v1481 = vcombine.high %v1023, %v1403
        %v1483 = vunpack.c.l.s4 1983009808
        %v1484 = vunpack.c.0.s8 %v1483
        %v1485 = vlaneseq
        %v1486 = vshrl.u32 %v1485, 7
        %v1487 = vsub.s32 %v1484, %v1486
        %v1488 = vrot.slane %v1480, %v1487
        %v1490 = vunpack.c.l.s4 1983009808
        %v1491 = vunpack.c.0.s8 %v1490
        %v1492 = vlaneseq
        %v1493 = vshrl.u32 %v1492, 7
        %v1494 = vsub.s32 %v1491, %v1493
        %v1495 = vrot.slane %v1481, %v1494
        %v1496 = vcombine.low %v1397, %v1409
        %v1497 = vcombine.high %v1397, %v1409
        %v1499 = vunpack.c.l.s4 1983009808
        %v1500 = vunpack.c.0.s8 %v1499
        %v1501 = vlaneseq
        %v1502 = vshrl.u32 %v1501, 7
        %v1503 = vsub.s32 %v1500, %v1502
        %v1504 = vrot.slane %v1496, %v1503
        %v1506 = vunpack.c.l.s4 1983009808
        %v1507 = vunpack.c.0.s8 %v1506
        %v1508 = vlaneseq
        %v1509 = vshrl.u32 %v1508, 7
        %v1510 = vsub.s32 %v1507, %v1509
        %v1511 = vrot.slane %v1497, %v1510
        %v1512 = vcombine.low %v1488, %v1504
        %v1513 = vcombine.high %v1488, %v1504
        %v1515 = vunpack.c.l.s4 1934713408
        %v1516 = vunpack.c.0.s8 %v1515
        %v1517 = vlaneseq
        %v1518 = vshrl.u32 %v1517, 7
        %v1519 = vsub.s32 %v1516, %v1518
        %v1520 = vrot.slane %v1512, %v1519
        %v1522 = vunpack.c.l.s4 1934713408
        %v1523 = vunpack.c.0.s8 %v1522
        %v1524 = vlaneseq
        %v1525 = vshrl.u32 %v1524, 7
        %v1526 = vsub.s32 %v1523, %v1525
        %v1527 = vrot.slane %v1513, %v1526
        %v1528 = vcombine.low %v1495, %v1511
        %v1529 = vcombine.high %v1495, %v1511
        %v1531 = vunpack.c.l.s4 1934713408
        %v1532 = vunpack.c.0.s8 %v1531
        %v1533 = vlaneseq
        %v1534 = vshrl.u32 %v1533, 7
        %v1535 = vsub.s32 %v1532, %v1534
        %v1536 = vrot.slane %v1528, %v1535
        %v1538 = vunpack.c.l.s4 1934713408
        %v1539 = vunpack.c.0.s8 %v1538
        %v1540 = vlaneseq
        %v1541 = vshrl.u32 %v1540, 7
        %v1542 = vsub.s32 %v1539, %v1541
        %v1543 = vrot.slane %v1529, %v1542
        %v1544 = vcombine.high %v1520, 0.0
        %v1545 = vcombine.high %v1527, 0.0
        %v1546 = vcombine.high %v1536, 0.0
        %v1547 = vcombine.high %v1543, 0.0
        %v1548 = vcombine.low %v1452, %v1459
        %v1550 = vunpack.c.l.s4 1983009808
        %v1551 = vunpack.c.0.s8 %v1550
        %v1552 = vlaneseq
        %v1553 = vshrl.u32 %v1552, 7
        %v1554 = vsub.s32 %v1551, %v1553
        %v1555 = vrot.slane %v1548, %v1554
        %v1556 = vcombine.low %v1476, %v1477
        %v1558 = vunpack.c.l.s4 1983009808
        %v1559 = vunpack.c.0.s8 %v1558
        %v1560 = vlaneseq
        %v1561 = vshrl.u32 %v1560, 7
        %v1562 = vsub.s32 %v1559, %v1561
        %v1563 = vrot.slane %v1556, %v1562
        %v1564 = vcombine.low %v1468, %v1475
        %v1566 = vunpack.c.l.s4 1983009808
        %v1567 = vunpack.c.0.s8 %v1566
        %v1568 = vlaneseq
        %v1569 = vshrl.u32 %v1568, 7
        %v1570 = vsub.s32 %v1567, %v1569
        %v1571 = vrot.slane %v1564, %v1570
        %v1572 = vcombine.low %v1478, %v1479
        %v1574 = vunpack.c.l.s4 1983009808
        %v1575 = vunpack.c.0.s8 %v1574
        %v1576 = vlaneseq
        %v1577 = vshrl.u32 %v1576, 7
        %v1578 = vsub.s32 %v1575, %v1577
        %v1579 = vrot.slane %v1572, %v1578
        %v1580 = vcombine.low %v1555, %v1563
        %v1581 = vcombine.high %v1555, %v1563
        %v1583 = vunpack.c.l.s4 1934713408
        %v1584 = vunpack.c.0.s8 %v1583
        %v1585 = vlaneseq
        %v1586 = vshrl.u32 %v1585, 7
        %v1587 = vsub.s32 %v1584, %v1586
        %v1588 = vrot.slane %v1580, %v1587
        %v1590 = vunpack.c.l.s4 1934713408
        %v1591 = vunpack.c.0.s8 %v1590
        %v1592 = vlaneseq
        %v1593 = vshrl.u32 %v1592, 7
        %v1594 = vsub.s32 %v1591, %v1593
        %v1595 = vrot.slane %v1581, %v1594
        %v1596 = vcombine.low %v1571, %v1579
        %v1597 = vcombine.high %v1571, %v1579
        %v1599 = vunpack.c.l.s4 1934713408
        %v1600 = vunpack.c.0.s8 %v1599
        %v1601 = vlaneseq
        %v1602 = vshrl.u32 %v1601, 7
        %v1603 = vsub.s32 %v1600, %v1602
        %v1604 = vrot.slane %v1596, %v1603
        %v1606 = vunpack.c.l.s4 1934713408
        %v1607 = vunpack.c.0.s8 %v1606
        %v1608 = vlaneseq
        %v1609 = vshrl.u32 %v1608, 7
        %v1610 = vsub.s32 %v1607, %v1609
        %v1611 = vrot.slane %v1597, %v1610
        %v1612 = vcombine.low %v1588, %v1604
        %v1613 = vcombine.high %v1588, %v1604
        %v1614 = vcombine.low %v1595, %v1611
        %v1615 = vcombine.high %v1595, %v1611
        %v1616 = vcombine.low %v1520, %v1527
        %v1618 = vunpack.c.l.s4 1983009808
        %v1619 = vunpack.c.0.s8 %v1618
        %v1620 = vlaneseq
        %v1621 = vshrl.u32 %v1620, 7
        %v1622 = vsub.s32 %v1619, %v1621
        %v1623 = vrot.slane %v1616, %v1622
        %v1624 = vcombine.low %v1544, %v1545
        %v1626 = vunpack.c.l.s4 1983009808
        %v1627 = vunpack.c.0.s8 %v1626
        %v1628 = vlaneseq
        %v1629 = vshrl.u32 %v1628, 7
        %v1630 = vsub.s32 %v1627, %v1629
        %v1631 = vrot.slane %v1624, %v1630
        %v1632 = vcombine.low %v1536, %v1543
        %v1634 = vunpack.c.l.s4 1983009808
        %v1635 = vunpack.c.0.s8 %v1634
        %v1636 = vlaneseq
        %v1637 = vshrl.u32 %v1636, 7
        %v1638 = vsub.s32 %v1635, %v1637
        %v1639 = vrot.slane %v1632, %v1638
        %v1640 = vcombine.low %v1546, %v1547
        %v1642 = vunpack.c.l.s4 1983009808
        %v1643 = vunpack.c.0.s8 %v1642
        %v1644 = vlaneseq
        %v1645 = vshrl.u32 %v1644, 7
        %v1646 = vsub.s32 %v1643, %v1645
        %v1647 = vrot.slane %v1640, %v1646
        %v1648 = vcombine.low %v1623, %v1631
        %v1649 = vcombine.high %v1623, %v1631
        %v1651 = vunpack.c.l.s4 1934713408
        %v1652 = vunpack.c.0.s8 %v1651
        %v1653 = vlaneseq
        %v1654 = vshrl.u32 %v1653, 7
        %v1655 = vsub.s32 %v1652, %v1654
        %v1656 = vrot.slane %v1648, %v1655
        %v1658 = vunpack.c.l.s4 1934713408
        %v1659 = vunpack.c.0.s8 %v1658
        %v1660 = vlaneseq
        %v1661 = vshrl.u32 %v1660, 7
        %v1662 = vsub.s32 %v1659, %v1661
        %v1663 = vrot.slane %v1649, %v1662
        %v1664 = vcombine.low %v1639, %v1647
        %v1665 = vcombine.high %v1639, %v1647
        %v1667 = vunpack.c.l.s4 1934713408
        %v1668 = vunpack.c.0.s8 %v1667
        %v1669 = vlaneseq
        %v1670 = vshrl.u32 %v1669, 7
        %v1671 = vsub.s32 %v1668, %v1670
        %v1672 = vrot.slane %v1664, %v1671
        %v1674 = vunpack.c.l.s4 1934713408
        %v1675 = vunpack.c.0.s8 %v1674
        %v1676 = vlaneseq
        %v1677 = vshrl.u32 %v1676, 7
        %v1678 = vsub.s32 %v1675, %v1677
        %v1679 = vrot.slane %v1665, %v1678
        %v1680 = vcombine.low %v1656, %v1672
        %v1681 = vcombine.high %v1656, %v1672
        %v1682 = vcombine.low %v1663, %v1679
        %v1683 = vcombine.high %v1663, %v1679
        %v1684 = vpack.c.bf16 %v1612, %v1612
        %v1685 = vpack.c.bf16 %v1613, %v1613
        %v1686 = vpack.c.bf16 %v1614, %v1614
        %v1687 = vpack.c.bf16 %v1615, %v1615
        %v1688 = vpack.c.bf16 %v1680, %v1680
        %v1689 = vpack.c.bf16 %v1681, %v1681
        %v1690 = vpack.c.bf16 %v1682, %v1682
        %v1691 = vpack.c.bf16 %v1683, %v1683
        %1694 = vrot.lane.b32.xlu0 %v1084, 120
        %v1695 = vpop.permute.xlu0 %1694
        %1696 = vrot.lane.b32.xlu0 %v1087, 120
        %v1697 = vpop.permute.xlu0 %1696
        %1700 = vrot.lane.b32.xlu0 %v1084, 112
        %v1701 = vpop.permute.xlu0 %1700
        %1702 = vrot.lane.b32.xlu0 %v1087, 112
        %v1703 = vpop.permute.xlu0 %1702
        %1706 = vrot.lane.b32.xlu0 %v1084, 104
        %v1707 = vpop.permute.xlu0 %1706
        %1708 = vrot.lane.b32.xlu0 %v1087, 104
        %v1709 = vpop.permute.xlu0 %1708
        %v1712 = vcombine.low %v1084, %v1701
        %v1713 = vcombine.high %v1084, %v1701
        %v1715 = vunpack.c.l.s4 1983009808
        %v1716 = vunpack.c.0.s8 %v1715
        %v1717 = vlaneseq
        %v1718 = vshrl.u32 %v1717, 7
        %v1719 = vsub.s32 %v1716, %v1718
        %v1720 = vrot.slane %v1712, %v1719
        %v1722 = vunpack.c.l.s4 1983009808
        %v1723 = vunpack.c.0.s8 %v1722
        %v1724 = vlaneseq
        %v1725 = vshrl.u32 %v1724, 7
        %v1726 = vsub.s32 %v1723, %v1725
        %v1727 = vrot.slane %v1713, %v1726
        %v1728 = vcombine.low %v1695, %v1707
        %v1729 = vcombine.high %v1695, %v1707
        %v1731 = vunpack.c.l.s4 1983009808
        %v1732 = vunpack.c.0.s8 %v1731
        %v1733 = vlaneseq
        %v1734 = vshrl.u32 %v1733, 7
        %v1735 = vsub.s32 %v1732, %v1734
        %v1736 = vrot.slane %v1728, %v1735
        %v1738 = vunpack.c.l.s4 1983009808
        %v1739 = vunpack.c.0.s8 %v1738
        %v1740 = vlaneseq
        %v1741 = vshrl.u32 %v1740, 7
        %v1742 = vsub.s32 %v1739, %v1741
        %v1743 = vrot.slane %v1729, %v1742
        %v1744 = vcombine.low %v1720, %v1736
        %v1745 = vcombine.high %v1720, %v1736
        %v1747 = vunpack.c.l.s4 1934713408
        %v1748 = vunpack.c.0.s8 %v1747
        %v1749 = vlaneseq
        %v1750 = vshrl.u32 %v1749, 7
        %v1751 = vsub.s32 %v1748, %v1750
        %v1752 = vrot.slane %v1744, %v1751
        %v1754 = vunpack.c.l.s4 1934713408
        %v1755 = vunpack.c.0.s8 %v1754
        %v1756 = vlaneseq
        %v1757 = vshrl.u32 %v1756, 7
        %v1758 = vsub.s32 %v1755, %v1757
        %v1759 = vrot.slane %v1745, %v1758
        %v1760 = vcombine.low %v1727, %v1743
        %v1761 = vcombine.high %v1727, %v1743
        %v1763 = vunpack.c.l.s4 1934713408
        %v1764 = vunpack.c.0.s8 %v1763
        %v1765 = vlaneseq
        %v1766 = vshrl.u32 %v1765, 7
        %v1767 = vsub.s32 %v1764, %v1766
        %v1768 = vrot.slane %v1760, %v1767
        %v1770 = vunpack.c.l.s4 1934713408
        %v1771 = vunpack.c.0.s8 %v1770
        %v1772 = vlaneseq
        %v1773 = vshrl.u32 %v1772, 7
        %v1774 = vsub.s32 %v1771, %v1773
        %v1775 = vrot.slane %v1761, %v1774
        %v1776 = vcombine.high %v1752, 0.0
        %v1777 = vcombine.high %v1759, 0.0
        %v1778 = vcombine.high %v1768, 0.0
        %v1779 = vcombine.high %v1775, 0.0
        %v1780 = vcombine.low %v1087, %v1703
        %v1781 = vcombine.high %v1087, %v1703
        %v1783 = vunpack.c.l.s4 1983009808
        %v1784 = vunpack.c.0.s8 %v1783
        %v1785 = vlaneseq
        %v1786 = vshrl.u32 %v1785, 7
        %v1787 = vsub.s32 %v1784, %v1786
        %v1788 = vrot.slane %v1780, %v1787
        %v1790 = vunpack.c.l.s4 1983009808
        %v1791 = vunpack.c.0.s8 %v1790
        %v1792 = vlaneseq
        %v1793 = vshrl.u32 %v1792, 7
        %v1794 = vsub.s32 %v1791, %v1793
        %v1795 = vrot.slane %v1781, %v1794
        %v1796 = vcombine.low %v1697, %v1709
        %v1797 = vcombine.high %v1697, %v1709
        %v1799 = vunpack.c.l.s4 1983009808
        %v1800 = vunpack.c.0.s8 %v1799
        %v1801 = vlaneseq
        %v1802 = vshrl.u32 %v1801, 7
        %v1803 = vsub.s32 %v1800, %v1802
        %v1804 = vrot.slane %v1796, %v1803
        %v1806 = vunpack.c.l.s4 1983009808
        %v1807 = vunpack.c.0.s8 %v1806
        %v1808 = vlaneseq
        %v1809 = vshrl.u32 %v1808, 7
        %v1810 = vsub.s32 %v1807, %v1809
        %v1811 = vrot.slane %v1797, %v1810
        %v1812 = vcombine.low %v1788, %v1804
        %v1813 = vcombine.high %v1788, %v1804
        %v1815 = vunpack.c.l.s4 1934713408
        %v1816 = vunpack.c.0.s8 %v1815
        %v1817 = vlaneseq
        %v1818 = vshrl.u32 %v1817, 7
        %v1819 = vsub.s32 %v1816, %v1818
        %v1820 = vrot.slane %v1812, %v1819
        %v1822 = vunpack.c.l.s4 1934713408
        %v1823 = vunpack.c.0.s8 %v1822
        %v1824 = vlaneseq
        %v1825 = vshrl.u32 %v1824, 7
        %v1826 = vsub.s32 %v1823, %v1825
        %v1827 = vrot.slane %v1813, %v1826
        %v1828 = vcombine.low %v1795, %v1811
        %v1829 = vcombine.high %v1795, %v1811
        %v1831 = vunpack.c.l.s4 1934713408
        %v1832 = vunpack.c.0.s8 %v1831
        %v1833 = vlaneseq
        %v1834 = vshrl.u32 %v1833, 7
        %v1835 = vsub.s32 %v1832, %v1834
        %v1836 = vrot.slane %v1828, %v1835
        %v1838 = vunpack.c.l.s4 1934713408
        %v1839 = vunpack.c.0.s8 %v1838
        %v1840 = vlaneseq
        %v1841 = vshrl.u32 %v1840, 7
        %v1842 = vsub.s32 %v1839, %v1841
        %v1843 = vrot.slane %v1829, %v1842
        %v1844 = vcombine.high %v1820, 0.0
        %v1845 = vcombine.high %v1827, 0.0
        %v1846 = vcombine.high %v1836, 0.0
        %v1847 = vcombine.high %v1843, 0.0
        %v1848 = vcombine.low %v1752, %v1759
        %v1850 = vunpack.c.l.s4 1983009808
        %v1851 = vunpack.c.0.s8 %v1850
        %v1852 = vlaneseq
        %v1853 = vshrl.u32 %v1852, 7
        %v1854 = vsub.s32 %v1851, %v1853
        %v1855 = vrot.slane %v1848, %v1854
        %v1856 = vcombine.low %v1776, %v1777
        %v1858 = vunpack.c.l.s4 1983009808
        %v1859 = vunpack.c.0.s8 %v1858
        %v1860 = vlaneseq
        %v1861 = vshrl.u32 %v1860, 7
        %v1862 = vsub.s32 %v1859, %v1861
        %v1863 = vrot.slane %v1856, %v1862
        %v1864 = vcombine.low %v1768, %v1775
        %v1866 = vunpack.c.l.s4 1983009808
        %v1867 = vunpack.c.0.s8 %v1866
        %v1868 = vlaneseq
        %v1869 = vshrl.u32 %v1868, 7
        %v1870 = vsub.s32 %v1867, %v1869
        %v1871 = vrot.slane %v1864, %v1870
        %v1872 = vcombine.low %v1778, %v1779
        %v1874 = vunpack.c.l.s4 1983009808
        %v1875 = vunpack.c.0.s8 %v1874
        %v1876 = vlaneseq
        %v1877 = vshrl.u32 %v1876, 7
        %v1878 = vsub.s32 %v1875, %v1877
        %v1879 = vrot.slane %v1872, %v1878
        %v1880 = vcombine.low %v1855, %v1863
        %v1881 = vcombine.high %v1855, %v1863
        %v1883 = vunpack.c.l.s4 1934713408
        %v1884 = vunpack.c.0.s8 %v1883
        %v1885 = vlaneseq
        %v1886 = vshrl.u32 %v1885, 7
        %v1887 = vsub.s32 %v1884, %v1886
        %v1888 = vrot.slane %v1880, %v1887
        %v1890 = vunpack.c.l.s4 1934713408
        %v1891 = vunpack.c.0.s8 %v1890
        %v1892 = vlaneseq
        %v1893 = vshrl.u32 %v1892, 7
        %v1894 = vsub.s32 %v1891, %v1893
        %v1895 = vrot.slane %v1881, %v1894
        %v1896 = vcombine.low %v1871, %v1879
        %v1897 = vcombine.high %v1871, %v1879
        %v1899 = vunpack.c.l.s4 1934713408
        %v1900 = vunpack.c.0.s8 %v1899
        %v1901 = vlaneseq
        %v1902 = vshrl.u32 %v1901, 7
        %v1903 = vsub.s32 %v1900, %v1902
        %v1904 = vrot.slane %v1896, %v1903
        %v1906 = vunpack.c.l.s4 1934713408
        %v1907 = vunpack.c.0.s8 %v1906
        %v1908 = vlaneseq
        %v1909 = vshrl.u32 %v1908, 7
        %v1910 = vsub.s32 %v1907, %v1909
        %v1911 = vrot.slane %v1897, %v1910
        %v1912 = vcombine.low %v1888, %v1904
        %v1913 = vcombine.high %v1888, %v1904
        %v1914 = vcombine.low %v1895, %v1911
        %v1915 = vcombine.high %v1895, %v1911
        %v1916 = vcombine.low %v1820, %v1827
        %v1918 = vunpack.c.l.s4 1983009808
        %v1919 = vunpack.c.0.s8 %v1918
        %v1920 = vlaneseq
        %v1921 = vshrl.u32 %v1920, 7
        %v1922 = vsub.s32 %v1919, %v1921
        %v1923 = vrot.slane %v1916, %v1922
        %v1924 = vcombine.low %v1844, %v1845
        %v1926 = vunpack.c.l.s4 1983009808
        %v1927 = vunpack.c.0.s8 %v1926
        %v1928 = vlaneseq
        %v1929 = vshrl.u32 %v1928, 7
        %v1930 = vsub.s32 %v1927, %v1929
        %v1931 = vrot.slane %v1924, %v1930
        %v1932 = vcombine.low %v1836, %v1843
        %v1934 = vunpack.c.l.s4 1983009808
        %v1935 = vunpack.c.0.s8 %v1934
        %v1936 = vlaneseq
        %v1937 = vshrl.u32 %v1936, 7
        %v1938 = vsub.s32 %v1935, %v1937
        %v1939 = vrot.slane %v1932, %v1938
        %v1940 = vcombine.low %v1846, %v1847
        %v1942 = vunpack.c.l.s4 1983009808
        %v1943 = vunpack.c.0.s8 %v1942
        %v1944 = vlaneseq
        %v1945 = vshrl.u32 %v1944, 7
        %v1946 = vsub.s32 %v1943, %v1945
        %v1947 = vrot.slane %v1940, %v1946
        %v1948 = vcombine.low %v1923, %v1931
        %v1949 = vcombine.high %v1923, %v1931
        %v1951 = vunpack.c.l.s4 1934713408
        %v1952 = vunpack.c.0.s8 %v1951
        %v1953 = vlaneseq
        %v1954 = vshrl.u32 %v1953, 7
        %v1955 = vsub.s32 %v1952, %v1954
        %v1956 = vrot.slane %v1948, %v1955
        %v1958 = vunpack.c.l.s4 1934713408
        %v1959 = vunpack.c.0.s8 %v1958
        %v1960 = vlaneseq
        %v1961 = vshrl.u32 %v1960, 7
        %v1962 = vsub.s32 %v1959, %v1961
        %v1963 = vrot.slane %v1949, %v1962
        %v1964 = vcombine.low %v1939, %v1947
        %v1965 = vcombine.high %v1939, %v1947
        %v1967 = vunpack.c.l.s4 1934713408
        %v1968 = vunpack.c.0.s8 %v1967
        %v1969 = vlaneseq
        %v1970 = vshrl.u32 %v1969, 7
        %v1971 = vsub.s32 %v1968, %v1970
        %v1972 = vrot.slane %v1964, %v1971
        %v1974 = vunpack.c.l.s4 1934713408
        %v1975 = vunpack.c.0.s8 %v1974
        %v1976 = vlaneseq
        %v1977 = vshrl.u32 %v1976, 7
        %v1978 = vsub.s32 %v1975, %v1977
        %v1979 = vrot.slane %v1965, %v1978
        %v1980 = vcombine.low %v1956, %v1972
        %v1981 = vcombine.high %v1956, %v1972
        %v1982 = vcombine.low %v1963, %v1979
        %v1983 = vcombine.high %v1963, %v1979
        %v1984 = vpack.c.bf16 %v1912, %v1912
        %v1985 = vpack.c.bf16 %v1913, %v1913
        %v1986 = vpack.c.bf16 %v1914, %v1914
        %v1987 = vpack.c.bf16 %v1915, %v1915
        %v1988 = vpack.c.bf16 %v1980, %v1980
        %v1989 = vpack.c.bf16 %v1981, %v1981
        %v1990 = vpack.c.bf16 %v1982, %v1982
        %v1991 = vpack.c.bf16 %v1983, %v1983
        %vm1992 = vcmask 64512
        %v1994 = vsel %vm1992, %v1384, 0
        %v1997 = vsel %vm1992, %v1684, 0
        %1999 = vmatprep.subr.bf16.mxu0 0
        %2000 = vmatpush1.bf16.xpose.msra.mxu0 0
        %2001 = vmatprep.subr.bf16.mxu0 0
        %2002 = vmatpush1.bf16.xpose.msra.mxu0 0
        %2003 = vmatprep.subr.bf16.mxu0 0
        %2004 = vmatpush1.bf16.xpose.msra.mxu0 0
        %2005 = vmatprep.subr.bf16.mxu0 0
        %2006 = vmatpush1.bf16.xpose.msra.mxu0 0
        %2007 = vmatprep.subr.bf16.mxu0 0
        %2008 = vmatpush1.bf16.xpose.msra.mxu0 0
        %2009 = vmatprep.subr.bf16.mxu0 0
        %2010 = vmatpush1.bf16.xpose.msra.mxu0 0
        %2011 = vmatprep.subr.bf16.mxu0 0
        %2012 = vmatpush1.bf16.xpose.msra.mxu0 0
        %2013 = vmatprep.subr.bf16.mxu0 0
        %2014 = vmatpush1.bf16.xpose.msra.mxu0 %v1997
        %2015 = vmatprep.subr.bf16.mxu0 0
        %2016 = vmatpush2.bf16.xpose.msra.mxu0 0
        %2017 = vmatprep.subr.bf16.mxu0 0
        %2018 = vmatpush2.bf16.xpose.msra.mxu0 0
        %2019 = vmatprep.subr.bf16.mxu0 0
        %2020 = vmatpush2.bf16.xpose.msra.mxu0 0
        %2021 = vmatprep.subr.bf16.mxu0 0
        %2022 = vmatpush2.bf16.xpose.msra.mxu0 0
        %2023 = vmatprep.subr.bf16.mxu0 0
        %2024 = vmatpush2.bf16.xpose.msra.mxu0 0
        %2025 = vmatprep.subr.bf16.mxu0 0
        %2026 = vmatpush2.bf16.xpose.msra.mxu0 0
        %2027 = vmatprep.subr.bf16.mxu0 0
        %2028 = vmatpush2.bf16.xpose.msra.mxu0 0
        %2029 = vmatprep.subr.bf16.mxu0 0
        %2030 = vmatpush2.bf16.xpose.msra.mxu0 0
        %2031 = vmatprep.mubr.bf16.mxu0 0
        %2032 = vmatmul.mubr.bf16.gmra.mxu0 %v1994
        %v2033 = vpop.f32.mrf.mxu0
        %v2034 = vadd.f32 0.0, %v2033
        %v2035 = vpop.f32.mrf.mxu0
        %v2036 = vpop.f32.mrf.mxu0
        %v2037 = vpop.f32.mrf.mxu0
        %2038 = vdwg.mxu0
        %v2040 = vsel %vm1992, %v1385, 0
        %v2043 = vsel %vm1992, %v1685, 0
        %2045 = vmatprep.subr.bf16.mxu0 0
        %2046 = vmatpush1.bf16.xpose.msra.mxu0 0
        %2047 = vmatprep.subr.bf16.mxu0 0
        %2048 = vmatpush1.bf16.xpose.msra.mxu0 0
        %2049 = vmatprep.subr.bf16.mxu0 0
        %2050 = vmatpush1.bf16.xpose.msra.mxu0 0
        %2051 = vmatprep.subr.bf16.mxu0 0
        %2052 = vmatpush1.bf16.xpose.msra.mxu0 0
        %2053 = vmatprep.subr.bf16.mxu0 0
        %2054 = vmatpush1.bf16.xpose.msra.mxu0 0
        %2055 = vmatprep.subr.bf16.mxu0 0
        %2056 = vmatpush1.bf16.xpose.msra.mxu0 0
        %2057 = vmatprep.subr.bf16.mxu0 0
        %2058 = vmatpush1.bf16.xpose.msra.mxu0 0
        %2059 = vmatprep.subr.bf16.mxu0 0
        %2060 = vmatpush1.bf16.xpose.msra.mxu0 %v2043
        %2061 = vmatprep.subr.bf16.mxu0 0
        %2062 = vmatpush2.bf16.xpose.msra.mxu0 0
        %2063 = vmatprep.subr.bf16.mxu0 0
        %2064 = vmatpush2.bf16.xpose.msra.mxu0 0
        %2065 = vmatprep.subr.bf16.mxu0 0
        %2066 = vmatpush2.bf16.xpose.msra.mxu0 0
        %2067 = vmatprep.subr.bf16.mxu0 0
        %2068 = vmatpush2.bf16.xpose.msra.mxu0 0
        %2069 = vmatprep.subr.bf16.mxu0 0
        %2070 = vmatpush2.bf16.xpose.msra.mxu0 0
        %2071 = vmatprep.subr.bf16.mxu0 0
        %2072 = vmatpush2.bf16.xpose.msra.mxu0 0
        %2073 = vmatprep.subr.bf16.mxu0 0
        %2074 = vmatpush2.bf16.xpose.msra.mxu0 0
        %2075 = vmatprep.subr.bf16.mxu0 0
        %2076 = vmatpush2.bf16.xpose.msra.mxu0 0
        %2077 = vmatprep.mubr.bf16.mxu0 0
        %2078 = vmatmul.mubr.bf16.gmra.mxu0 %v2040
        %v2079 = vpop.f32.mrf.mxu0
        %v2080 = vadd.f32 0.0, %v2079
        %v2081 = vpop.f32.mrf.mxu0
        %v2082 = vpop.f32.mrf.mxu0
        %v2083 = vpop.f32.mrf.mxu0
        %2084 = vdwg.mxu0
        %v2086 = vsel %vm1992, %v1386, 0
        %v2089 = vsel %vm1992, %v1686, 0
        %2091 = vmatprep.subr.bf16.mxu0 0
        %2092 = vmatpush1.bf16.xpose.msra.mxu0 0
        %2093 = vmatprep.subr.bf16.mxu0 0
        %2094 = vmatpush1.bf16.xpose.msra.mxu0 0
        %2095 = vmatprep.subr.bf16.mxu0 0
        %2096 = vmatpush1.bf16.xpose.msra.mxu0 0
        %2097 = vmatprep.subr.bf16.mxu0 0
        %2098 = vmatpush1.bf16.xpose.msra.mxu0 0
        %2099 = vmatprep.subr.bf16.mxu0 0
        %2100 = vmatpush1.bf16.xpose.msra.mxu0 0
        %2101 = vmatprep.subr.bf16.mxu0 0
        %2102 = vmatpush1.bf16.xpose.msra.mxu0 0
        %2103 = vmatprep.subr.bf16.mxu0 0
        %2104 = vmatpush1.bf16.xpose.msra.mxu0 0
        %2105 = vmatprep.subr.bf16.mxu0 0
        %2106 = vmatpush1.bf16.xpose.msra.mxu0 %v2089
        %2107 = vmatprep.subr.bf16.mxu0 0
        %2108 = vmatpush2.bf16.xpose.msra.mxu0 0
        %2109 = vmatprep.subr.bf16.mxu0 0
        %2110 = vmatpush2.bf16.xpose.msra.mxu0 0
        %2111 = vmatprep.subr.bf16.mxu0 0
        %2112 = vmatpush2.bf16.xpose.msra.mxu0 0
        %2113 = vmatprep.subr.bf16.mxu0 0
        %2114 = vmatpush2.bf16.xpose.msra.mxu0 0
        %2115 = vmatprep.subr.bf16.mxu0 0
        %2116 = vmatpush2.bf16.xpose.msra.mxu0 0
        %2117 = vmatprep.subr.bf16.mxu0 0
        %2118 = vmatpush2.bf16.xpose.msra.mxu0 0
        %2119 = vmatprep.subr.bf16.mxu0 0
        %2120 = vmatpush2.bf16.xpose.msra.mxu0 0
        %2121 = vmatprep.subr.bf16.mxu0 0
        %2122 = vmatpush2.bf16.xpose.msra.mxu0 0
        %2123 = vmatprep.mubr.bf16.mxu0 0
        %2124 = vmatmul.mubr.bf16.gmra.mxu0 %v2086
        %v2125 = vpop.f32.mrf.mxu0
        %v2126 = vadd.f32 0.0, %v2125
        %v2127 = vpop.f32.mrf.mxu0
        %v2128 = vpop.f32.mrf.mxu0
        %v2129 = vpop.f32.mrf.mxu0
        %2130 = vdwg.mxu0
        %v2132 = vsel %vm1992, %v1387, 0
        %v2135 = vsel %vm1992, %v1687, 0
        %2137 = vmatprep.subr.bf16.mxu0 0
        %2138 = vmatpush1.bf16.xpose.msra.mxu0 0
        %2139 = vmatprep.subr.bf16.mxu0 0
        %2140 = vmatpush1.bf16.xpose.msra.mxu0 0
        %2141 = vmatprep.subr.bf16.mxu0 0
        %2142 = vmatpush1.bf16.xpose.msra.mxu0 0
        %2143 = vmatprep.subr.bf16.mxu0 0
        %2144 = vmatpush1.bf16.xpose.msra.mxu0 0
        %2145 = vmatprep.subr.bf16.mxu0 0
        %2146 = vmatpush1.bf16.xpose.msra.mxu0 0
        %2147 = vmatprep.subr.bf16.mxu0 0
        %2148 = vmatpush1.bf16.xpose.msra.mxu0 0
        %2149 = vmatprep.subr.bf16.mxu0 0
        %2150 = vmatpush1.bf16.xpose.msra.mxu0 0
        %2151 = vmatprep.subr.bf16.mxu0 0
        %2152 = vmatpush1.bf16.xpose.msra.mxu0 %v2135
        %2153 = vmatprep.subr.bf16.mxu0 0
        %2154 = vmatpush2.bf16.xpose.msra.mxu0 0
        %2155 = vmatprep.subr.bf16.mxu0 0
        %2156 = vmatpush2.bf16.xpose.msra.mxu0 0
        %2157 = vmatprep.subr.bf16.mxu0 0
        %2158 = vmatpush2.bf16.xpose.msra.mxu0 0
        %2159 = vmatprep.subr.bf16.mxu0 0
        %2160 = vmatpush2.bf16.xpose.msra.mxu0 0
        %2161 = vmatprep.subr.bf16.mxu0 0
        %2162 = vmatpush2.bf16.xpose.msra.mxu0 0
        %2163 = vmatprep.subr.bf16.mxu0 0
        %2164 = vmatpush2.bf16.xpose.msra.mxu0 0
        %2165 = vmatprep.subr.bf16.mxu0 0
        %2166 = vmatpush2.bf16.xpose.msra.mxu0 0
        %2167 = vmatprep.subr.bf16.mxu0 0
        %2168 = vmatpush2.bf16.xpose.msra.mxu0 0
        %2169 = vmatprep.mubr.bf16.mxu0 0
        %2170 = vmatmul.mubr.bf16.gmra.mxu0 %v2132
        %v2171 = vpop.f32.mrf.mxu0
        %v2172 = vadd.f32 0.0, %v2171
        %v2173 = vpop.f32.mrf.mxu0
        %v2174 = vpop.f32.mrf.mxu0
        %v2175 = vpop.f32.mrf.mxu0
        %2176 = vdwg.mxu0
        %v2178 = vsel %vm1992, %v1388, 0
        %v2181 = vsel %vm1992, %v1688, 0
        %2183 = vmatprep.subr.bf16.mxu0 0
        %2184 = vmatpush1.bf16.xpose.msra.mxu0 0
        %2185 = vmatprep.subr.bf16.mxu0 0
        %2186 = vmatpush1.bf16.xpose.msra.mxu0 0
        %2187 = vmatprep.subr.bf16.mxu0 0
        %2188 = vmatpush1.bf16.xpose.msra.mxu0 0
        %2189 = vmatprep.subr.bf16.mxu0 0
        %2190 = vmatpush1.bf16.xpose.msra.mxu0 0
        %2191 = vmatprep.subr.bf16.mxu0 0
        %2192 = vmatpush1.bf16.xpose.msra.mxu0 0
        %2193 = vmatprep.subr.bf16.mxu0 0
        %2194 = vmatpush1.bf16.xpose.msra.mxu0 0
        %2195 = vmatprep.subr.bf16.mxu0 0
        %2196 = vmatpush1.bf16.xpose.msra.mxu0 0
        %2197 = vmatprep.subr.bf16.mxu0 0
        %2198 = vmatpush1.bf16.xpose.msra.mxu0 %v2181
        %2199 = vmatprep.subr.bf16.mxu0 0
        %2200 = vmatpush2.bf16.xpose.msra.mxu0 0
        %2201 = vmatprep.subr.bf16.mxu0 0
        %2202 = vmatpush2.bf16.xpose.msra.mxu0 0
        %2203 = vmatprep.subr.bf16.mxu0 0
        %2204 = vmatpush2.bf16.xpose.msra.mxu0 0
        %2205 = vmatprep.subr.bf16.mxu0 0
        %2206 = vmatpush2.bf16.xpose.msra.mxu0 0
        %2207 = vmatprep.subr.bf16.mxu0 0
        %2208 = vmatpush2.bf16.xpose.msra.mxu0 0
        %2209 = vmatprep.subr.bf16.mxu0 0
        %2210 = vmatpush2.bf16.xpose.msra.mxu0 0
        %2211 = vmatprep.subr.bf16.mxu0 0
        %2212 = vmatpush2.bf16.xpose.msra.mxu0 0
        %2213 = vmatprep.subr.bf16.mxu0 0
        %2214 = vmatpush2.bf16.xpose.msra.mxu0 0
        %2215 = vmatprep.mubr.bf16.mxu0 0
        %2216 = vmatmul.mubr.bf16.gmra.mxu0 %v2178
        %v2217 = vpop.f32.mrf.mxu0
        %v2218 = vadd.f32 0.0, %v2217
        %v2219 = vpop.f32.mrf.mxu0
        %v2220 = vpop.f32.mrf.mxu0
        %v2221 = vpop.f32.mrf.mxu0
        %2222 = vdwg.mxu0
        %v2224 = vsel %vm1992, %v1389, 0
        %v2227 = vsel %vm1992, %v1689, 0
        %2229 = vmatprep.subr.bf16.mxu0 0
        %2230 = vmatpush1.bf16.xpose.msra.mxu0 0
        %2231 = vmatprep.subr.bf16.mxu0 0
        %2232 = vmatpush1.bf16.xpose.msra.mxu0 0
        %2233 = vmatprep.subr.bf16.mxu0 0
        %2234 = vmatpush1.bf16.xpose.msra.mxu0 0
        %2235 = vmatprep.subr.bf16.mxu0 0
        %2236 = vmatpush1.bf16.xpose.msra.mxu0 0
        %2237 = vmatprep.subr.bf16.mxu0 0
        %2238 = vmatpush1.bf16.xpose.msra.mxu0 0
        %2239 = vmatprep.subr.bf16.mxu0 0
        %2240 = vmatpush1.bf16.xpose.msra.mxu0 0
        %2241 = vmatprep.subr.bf16.mxu0 0
        %2242 = vmatpush1.bf16.xpose.msra.mxu0 0
        %2243 = vmatprep.subr.bf16.mxu0 0
        %2244 = vmatpush1.bf16.xpose.msra.mxu0 %v2227
        %2245 = vmatprep.subr.bf16.mxu0 0
        %2246 = vmatpush2.bf16.xpose.msra.mxu0 0
        %2247 = vmatprep.subr.bf16.mxu0 0
        %2248 = vmatpush2.bf16.xpose.msra.mxu0 0
        %2249 = vmatprep.subr.bf16.mxu0 0
        %2250 = vmatpush2.bf16.xpose.msra.mxu0 0
        %2251 = vmatprep.subr.bf16.mxu0 0
        %2252 = vmatpush2.bf16.xpose.msra.mxu0 0
        %2253 = vmatprep.subr.bf16.mxu0 0
        %2254 = vmatpush2.bf16.xpose.msra.mxu0 0
        %2255 = vmatprep.subr.bf16.mxu0 0
        %2256 = vmatpush2.bf16.xpose.msra.mxu0 0
        %2257 = vmatprep.subr.bf16.mxu0 0
        %2258 = vmatpush2.bf16.xpose.msra.mxu0 0
        %2259 = vmatprep.subr.bf16.mxu0 0
        %2260 = vmatpush2.bf16.xpose.msra.mxu0 0
        %2261 = vmatprep.mubr.bf16.mxu0 0
        %2262 = vmatmul.mubr.bf16.gmra.mxu0 %v2224
        %v2263 = vpop.f32.mrf.mxu0
        %v2264 = vadd.f32 0.0, %v2263
        %v2265 = vpop.f32.mrf.mxu0
        %v2266 = vpop.f32.mrf.mxu0
        %v2267 = vpop.f32.mrf.mxu0
        %2268 = vdwg.mxu0
        %v2270 = vsel %vm1992, %v1390, 0
        %v2273 = vsel %vm1992, %v1690, 0
        %2275 = vmatprep.subr.bf16.mxu0 0
        %2276 = vmatpush1.bf16.xpose.msra.mxu0 0
        %2277 = vmatprep.subr.bf16.mxu0 0
        %2278 = vmatpush1.bf16.xpose.msra.mxu0 0
        %2279 = vmatprep.subr.bf16.mxu0 0
        %2280 = vmatpush1.bf16.xpose.msra.mxu0 0
        %2281 = vmatprep.subr.bf16.mxu0 0
        %2282 = vmatpush1.bf16.xpose.msra.mxu0 0
        %2283 = vmatprep.subr.bf16.mxu0 0
        %2284 = vmatpush1.bf16.xpose.msra.mxu0 0
        %2285 = vmatprep.subr.bf16.mxu0 0
        %2286 = vmatpush1.bf16.xpose.msra.mxu0 0
        %2287 = vmatprep.subr.bf16.mxu0 0
        %2288 = vmatpush1.bf16.xpose.msra.mxu0 0
        %2289 = vmatprep.subr.bf16.mxu0 0
        %2290 = vmatpush1.bf16.xpose.msra.mxu0 %v2273
        %2291 = vmatprep.subr.bf16.mxu0 0
        %2292 = vmatpush2.bf16.xpose.msra.mxu0 0
        %2293 = vmatprep.subr.bf16.mxu0 0
        %2294 = vmatpush2.bf16.xpose.msra.mxu0 0
        %2295 = vmatprep.subr.bf16.mxu0 0
        %2296 = vmatpush2.bf16.xpose.msra.mxu0 0
        %2297 = vmatprep.subr.bf16.mxu0 0
        %2298 = vmatpush2.bf16.xpose.msra.mxu0 0
        %2299 = vmatprep.subr.bf16.mxu0 0
        %2300 = vmatpush2.bf16.xpose.msra.mxu0 0
        %2301 = vmatprep.subr.bf16.mxu0 0
        %2302 = vmatpush2.bf16.xpose.msra.mxu0 0
        %2303 = vmatprep.subr.bf16.mxu0 0
        %2304 = vmatpush2.bf16.xpose.msra.mxu0 0
        %2305 = vmatprep.subr.bf16.mxu0 0
        %2306 = vmatpush2.bf16.xpose.msra.mxu0 0
        %2307 = vmatprep.mubr.bf16.mxu0 0
        %2308 = vmatmul.mubr.bf16.gmra.mxu0 %v2270
        %v2309 = vpop.f32.mrf.mxu0
        %v2310 = vadd.f32 0.0, %v2309
        %v2311 = vpop.f32.mrf.mxu0
        %v2312 = vpop.f32.mrf.mxu0
        %v2313 = vpop.f32.mrf.mxu0
        %2314 = vdwg.mxu0
        %v2316 = vsel %vm1992, %v1391, 0
        %v2319 = vsel %vm1992, %v1691, 0
        %2321 = vmatprep.subr.bf16.mxu0 0
        %2322 = vmatpush1.bf16.xpose.msra.mxu0 0
        %2323 = vmatprep.subr.bf16.mxu0 0
        %2324 = vmatpush1.bf16.xpose.msra.mxu0 0
        %2325 = vmatprep.subr.bf16.mxu0 0
        %2326 = vmatpush1.bf16.xpose.msra.mxu0 0
        %2327 = vmatprep.subr.bf16.mxu0 0
        %2328 = vmatpush1.bf16.xpose.msra.mxu0 0
        %2329 = vmatprep.subr.bf16.mxu0 0
        %2330 = vmatpush1.bf16.xpose.msra.mxu0 0
        %2331 = vmatprep.subr.bf16.mxu0 0
        %2332 = vmatpush1.bf16.xpose.msra.mxu0 0
        %2333 = vmatprep.subr.bf16.mxu0 0
        %2334 = vmatpush1.bf16.xpose.msra.mxu0 0
        %2335 = vmatprep.subr.bf16.mxu0 0
        %2336 = vmatpush1.bf16.xpose.msra.mxu0 %v2319
        %2337 = vmatprep.subr.bf16.mxu0 0
        %2338 = vmatpush2.bf16.xpose.msra.mxu0 0
        %2339 = vmatprep.subr.bf16.mxu0 0
        %2340 = vmatpush2.bf16.xpose.msra.mxu0 0
        %2341 = vmatprep.subr.bf16.mxu0 0
        %2342 = vmatpush2.bf16.xpose.msra.mxu0 0
        %2343 = vmatprep.subr.bf16.mxu0 0
        %2344 = vmatpush2.bf16.xpose.msra.mxu0 0
        %2345 = vmatprep.subr.bf16.mxu0 0
        %2346 = vmatpush2.bf16.xpose.msra.mxu0 0
        %2347 = vmatprep.subr.bf16.mxu0 0
        %2348 = vmatpush2.bf16.xpose.msra.mxu0 0
        %2349 = vmatprep.subr.bf16.mxu0 0
        %2350 = vmatpush2.bf16.xpose.msra.mxu0 0
        %2351 = vmatprep.subr.bf16.mxu0 0
        %2352 = vmatpush2.bf16.xpose.msra.mxu0 0
        %2353 = vmatprep.mubr.bf16.mxu0 0
        %2354 = vmatmul.mubr.bf16.gmra.mxu0 %v2316
        %v2355 = vpop.f32.mrf.mxu0
        %v2356 = vadd.f32 0.0, %v2355
        %v2357 = vpop.f32.mrf.mxu0
        %v2358 = vpop.f32.mrf.mxu0
        %v2359 = vpop.f32.mrf.mxu0
        %2360 = vdwg.mxu0
        %v2361 = vsel %vm1992, %v2034, -inf
        %2362 = vmax.xlane.f32.xlu0 %v2361
        %v2363 = vpop.xlane.xlu0 %2362
        %v2364 = vsel %vm1992, %v2080, -inf
        %2365 = vmax.xlane.f32.xlu0 %v2364
        %v2366 = vpop.xlane.xlu0 %2365
        %v2367 = vsel %vm1992, %v2126, -inf
        %2368 = vmax.xlane.f32.xlu0 %v2367
        %v2369 = vpop.xlane.xlu0 %2368
        %v2370 = vsel %vm1992, %v2172, -inf
        %2371 = vmax.xlane.f32.xlu0 %v2370
        %v2372 = vpop.xlane.xlu0 %2371
        %v2373 = vsel %vm1992, %v2218, -inf
        %2374 = vmax.xlane.f32.xlu0 %v2373
        %v2375 = vpop.xlane.xlu0 %2374
        %v2376 = vsel %vm1992, %v2264, -inf
        %2377 = vmax.xlane.f32.xlu0 %v2376
        %v2378 = vpop.xlane.xlu0 %2377
        %v2379 = vsel %vm1992, %v2310, -inf
        %2380 = vmax.xlane.f32.xlu0 %v2379
        %v2381 = vpop.xlane.xlu0 %2380
        %v2382 = vsel %vm1992, %v2356, -inf
        %2383 = vmax.xlane.f32.xlu0 %v2382
        %v2384 = vpop.xlane.xlu0 %2383
        %v2385 = vsub.f32 %v2034, %v2363
        %v2386 = vsub.f32 %v2080, %v2366
        %v2387 = vsub.f32 %v2126, %v2369
        %v2388 = vsub.f32 %v2172, %v2372
        %v2389 = vsub.f32 %v2218, %v2375
        %v2390 = vsub.f32 %v2264, %v2378
        %v2391 = vsub.f32 %v2310, %v2381
        %v2392 = vsub.f32 %v2356, %v2384
        %v2393 = vmul.f32 %v2385, 1.442695
        %v2394 = vpow.pop %v2393
        %v2395 = vmul.f32 %v2386, 1.442695
        %v2396 = vpow.pop %v2395
        %v2397 = vmul.f32 %v2387, 1.442695
        %v2398 = vpow.pop %v2397
        %v2399 = vmul.f32 %v2388, 1.442695
        %v2400 = vpow.pop %v2399
        %v2401 = vmul.f32 %v2389, 1.442695
        %v2402 = vpow.pop %v2401
        %v2403 = vmul.f32 %v2390, 1.442695
        %v2404 = vpow.pop %v2403
        %v2405 = vmul.f32 %v2391, 1.442695
        %v2406 = vpow.pop %v2405
        %v2407 = vmul.f32 %v2392, 1.442695
        %v2408 = vpow.pop %v2407
        %v2409 = vsel %vm1992, %v2394, 0.0
        %2410 = vadd.xlane.f32.xlu0 %v2409
        %v2411 = vpop.xlane.xlu0 %2410
        %v2412 = vsel %vm1992, %v2396, 0.0
        %2413 = vadd.xlane.f32.xlu0 %v2412
        %v2414 = vpop.xlane.xlu0 %2413
        %v2415 = vsel %vm1992, %v2398, 0.0
        %2416 = vadd.xlane.f32.xlu0 %v2415
        %v2417 = vpop.xlane.xlu0 %2416
        %v2418 = vsel %vm1992, %v2400, 0.0
        %2419 = vadd.xlane.f32.xlu0 %v2418
        %v2420 = vpop.xlane.xlu0 %2419
        %v2421 = vsel %vm1992, %v2402, 0.0
        %2422 = vadd.xlane.f32.xlu0 %v2421
        %v2423 = vpop.xlane.xlu0 %2422
        %v2424 = vsel %vm1992, %v2404, 0.0
        %2425 = vadd.xlane.f32.xlu0 %v2424
        %v2426 = vpop.xlane.xlu0 %2425
        %v2427 = vsel %vm1992, %v2406, 0.0
        %2428 = vadd.xlane.f32.xlu0 %v2427
        %v2429 = vpop.xlane.xlu0 %2428
        %v2430 = vsel %vm1992, %v2408, 0.0
        %2431 = vadd.xlane.f32.xlu0 %v2430
        %v2432 = vpop.xlane.xlu0 %2431
        %v2433 = vrcp.pop %v2411
        %v2434 = vrcp.pop %v2414
        %v2435 = vrcp.pop %v2417
        %v2436 = vrcp.pop %v2420
        %v2437 = vrcp.pop %v2423
        %v2438 = vrcp.pop %v2426
        %v2439 = vrcp.pop %v2429
        %v2440 = vrcp.pop %v2432
        %v2441 = vmul.f32 %v2394, %v2433
        %v2442 = vmul.f32 %v2396, %v2434
        %v2443 = vmul.f32 %v2398, %v2435
        %v2444 = vmul.f32 %v2400, %v2436
        %v2445 = vmul.f32 %v2402, %v2437
        %v2446 = vmul.f32 %v2404, %v2438
        %v2447 = vmul.f32 %v2406, %v2439
        %v2448 = vmul.f32 %v2408, %v2440
        %v2449 = vpack.c.bf16 %v2441, %v2441
        %v2450 = vpack.c.bf16 %v2442, %v2442
        %v2451 = vpack.c.bf16 %v2443, %v2443
        %v2452 = vpack.c.bf16 %v2444, %v2444
        %v2453 = vpack.c.bf16 %v2445, %v2445
        %v2454 = vpack.c.bf16 %v2446, %v2446
        %v2455 = vpack.c.bf16 %v2447, %v2447
        %v2456 = vpack.c.bf16 %v2448, %v2448
        %v2458 = vsel %vm1992, %v2449, 0
        %vm2460 = vcmask 1043456
        %v2462 = vsel %vm2460, %v1984, 0
        %2464 = vmatprep.subr.bf16.mxu0 0
        %2465 = vmatpush1.bf16.msra.mxu0 0
        %2466 = vmatprep.subr.bf16.mxu0 0
        %2467 = vmatpush1.bf16.msra.mxu0 0
        %2468 = vmatprep.subr.bf16.mxu0 0
        %2469 = vmatpush1.bf16.msra.mxu0 0
        %2470 = vmatprep.subr.bf16.mxu0 0
        %2471 = vmatpush1.bf16.msra.mxu0 0
        %2472 = vmatprep.subr.bf16.mxu0 0
        %2473 = vmatpush1.bf16.msra.mxu0 0
        %2474 = vmatprep.subr.bf16.mxu0 0
        %2475 = vmatpush1.bf16.msra.mxu0 0
        %2476 = vmatprep.subr.bf16.mxu0 0
        %2477 = vmatpush1.bf16.msra.mxu0 0
        %2478 = vmatprep.subr.bf16.mxu0 0
        %2479 = vmatpush1.bf16.msra.mxu0 %v2462
        %2480 = vmatprep.subr.bf16.mxu0 0
        %2481 = vmatpush2.bf16.msra.mxu0 0
        %2482 = vmatprep.subr.bf16.mxu0 0
        %2483 = vmatpush2.bf16.msra.mxu0 0
        %2484 = vmatprep.subr.bf16.mxu0 0
        %2485 = vmatpush2.bf16.msra.mxu0 0
        %2486 = vmatprep.subr.bf16.mxu0 0
        %2487 = vmatpush2.bf16.msra.mxu0 0
        %2488 = vmatprep.subr.bf16.mxu0 0
        %2489 = vmatpush2.bf16.msra.mxu0 0
        %2490 = vmatprep.subr.bf16.mxu0 0
        %2491 = vmatpush2.bf16.msra.mxu0 0
        %2492 = vmatprep.subr.bf16.mxu0 0
        %2493 = vmatpush2.bf16.msra.mxu0 0
        %2494 = vmatprep.subr.bf16.mxu0 0
        %2495 = vmatpush2.bf16.msra.mxu0 0
        %2496 = vmatprep.mubr.bf16.mxu0 0
        %2497 = vmatmul.mubr.bf16.gmra.mxu0 %v2458
        %v2498 = vpop.f32.mrf.mxu0
        %v2499 = vadd.f32 0.0, %v2498
        %v2500 = vpop.f32.mrf.mxu0
        %v2501 = vpop.f32.mrf.mxu0
        %v2502 = vpop.f32.mrf.mxu0
        %2503 = vdwg.mxu0
        %v2505 = vsel %vm1992, %v2450, 0
        %v2508 = vsel %vm2460, %v1985, 0
        %2510 = vmatprep.subr.bf16.mxu0 0
        %2511 = vmatpush1.bf16.msra.mxu0 0
        %2512 = vmatprep.subr.bf16.mxu0 0
        %2513 = vmatpush1.bf16.msra.mxu0 0
        %2514 = vmatprep.subr.bf16.mxu0 0
        %2515 = vmatpush1.bf16.msra.mxu0 0
        %2516 = vmatprep.subr.bf16.mxu0 0
        %2517 = vmatpush1.bf16.msra.mxu0 0
        %2518 = vmatprep.subr.bf16.mxu0 0
        %2519 = vmatpush1.bf16.msra.mxu0 0
        %2520 = vmatprep.subr.bf16.mxu0 0
        %2521 = vmatpush1.bf16.msra.mxu0 0
        %2522 = vmatprep.subr.bf16.mxu0 0
        %2523 = vmatpush1.bf16.msra.mxu0 0
        %2524 = vmatprep.subr.bf16.mxu0 0
        %2525 = vmatpush1.bf16.msra.mxu0 %v2508
        %2526 = vmatprep.subr.bf16.mxu0 0
        %2527 = vmatpush2.bf16.msra.mxu0 0
        %2528 = vmatprep.subr.bf16.mxu0 0
        %2529 = vmatpush2.bf16.msra.mxu0 0
        %2530 = vmatprep.subr.bf16.mxu0 0
        %2531 = vmatpush2.bf16.msra.mxu0 0
        %2532 = vmatprep.subr.bf16.mxu0 0
        %2533 = vmatpush2.bf16.msra.mxu0 0
        %2534 = vmatprep.subr.bf16.mxu0 0
        %2535 = vmatpush2.bf16.msra.mxu0 0
        %2536 = vmatprep.subr.bf16.mxu0 0
        %2537 = vmatpush2.bf16.msra.mxu0 0
        %2538 = vmatprep.subr.bf16.mxu0 0
        %2539 = vmatpush2.bf16.msra.mxu0 0
        %2540 = vmatprep.subr.bf16.mxu0 0
        %2541 = vmatpush2.bf16.msra.mxu0 0
        %2542 = vmatprep.mubr.bf16.mxu0 0
        %2543 = vmatmul.mubr.bf16.gmra.mxu0 %v2505
        %v2544 = vpop.f32.mrf.mxu0
        %v2545 = vadd.f32 0.0, %v2544
        %v2546 = vpop.f32.mrf.mxu0
        %v2547 = vpop.f32.mrf.mxu0
        %v2548 = vpop.f32.mrf.mxu0
        %2549 = vdwg.mxu0
        %v2551 = vsel %vm1992, %v2451, 0
        %v2554 = vsel %vm2460, %v1986, 0
        %2556 = vmatprep.subr.bf16.mxu0 0
        %2557 = vmatpush1.bf16.msra.mxu0 0
        %2558 = vmatprep.subr.bf16.mxu0 0
        %2559 = vmatpush1.bf16.msra.mxu0 0
        %2560 = vmatprep.subr.bf16.mxu0 0
        %2561 = vmatpush1.bf16.msra.mxu0 0
        %2562 = vmatprep.subr.bf16.mxu0 0
        %2563 = vmatpush1.bf16.msra.mxu0 0
        %2564 = vmatprep.subr.bf16.mxu0 0
        %2565 = vmatpush1.bf16.msra.mxu0 0
        %2566 = vmatprep.subr.bf16.mxu0 0
        %2567 = vmatpush1.bf16.msra.mxu0 0
        %2568 = vmatprep.subr.bf16.mxu0 0
        %2569 = vmatpush1.bf16.msra.mxu0 0
        %2570 = vmatprep.subr.bf16.mxu0 0
        %2571 = vmatpush1.bf16.msra.mxu0 %v2554
        %2572 = vmatprep.subr.bf16.mxu0 0
        %2573 = vmatpush2.bf16.msra.mxu0 0
        %2574 = vmatprep.subr.bf16.mxu0 0
        %2575 = vmatpush2.bf16.msra.mxu0 0
        %2576 = vmatprep.subr.bf16.mxu0 0
        %2577 = vmatpush2.bf16.msra.mxu0 0
        %2578 = vmatprep.subr.bf16.mxu0 0
        %2579 = vmatpush2.bf16.msra.mxu0 0
        %2580 = vmatprep.subr.bf16.mxu0 0
        %2581 = vmatpush2.bf16.msra.mxu0 0
        %2582 = vmatprep.subr.bf16.mxu0 0
        %2583 = vmatpush2.bf16.msra.mxu0 0
        %2584 = vmatprep.subr.bf16.mxu0 0
        %2585 = vmatpush2.bf16.msra.mxu0 0
        %2586 = vmatprep.subr.bf16.mxu0 0
        %2587 = vmatpush2.bf16.msra.mxu0 0
        %2588 = vmatprep.mubr.bf16.mxu0 0
        %2589 = vmatmul.mubr.bf16.gmra.mxu0 %v2551
        %v2590 = vpop.f32.mrf.mxu0
        %v2591 = vadd.f32 0.0, %v2590
        %v2592 = vpop.f32.mrf.mxu0
        %v2593 = vpop.f32.mrf.mxu0
        %v2594 = vpop.f32.mrf.mxu0
        %2595 = vdwg.mxu0
        %v2597 = vsel %vm1992, %v2452, 0
        %v2600 = vsel %vm2460, %v1987, 0
        %2602 = vmatprep.subr.bf16.mxu0 0
        %2603 = vmatpush1.bf16.msra.mxu0 0
        %2604 = vmatprep.subr.bf16.mxu0 0
        %2605 = vmatpush1.bf16.msra.mxu0 0
        %2606 = vmatprep.subr.bf16.mxu0 0
        %2607 = vmatpush1.bf16.msra.mxu0 0
        %2608 = vmatprep.subr.bf16.mxu0 0
        %2609 = vmatpush1.bf16.msra.mxu0 0
        %2610 = vmatprep.subr.bf16.mxu0 0
        %2611 = vmatpush1.bf16.msra.mxu0 0
        %2612 = vmatprep.subr.bf16.mxu0 0
        %2613 = vmatpush1.bf16.msra.mxu0 0
        %2614 = vmatprep.subr.bf16.mxu0 0
        %2615 = vmatpush1.bf16.msra.mxu0 0
        %2616 = vmatprep.subr.bf16.mxu0 0
        %2617 = vmatpush1.bf16.msra.mxu0 %v2600
        %2618 = vmatprep.subr.bf16.mxu0 0
        %2619 = vmatpush2.bf16.msra.mxu0 0
        %2620 = vmatprep.subr.bf16.mxu0 0
        %2621 = vmatpush2.bf16.msra.mxu0 0
        %2622 = vmatprep.subr.bf16.mxu0 0
        %2623 = vmatpush2.bf16.msra.mxu0 0
        %2624 = vmatprep.subr.bf16.mxu0 0
        %2625 = vmatpush2.bf16.msra.mxu0 0
        %2626 = vmatprep.subr.bf16.mxu0 0
        %2627 = vmatpush2.bf16.msra.mxu0 0
        %2628 = vmatprep.subr.bf16.mxu0 0
        %2629 = vmatpush2.bf16.msra.mxu0 0
        %2630 = vmatprep.subr.bf16.mxu0 0
        %2631 = vmatpush2.bf16.msra.mxu0 0
        %2632 = vmatprep.subr.bf16.mxu0 0
        %2633 = vmatpush2.bf16.msra.mxu0 0
        %2634 = vmatprep.mubr.bf16.mxu0 0
        %2635 = vmatmul.mubr.bf16.gmra.mxu0 %v2597
        %v2636 = vpop.f32.mrf.mxu0
        %v2637 = vadd.f32 0.0, %v2636
        %v2638 = vpop.f32.mrf.mxu0
        %v2639 = vpop.f32.mrf.mxu0
        %v2640 = vpop.f32.mrf.mxu0
        %2641 = vdwg.mxu0
        %v2643 = vsel %vm1992, %v2453, 0
        %v2646 = vsel %vm2460, %v1988, 0
        %2648 = vmatprep.subr.bf16.mxu0 0
        %2649 = vmatpush1.bf16.msra.mxu0 0
        %2650 = vmatprep.subr.bf16.mxu0 0
        %2651 = vmatpush1.bf16.msra.mxu0 0
        %2652 = vmatprep.subr.bf16.mxu0 0
        %2653 = vmatpush1.bf16.msra.mxu0 0
        %2654 = vmatprep.subr.bf16.mxu0 0
        %2655 = vmatpush1.bf16.msra.mxu0 0
        %2656 = vmatprep.subr.bf16.mxu0 0
        %2657 = vmatpush1.bf16.msra.mxu0 0
        %2658 = vmatprep.subr.bf16.mxu0 0
        %2659 = vmatpush1.bf16.msra.mxu0 0
        %2660 = vmatprep.subr.bf16.mxu0 0
        %2661 = vmatpush1.bf16.msra.mxu0 0
        %2662 = vmatprep.subr.bf16.mxu0 0
        %2663 = vmatpush1.bf16.msra.mxu0 %v2646
        %2664 = vmatprep.subr.bf16.mxu0 0
        %2665 = vmatpush2.bf16.msra.mxu0 0
        %2666 = vmatprep.subr.bf16.mxu0 0
        %2667 = vmatpush2.bf16.msra.mxu0 0
        %2668 = vmatprep.subr.bf16.mxu0 0
        %2669 = vmatpush2.bf16.msra.mxu0 0
        %2670 = vmatprep.subr.bf16.mxu0 0
        %2671 = vmatpush2.bf16.msra.mxu0 0
        %2672 = vmatprep.subr.bf16.mxu0 0
        %2673 = vmatpush2.bf16.msra.mxu0 0
        %2674 = vmatprep.subr.bf16.mxu0 0
        %2675 = vmatpush2.bf16.msra.mxu0 0
        %2676 = vmatprep.subr.bf16.mxu0 0
        %2677 = vmatpush2.bf16.msra.mxu0 0
        %2678 = vmatprep.subr.bf16.mxu0 0
        %2679 = vmatpush2.bf16.msra.mxu0 0
        %2680 = vmatprep.mubr.bf16.mxu0 0
        %2681 = vmatmul.mubr.bf16.gmra.mxu0 %v2643
        %v2682 = vpop.f32.mrf.mxu0
        %v2683 = vadd.f32 0.0, %v2682
        %v2684 = vpop.f32.mrf.mxu0
        %v2685 = vpop.f32.mrf.mxu0
        %v2686 = vpop.f32.mrf.mxu0
        %2687 = vdwg.mxu0
        %v2689 = vsel %vm1992, %v2454, 0
        %v2692 = vsel %vm2460, %v1989, 0
        %2694 = vmatprep.subr.bf16.mxu0 0
        %2695 = vmatpush1.bf16.msra.mxu0 0
        %2696 = vmatprep.subr.bf16.mxu0 0
        %2697 = vmatpush1.bf16.msra.mxu0 0
        %2698 = vmatprep.subr.bf16.mxu0 0
        %2699 = vmatpush1.bf16.msra.mxu0 0
        %2700 = vmatprep.subr.bf16.mxu0 0
        %2701 = vmatpush1.bf16.msra.mxu0 0
        %2702 = vmatprep.subr.bf16.mxu0 0
        %2703 = vmatpush1.bf16.msra.mxu0 0
        %2704 = vmatprep.subr.bf16.mxu0 0
        %2705 = vmatpush1.bf16.msra.mxu0 0
        %2706 = vmatprep.subr.bf16.mxu0 0
        %2707 = vmatpush1.bf16.msra.mxu0 0
        %2708 = vmatprep.subr.bf16.mxu0 0
        %2709 = vmatpush1.bf16.msra.mxu0 %v2692
        %2710 = vmatprep.subr.bf16.mxu0 0
        %2711 = vmatpush2.bf16.msra.mxu0 0
        %2712 = vmatprep.subr.bf16.mxu0 0
        %2713 = vmatpush2.bf16.msra.mxu0 0
        %2714 = vmatprep.subr.bf16.mxu0 0
        %2715 = vmatpush2.bf16.msra.mxu0 0
        %2716 = vmatprep.subr.bf16.mxu0 0
        %2717 = vmatpush2.bf16.msra.mxu0 0
        %2718 = vmatprep.subr.bf16.mxu0 0
        %2719 = vmatpush2.bf16.msra.mxu0 0
        %2720 = vmatprep.subr.bf16.mxu0 0
        %2721 = vmatpush2.bf16.msra.mxu0 0
        %2722 = vmatprep.subr.bf16.mxu0 0
        %2723 = vmatpush2.bf16.msra.mxu0 0
        %2724 = vmatprep.subr.bf16.mxu0 0
        %2725 = vmatpush2.bf16.msra.mxu0 0
        %2726 = vmatprep.mubr.bf16.mxu0 0
        %2727 = vmatmul.mubr.bf16.gmra.mxu0 %v2689
        %v2728 = vpop.f32.mrf.mxu0
        %v2729 = vadd.f32 0.0, %v2728
        %v2730 = vpop.f32.mrf.mxu0
        %v2731 = vpop.f32.mrf.mxu0
        %v2732 = vpop.f32.mrf.mxu0
        %2733 = vdwg.mxu0
        %v2735 = vsel %vm1992, %v2455, 0
        %v2738 = vsel %vm2460, %v1990, 0
        %2740 = vmatprep.subr.bf16.mxu0 0
        %2741 = vmatpush1.bf16.msra.mxu0 0
        %2742 = vmatprep.subr.bf16.mxu0 0
        %2743 = vmatpush1.bf16.msra.mxu0 0
        %2744 = vmatprep.subr.bf16.mxu0 0
        %2745 = vmatpush1.bf16.msra.mxu0 0
        %2746 = vmatprep.subr.bf16.mxu0 0
        %2747 = vmatpush1.bf16.msra.mxu0 0
        %2748 = vmatprep.subr.bf16.mxu0 0
        %2749 = vmatpush1.bf16.msra.mxu0 0
        %2750 = vmatprep.subr.bf16.mxu0 0
        %2751 = vmatpush1.bf16.msra.mxu0 0
        %2752 = vmatprep.subr.bf16.mxu0 0
        %2753 = vmatpush1.bf16.msra.mxu0 0
        %2754 = vmatprep.subr.bf16.mxu0 0
        %2755 = vmatpush1.bf16.msra.mxu0 %v2738
        %2756 = vmatprep.subr.bf16.mxu0 0
        %2757 = vmatpush2.bf16.msra.mxu0 0
        %2758 = vmatprep.subr.bf16.mxu0 0
        %2759 = vmatpush2.bf16.msra.mxu0 0
        %2760 = vmatprep.subr.bf16.mxu0 0
        %2761 = vmatpush2.bf16.msra.mxu0 0
        %2762 = vmatprep.subr.bf16.mxu0 0
        %2763 = vmatpush2.bf16.msra.mxu0 0
        %2764 = vmatprep.subr.bf16.mxu0 0
        %2765 = vmatpush2.bf16.msra.mxu0 0
        %2766 = vmatprep.subr.bf16.mxu0 0
        %2767 = vmatpush2.bf16.msra.mxu0 0
        %2768 = vmatprep.subr.bf16.mxu0 0
        %2769 = vmatpush2.bf16.msra.mxu0 0
        %2770 = vmatprep.subr.bf16.mxu0 0
        %2771 = vmatpush2.bf16.msra.mxu0 0
        %2772 = vmatprep.mubr.bf16.mxu0 0
        %2773 = vmatmul.mubr.bf16.gmra.mxu0 %v2735
        %v2774 = vpop.f32.mrf.mxu0
        %v2775 = vadd.f32 0.0, %v2774
        %v2776 = vpop.f32.mrf.mxu0
        %v2777 = vpop.f32.mrf.mxu0
        %v2778 = vpop.f32.mrf.mxu0
        %2779 = vdwg.mxu0
        %v2781 = vsel %vm1992, %v2456, 0
        %v2784 = vsel %vm2460, %v1991, 0
        %2786 = vmatprep.subr.bf16.mxu0 0
        %2787 = vmatpush1.bf16.msra.mxu0 0
        %2788 = vmatprep.subr.bf16.mxu0 0
        %2789 = vmatpush1.bf16.msra.mxu0 0
        %2790 = vmatprep.subr.bf16.mxu0 0
        %2791 = vmatpush1.bf16.msra.mxu0 0
        %2792 = vmatprep.subr.bf16.mxu0 0
        %2793 = vmatpush1.bf16.msra.mxu0 0
        %2794 = vmatprep.subr.bf16.mxu0 0
        %2795 = vmatpush1.bf16.msra.mxu0 0
        %2796 = vmatprep.subr.bf16.mxu0 0
        %2797 = vmatpush1.bf16.msra.mxu0 0
        %2798 = vmatprep.subr.bf16.mxu0 0
        %2799 = vmatpush1.bf16.msra.mxu0 0
        %2800 = vmatprep.subr.bf16.mxu0 0
        %2801 = vmatpush1.bf16.msra.mxu0 %v2784
        %2802 = vmatprep.subr.bf16.mxu0 0
        %2803 = vmatpush2.bf16.msra.mxu0 0
        %2804 = vmatprep.subr.bf16.mxu0 0
        %2805 = vmatpush2.bf16.msra.mxu0 0
        %2806 = vmatprep.subr.bf16.mxu0 0
        %2807 = vmatpush2.bf16.msra.mxu0 0
        %2808 = vmatprep.subr.bf16.mxu0 0
        %2809 = vmatpush2.bf16.msra.mxu0 0
        %2810 = vmatprep.subr.bf16.mxu0 0
        %2811 = vmatpush2.bf16.msra.mxu0 0
        %2812 = vmatprep.subr.bf16.mxu0 0
        %2813 = vmatpush2.bf16.msra.mxu0 0
        %2814 = vmatprep.subr.bf16.mxu0 0
        %2815 = vmatpush2.bf16.msra.mxu0 0
        %2816 = vmatprep.subr.bf16.mxu0 0
        %2817 = vmatpush2.bf16.msra.mxu0 0
        %2818 = vmatprep.mubr.bf16.mxu0 0
        %2819 = vmatmul.mubr.bf16.gmra.mxu0 %v2781
        %v2820 = vpop.f32.mrf.mxu0
        %v2821 = vadd.f32 0.0, %v2820
        %v2822 = vpop.f32.mrf.mxu0
        %v2823 = vpop.f32.mrf.mxu0
        %v2824 = vpop.f32.mrf.mxu0
        %2825 = vdwg.mxu0
        %v2826 = vcombine.low %v2499, %v2591
        %v2827 = vcombine.high %v2499, %v2591
        %v2829 = vunpack.c.l.s4 1983009808
        %v2830 = vunpack.c.0.s8 %v2829
        %v2831 = vlaneseq
        %v2832 = vshrl.u32 %v2831, 7
        %v2833 = vsub.s32 %v2830, %v2832
        %v2834 = vrot.slane %v2826, %v2833
        %v2836 = vunpack.c.l.s4 1983009808
        %v2837 = vunpack.c.0.s8 %v2836
        %v2838 = vlaneseq
        %v2839 = vshrl.u32 %v2838, 7
        %v2840 = vsub.s32 %v2837, %v2839
        %v2841 = vrot.slane %v2827, %v2840
        %v2842 = vcombine.low %v2545, %v2637
        %v2843 = vcombine.high %v2545, %v2637
        %v2845 = vunpack.c.l.s4 1983009808
        %v2846 = vunpack.c.0.s8 %v2845
        %v2847 = vlaneseq
        %v2848 = vshrl.u32 %v2847, 7
        %v2849 = vsub.s32 %v2846, %v2848
        %v2850 = vrot.slane %v2842, %v2849
        %v2852 = vunpack.c.l.s4 1983009808
        %v2853 = vunpack.c.0.s8 %v2852
        %v2854 = vlaneseq
        %v2855 = vshrl.u32 %v2854, 7
        %v2856 = vsub.s32 %v2853, %v2855
        %v2857 = vrot.slane %v2843, %v2856
        %v2858 = vcombine.low %v2834, %v2850
        %v2859 = vcombine.high %v2834, %v2850
        %v2861 = vunpack.c.l.s4 1934713408
        %v2862 = vunpack.c.0.s8 %v2861
        %v2863 = vlaneseq
        %v2864 = vshrl.u32 %v2863, 7
        %v2865 = vsub.s32 %v2862, %v2864
        %v2866 = vrot.slane %v2858, %v2865
        %v2868 = vunpack.c.l.s4 1934713408
        %v2869 = vunpack.c.0.s8 %v2868
        %v2870 = vlaneseq
        %v2871 = vshrl.u32 %v2870, 7
        %v2872 = vsub.s32 %v2869, %v2871
        %v2873 = vrot.slane %v2859, %v2872
        %v2874 = vcombine.low %v2841, %v2857
        %v2875 = vcombine.high %v2841, %v2857
        %v2877 = vunpack.c.l.s4 1934713408
        %v2878 = vunpack.c.0.s8 %v2877
        %v2879 = vlaneseq
        %v2880 = vshrl.u32 %v2879, 7
        %v2881 = vsub.s32 %v2878, %v2880
        %v2882 = vrot.slane %v2874, %v2881
        %v2884 = vunpack.c.l.s4 1934713408
        %v2885 = vunpack.c.0.s8 %v2884
        %v2886 = vlaneseq
        %v2887 = vshrl.u32 %v2886, 7
        %v2888 = vsub.s32 %v2885, %v2887
        %v2889 = vrot.slane %v2875, %v2888
        %v2890 = vcombine.high %v2866, 0.0
        %v2891 = vcombine.high %v2873, 0.0
        %v2892 = vcombine.high %v2882, 0.0
        %v2893 = vcombine.high %v2889, 0.0
        %v2894 = vcombine.low %v2683, %v2775
        %v2895 = vcombine.high %v2683, %v2775
        %v2897 = vunpack.c.l.s4 1983009808
        %v2898 = vunpack.c.0.s8 %v2897
        %v2899 = vlaneseq
        %v2900 = vshrl.u32 %v2899, 7
        %v2901 = vsub.s32 %v2898, %v2900
        %v2902 = vrot.slane %v2894, %v2901
        %v2904 = vunpack.c.l.s4 1983009808
        %v2905 = vunpack.c.0.s8 %v2904
        %v2906 = vlaneseq
        %v2907 = vshrl.u32 %v2906, 7
        %v2908 = vsub.s32 %v2905, %v2907
        %v2909 = vrot.slane %v2895, %v2908
        %v2910 = vcombine.low %v2729, %v2821
        %v2911 = vcombine.high %v2729, %v2821
        %v2913 = vunpack.c.l.s4 1983009808
        %v2914 = vunpack.c.0.s8 %v2913
        %v2915 = vlaneseq
        %v2916 = vshrl.u32 %v2915, 7
        %v2917 = vsub.s32 %v2914, %v2916
        %v2918 = vrot.slane %v2910, %v2917
        %v2920 = vunpack.c.l.s4 1983009808
        %v2921 = vunpack.c.0.s8 %v2920
        %v2922 = vlaneseq
        %v2923 = vshrl.u32 %v2922, 7
        %v2924 = vsub.s32 %v2921, %v2923
        %v2925 = vrot.slane %v2911, %v2924
        %v2926 = vcombine.low %v2902, %v2918
        %v2927 = vcombine.high %v2902, %v2918
        %v2929 = vunpack.c.l.s4 1934713408
        %v2930 = vunpack.c.0.s8 %v2929
        %v2931 = vlaneseq
        %v2932 = vshrl.u32 %v2931, 7
        %v2933 = vsub.s32 %v2930, %v2932
        %v2934 = vrot.slane %v2926, %v2933
        %v2936 = vunpack.c.l.s4 1934713408
        %v2937 = vunpack.c.0.s8 %v2936
        %v2938 = vlaneseq
        %v2939 = vshrl.u32 %v2938, 7
        %v2940 = vsub.s32 %v2937, %v2939
        %v2941 = vrot.slane %v2927, %v2940
        %v2942 = vcombine.low %v2909, %v2925
        %v2943 = vcombine.high %v2909, %v2925
        %v2945 = vunpack.c.l.s4 1934713408
        %v2946 = vunpack.c.0.s8 %v2945
        %v2947 = vlaneseq
        %v2948 = vshrl.u32 %v2947, 7
        %v2949 = vsub.s32 %v2946, %v2948
        %v2950 = vrot.slane %v2942, %v2949
        %v2952 = vunpack.c.l.s4 1934713408
        %v2953 = vunpack.c.0.s8 %v2952
        %v2954 = vlaneseq
        %v2955 = vshrl.u32 %v2954, 7
        %v2956 = vsub.s32 %v2953, %v2955
        %v2957 = vrot.slane %v2943, %v2956
        %v2958 = vcombine.high %v2934, 0.0
        %v2959 = vcombine.high %v2941, 0.0
        %v2960 = vcombine.high %v2950, 0.0
        %v2961 = vcombine.high %v2957, 0.0
        %v2962 = vcombine.low %v2866, %v2873
        %v2964 = vunpack.c.l.s4 1983009808
        %v2965 = vunpack.c.0.s8 %v2964
        %v2966 = vlaneseq
        %v2967 = vshrl.u32 %v2966, 7
        %v2968 = vsub.s32 %v2965, %v2967
        %v2969 = vrot.slane %v2962, %v2968
        %v2970 = vcombine.low %v2890, %v2891
        %v2972 = vunpack.c.l.s4 1983009808
        %v2973 = vunpack.c.0.s8 %v2972
        %v2974 = vlaneseq
        %v2975 = vshrl.u32 %v2974, 7
        %v2976 = vsub.s32 %v2973, %v2975
        %v2977 = vrot.slane %v2970, %v2976
        %v2978 = vcombine.low %v2882, %v2889
        %v2980 = vunpack.c.l.s4 1983009808
        %v2981 = vunpack.c.0.s8 %v2980
        %v2982 = vlaneseq
        %v2983 = vshrl.u32 %v2982, 7
        %v2984 = vsub.s32 %v2981, %v2983
        %v2985 = vrot.slane %v2978, %v2984
        %v2986 = vcombine.low %v2892, %v2893
        %v2988 = vunpack.c.l.s4 1983009808
        %v2989 = vunpack.c.0.s8 %v2988
        %v2990 = vlaneseq
        %v2991 = vshrl.u32 %v2990, 7
        %v2992 = vsub.s32 %v2989, %v2991
        %v2993 = vrot.slane %v2986, %v2992
        %v2994 = vcombine.low %v2969, %v2977
        %v2995 = vcombine.high %v2969, %v2977
        %v2997 = vunpack.c.l.s4 1934713408
        %v2998 = vunpack.c.0.s8 %v2997
        %v2999 = vlaneseq
        %v3000 = vshrl.u32 %v2999, 7
        %v3001 = vsub.s32 %v2998, %v3000
        %v3002 = vrot.slane %v2994, %v3001
        %v3004 = vunpack.c.l.s4 1934713408
        %v3005 = vunpack.c.0.s8 %v3004
        %v3006 = vlaneseq
        %v3007 = vshrl.u32 %v3006, 7
        %v3008 = vsub.s32 %v3005, %v3007
        %v3009 = vrot.slane %v2995, %v3008
        %v3010 = vcombine.low %v2985, %v2993
        %v3011 = vcombine.high %v2985, %v2993
        %v3013 = vunpack.c.l.s4 1934713408
        %v3014 = vunpack.c.0.s8 %v3013
        %v3015 = vlaneseq
        %v3016 = vshrl.u32 %v3015, 7
        %v3017 = vsub.s32 %v3014, %v3016
        %v3018 = vrot.slane %v3010, %v3017
        %v3020 = vunpack.c.l.s4 1934713408
        %v3021 = vunpack.c.0.s8 %v3020
        %v3022 = vlaneseq
        %v3023 = vshrl.u32 %v3022, 7
        %v3024 = vsub.s32 %v3021, %v3023
        %v3025 = vrot.slane %v3011, %v3024
        %v3026 = vcombine.low %v3002, %v3018
        %v3027 = vcombine.high %v3002, %v3018
        %v3028 = vcombine.low %v3009, %v3025
        %v3029 = vcombine.high %v3009, %v3025
        %v3030 = vcombine.low %v2934, %v2941
        %v3032 = vunpack.c.l.s4 1983009808
        %v3033 = vunpack.c.0.s8 %v3032
        %v3034 = vlaneseq
        %v3035 = vshrl.u32 %v3034, 7
        %v3036 = vsub.s32 %v3033, %v3035
        %v3037 = vrot.slane %v3030, %v3036
        %v3038 = vcombine.low %v2958, %v2959
        %v3040 = vunpack.c.l.s4 1983009808
        %v3041 = vunpack.c.0.s8 %v3040
        %v3042 = vlaneseq
        %v3043 = vshrl.u32 %v3042, 7
        %v3044 = vsub.s32 %v3041, %v3043
        %v3045 = vrot.slane %v3038, %v3044
        %v3046 = vcombine.low %v2950, %v2957
        %v3048 = vunpack.c.l.s4 1983009808
        %v3049 = vunpack.c.0.s8 %v3048
        %v3050 = vlaneseq
        %v3051 = vshrl.u32 %v3050, 7
        %v3052 = vsub.s32 %v3049, %v3051
        %v3053 = vrot.slane %v3046, %v3052
        %v3054 = vcombine.low %v2960, %v2961
        %v3056 = vunpack.c.l.s4 1983009808
        %v3057 = vunpack.c.0.s8 %v3056
        %v3058 = vlaneseq
        %v3059 = vshrl.u32 %v3058, 7
        %v3060 = vsub.s32 %v3057, %v3059
        %v3061 = vrot.slane %v3054, %v3060
        %v3062 = vcombine.low %v3037, %v3045
        %v3063 = vcombine.high %v3037, %v3045
        %v3065 = vunpack.c.l.s4 1934713408
        %v3066 = vunpack.c.0.s8 %v3065
        %v3067 = vlaneseq
        %v3068 = vshrl.u32 %v3067, 7
        %v3069 = vsub.s32 %v3066, %v3068
        %v3070 = vrot.slane %v3062, %v3069
        %v3072 = vunpack.c.l.s4 1934713408
        %v3073 = vunpack.c.0.s8 %v3072
        %v3074 = vlaneseq
        %v3075 = vshrl.u32 %v3074, 7
        %v3076 = vsub.s32 %v3073, %v3075
        %v3077 = vrot.slane %v3063, %v3076
        %v3078 = vcombine.low %v3053, %v3061
        %v3079 = vcombine.high %v3053, %v3061
        %v3081 = vunpack.c.l.s4 1934713408
        %v3082 = vunpack.c.0.s8 %v3081
        %v3083 = vlaneseq
        %v3084 = vshrl.u32 %v3083, 7
        %v3085 = vsub.s32 %v3082, %v3084
        %v3086 = vrot.slane %v3078, %v3085
        %v3088 = vunpack.c.l.s4 1934713408
        %v3089 = vunpack.c.0.s8 %v3088
        %v3090 = vlaneseq
        %v3091 = vshrl.u32 %v3090, 7
        %v3092 = vsub.s32 %v3089, %v3091
        %v3093 = vrot.slane %v3079, %v3092
        %v3094 = vcombine.low %v3070, %v3086
        %v3095 = vcombine.high %v3070, %v3086
        %v3096 = vcombine.low %v3077, %v3093
        %v3097 = vcombine.high %v3077, %v3093
        %3100 = vrot.lane.b32.xlu0 %v3027, 8
        %v3101 = vpop.permute.xlu0 %3100
        %3102 = vrot.lane.b32.xlu0 %v3095, 8
        %v3103 = vpop.permute.xlu0 %3102
        %3108 = vrot.lane.b32.xlu0 %v3028, 16
        %v3109 = vpop.permute.xlu0 %3108
        %3110 = vrot.lane.b32.xlu0 %v3096, 16
        %v3111 = vpop.permute.xlu0 %3110
        %3116 = vrot.lane.b32.xlu0 %v3029, 24
        %v3117 = vpop.permute.xlu0 %3116
        %3118 = vrot.lane.b32.xlu0 %v3097, 24
        %v3119 = vpop.permute.xlu0 %3118
        %v3122 = vsel %vm1992, %v3026, %v3101
        %v3123 = vsel %vm1992, %v3094, %v3103
        %vm3124 = vcmask 130048
        %v3125 = vsel %vm3124, %v3122, %v3109
        %v3126 = vsel %vm3124, %v3123, %v3111
        %vm3127 = vcmask 195584
        %v3128 = vsel %vm3127, %v3125, %v3117
        %v3129 = vsel %vm3127, %v3126, %v3119
        %v3130 = vpack.c.bf16 %v3129, %v3128
        %v3131 = vld [vmem:[%s717] sm:$0xf]
        %v3132 = vld [vmem:[%s717 + $0x4] sm:$0xf]
        %v3133 = vld [vmem:[%s717 + $0x8] sm:$0xf]
        %v3134 = vld [vmem:[%s717 + $0xc] sm:$0xf]
        %v3135 = vld [vmem:[%s857] sm:$0x1]
        %v3137 = vlaneseq
        %v3138 = vshrl.u32 %v3137, 7
        %v3139 = vsub.s32 0, %v3138
        %v3140 = vrot.slane %v3135, %v3139
        %v3146 = vunpack.c.l.b16 %v3131
        %v3147 = vunpack.c.l.b16 %v3132
        %v3148 = vunpack.c.l.b16 %v3133
        %v3149 = vunpack.c.l.b16 %v3134
        %v3150 = vpack.c.b16 %v3147, %v3146
        %v3151 = vpack.c.b16 %v3149, %v3148
        %v3155 = vsel %vm917, %v3130, 0
        %3157 = vmatprep.subr.bf16.mxu0 0
        %3158 = vmatpush1.bf16.msra.mxu0 0
        %3159 = vmatprep.subr.bf16.mxu0 0
        %3160 = vmatpush1.bf16.msra.mxu0 0
        %3161 = vmatprep.subr.bf16.mxu0 0
        %3162 = vmatpush1.bf16.msra.mxu0 0
        %3163 = vmatprep.subr.bf16.mxu0 0
        %3164 = vmatpush1.bf16.msra.mxu0 0
        %3165 = vmatprep.subr.bf16.mxu0 0
        %3166 = vmatpush1.bf16.msra.mxu0 0
        %3167 = vmatprep.subr.bf16.mxu0 0
        %3168 = vmatpush1.bf16.msra.mxu0 0
        %3169 = vmatprep.subr.bf16.mxu0 0
        %3170 = vmatpush1.bf16.msra.mxu0 %v3151
        %3171 = vmatprep.subr.bf16.mxu0 0
        %3172 = vmatpush1.bf16.msra.mxu0 %v3150
        %3173 = vmatprep.subr.bf16.mxu0 0
        %3174 = vmatpush2.bf16.msra.mxu0 0
        %3175 = vmatprep.subr.bf16.mxu0 0
        %3176 = vmatpush2.bf16.msra.mxu0 0
        %3177 = vmatprep.subr.bf16.mxu0 0
        %3178 = vmatpush2.bf16.msra.mxu0 0
        %3179 = vmatprep.subr.bf16.mxu0 0
        %3180 = vmatpush2.bf16.msra.mxu0 0
        %3181 = vmatprep.subr.bf16.mxu0 0
        %3182 = vmatpush2.bf16.msra.mxu0 0
        %3183 = vmatprep.subr.bf16.mxu0 0
        %3184 = vmatpush2.bf16.msra.mxu0 0
        %3185 = vmatprep.subr.bf16.mxu0 0
        %3186 = vmatpush2.bf16.msra.mxu0 0
        %3187 = vmatprep.subr.bf16.mxu0 0
        %3188 = vmatpush2.bf16.msra.mxu0 0
        %3189 = vmatprep.mubr.bf16.mxu0 0
        %3190 = vmatmul.mubr.bf16.gmra.mxu0 %v3155
        %v3191 = vpop.f32.mrf.mxu0
        %v3192 = vadd.f32 %v3140, %v3191
        %v3193 = vpop.f32.mrf.mxu0
        %v3194 = vpop.f32.mrf.mxu0
        %v3195 = vadd.f32 %v3140, %v3194
        %v3196 = vpop.f32.mrf.mxu0
        %3197 = vdwg.mxu0
        %v3198 = vadd.f32 %v891, %v3192
        %v3199 = vadd.f32 %v892, %v3195
        %v3200 = vld [vmem:[%s860] sm:$0x1]
        %v3201 = vld [vmem:[%s863] sm:$0x1]
        %v3202 = vsel %vm917, %v3198, 0.0
        %3203 = vadd.xlane.f32.xlu0 %v3202
        %v3204 = vpop.xlane.xlu0 %3203
        %v3205 = vsel %vm917, %v3199, 0.0
        %3206 = vadd.xlane.f32.xlu0 %v3205
        %v3207 = vpop.xlane.xlu0 %3206
        %v3208 = vrcp.pop 32.0
        %v3209 = vmul.f32 %v3204, %v3208
        %v3210 = vmul.f32 %v3207, %v3208
        %v3211 = vsub.f32 %v3198, %v3209
        %v3212 = vsub.f32 %v3199, %v3210
        %v3213 = vmul.f32 %v3211, %v3211
        %v3214 = vmul.f32 %v3212, %v3212
        %v3215 = vsel %vm917, %v3213, 0.0
        %3216 = vadd.xlane.f32.xlu0 %v3215
        %v3217 = vpop.xlane.xlu0 %3216
        %v3218 = vsel %vm917, %v3214, 0.0
        %3219 = vadd.xlane.f32.xlu0 %v3218
        %v3220 = vpop.xlane.xlu0 %3219
        %v3221 = vmul.f32 %v3217, %v3208
        %v3222 = vmul.f32 %v3220, %v3208
        %v3223 = vadd.f32 %v3221, 1e-05
        %v3224 = vadd.f32 %v3222, 1e-05
        %v3225 = vrsqrt.pop %v3223
        %v3226 = vrsqrt.pop %v3224
        %v3227 = vmul.f32 %v3211, %v3225
        %v3228 = vmul.f32 %v3212, %v3226
        %v3230 = vlaneseq
        %v3231 = vshrl.u32 %v3230, 7
        %v3232 = vsub.s32 0, %v3231
        %v3233 = vrot.slane %v3200, %v3232
        %v3235 = vmul.f32 %v3227, %v3233
        %v3236 = vmul.f32 %v3228, %v3233
        %v3238 = vlaneseq
        %v3239 = vshrl.u32 %v3238, 7
        %v3240 = vsub.s32 0, %v3239
        %v3241 = vrot.slane %v3201, %v3240
        %v3243 = vadd.f32 %v3235, %v3241
        %v3244 = vadd.f32 %v3236, %v3241
        %v3245 = vpack.c.bf16 %v3244, %v3243
        %v3246 = vld [vmem:[%s726] sm:$0xf]
        %v3247 = vld [vmem:[%s726 + $0x4] sm:$0xf]
        %v3248 = vld [vmem:[%s726 + $0x8] sm:$0xf]
        %v3249 = vld [vmem:[%s726 + $0xc] sm:$0xf]
        %v3250 = vld [vmem:[%s866] sm:$0x1]
        %v3252 = vlaneseq
        %v3253 = vshrl.u32 %v3252, 7
        %v3254 = vsub.s32 0, %v3253
        %v3255 = vrot.slane %v3250, %v3254
        %v3261 = vunpack.c.l.b16 %v3246
        %v3262 = vunpack.c.l.b16 %v3247
        %v3263 = vunpack.c.l.b16 %v3248
        %v3264 = vunpack.c.l.b16 %v3249
        %v3265 = vpack.c.b16 %v3262, %v3261
        %v3266 = vpack.c.b16 %v3264, %v3263
        %v3270 = vsel %vm917, %v3245, 0
        %3272 = vmatprep.subr.bf16.mxu0 0
        %3273 = vmatpush1.bf16.msra.mxu0 0
        %3274 = vmatprep.subr.bf16.mxu0 0
        %3275 = vmatpush1.bf16.msra.mxu0 0
        %3276 = vmatprep.subr.bf16.mxu0 0
        %3277 = vmatpush1.bf16.msra.mxu0 0
        %3278 = vmatprep.subr.bf16.mxu0 0
        %3279 = vmatpush1.bf16.msra.mxu0 0
        %3280 = vmatprep.subr.bf16.mxu0 0
        %3281 = vmatpush1.bf16.msra.mxu0 0
        %3282 = vmatprep.subr.bf16.mxu0 0
        %3283 = vmatpush1.bf16.msra.mxu0 0
        %3284 = vmatprep.subr.bf16.mxu0 0
        %3285 = vmatpush1.bf16.msra.mxu0 %v3266
        %3286 = vmatprep.subr.bf16.mxu0 0
        %3287 = vmatpush1.bf16.msra.mxu0 %v3265
        %3288 = vmatprep.subr.bf16.mxu0 0
        %3289 = vmatpush2.bf16.msra.mxu0 0
        %3290 = vmatprep.subr.bf16.mxu0 0
        %3291 = vmatpush2.bf16.msra.mxu0 0
        %3292 = vmatprep.subr.bf16.mxu0 0
        %3293 = vmatpush2.bf16.msra.mxu0 0
        %3294 = vmatprep.subr.bf16.mxu0 0
        %3295 = vmatpush2.bf16.msra.mxu0 0
        %3296 = vmatprep.subr.bf16.mxu0 0
        %3297 = vmatpush2.bf16.msra.mxu0 0
        %3298 = vmatprep.subr.bf16.mxu0 0
        %3299 = vmatpush2.bf16.msra.mxu0 0
        %3300 = vmatprep.subr.bf16.mxu0 0
        %3301 = vmatpush2.bf16.msra.mxu0 0
        %3302 = vmatprep.subr.bf16.mxu0 0
        %3303 = vmatpush2.bf16.msra.mxu0 0
        %3304 = vmatprep.mubr.bf16.mxu0 0
        %3305 = vmatmul.mubr.bf16.gmra.mxu0 %v3270
        %v3306 = vpop.f32.mrf.mxu0
        %v3307 = vadd.f32 %v3255, %v3306
        %v3308 = vpop.f32.mrf.mxu0
        %v3309 = vpop.f32.mrf.mxu0
        %v3310 = vadd.f32 %v3255, %v3309
        %v3311 = vpop.f32.mrf.mxu0
        %3312 = vdwg.mxu0
        %v3313 = vmax.f32 %v3307, 0.0
        %v3314 = vmax.f32 %v3310, 0.0
        %v3315 = vpack.c.bf16 %v3314, %v3313
        %v3316 = vld [vmem:[%s871] sm:$0xf]
        %v3317 = vld [vmem:[%s871 + $0x4] sm:$0xf]
        %v3318 = vld [vmem:[%s871 + $0x8] sm:$0xf]
        %v3319 = vld [vmem:[%s871 + $0xc] sm:$0xf]
        %v3320 = vld [vmem:[%s871 + $0x10] sm:$0xf]
        %v3321 = vld [vmem:[%s871 + $0x14] sm:$0xf]
        %v3322 = vld [vmem:[%s871 + $0x18] sm:$0xf]
        %v3323 = vld [vmem:[%s871 + $0x1c] sm:$0xf]
        %v3324 = vld [vmem:[%s874] sm:$0x1]
        %v3326 = vlaneseq
        %v3327 = vshrl.u32 %v3326, 7
        %v3328 = vsub.s32 0, %v3327
        %v3329 = vrot.slane %v3324, %v3328
        %v3339 = vunpack.c.l.b16 %v3316
        %v3340 = vunpack.c.l.b16 %v3317
        %v3341 = vunpack.c.l.b16 %v3318
        %v3342 = vunpack.c.l.b16 %v3319
        %v3343 = vunpack.c.l.b16 %v3320
        %v3344 = vunpack.c.l.b16 %v3321
        %v3345 = vunpack.c.l.b16 %v3322
        %v3346 = vunpack.c.l.b16 %v3323
        %v3347 = vpack.c.b16 %v3340, %v3339
        %v3348 = vpack.c.b16 %v3342, %v3341
        %v3349 = vpack.c.b16 %v3344, %v3343
        %v3350 = vpack.c.b16 %v3346, %v3345
        %vm3355 = vcmask 523264
        %v3357 = vsel %vm3355, %v3315, 0
        %3359 = vmatprep.subr.bf16.mxu0 0
        %3360 = vmatpush1.bf16.msra.mxu0 0
        %3361 = vmatprep.subr.bf16.mxu0 0
        %3362 = vmatpush1.bf16.msra.mxu0 0
        %3363 = vmatprep.subr.bf16.mxu0 0
        %3364 = vmatpush1.bf16.msra.mxu0 0
        %3365 = vmatprep.subr.bf16.mxu0 0
        %3366 = vmatpush1.bf16.msra.mxu0 0
        %3367 = vmatprep.subr.bf16.mxu0 0
        %3368 = vmatpush1.bf16.msra.mxu0 %v3350
        %3369 = vmatprep.subr.bf16.mxu0 0
        %3370 = vmatpush1.bf16.msra.mxu0 %v3349
        %3371 = vmatprep.subr.bf16.mxu0 0
        %3372 = vmatpush1.bf16.msra.mxu0 %v3348
        %3373 = vmatprep.subr.bf16.mxu0 0
        %3374 = vmatpush1.bf16.msra.mxu0 %v3347
        %3375 = vmatprep.subr.bf16.mxu0 0
        %3376 = vmatpush2.bf16.msra.mxu0 0
        %3377 = vmatprep.subr.bf16.mxu0 0
        %3378 = vmatpush2.bf16.msra.mxu0 0
        %3379 = vmatprep.subr.bf16.mxu0 0
        %3380 = vmatpush2.bf16.msra.mxu0 0
        %3381 = vmatprep.subr.bf16.mxu0 0
        %3382 = vmatpush2.bf16.msra.mxu0 0
        %3383 = vmatprep.subr.bf16.mxu0 0
        %3384 = vmatpush2.bf16.msra.mxu0 0
        %3385 = vmatprep.subr.bf16.mxu0 0
        %3386 = vmatpush2.bf16.msra.mxu0 0
        %3387 = vmatprep.subr.bf16.mxu0 0
        %3388 = vmatpush2.bf16.msra.mxu0 0
        %3389 = vmatprep.subr.bf16.mxu0 0
        %3390 = vmatpush2.bf16.msra.mxu0 0
        %3391 = vmatprep.mubr.bf16.mxu0 0
        %3392 = vmatmul.mubr.bf16.gmra.mxu0 %v3357
        %v3393 = vpop.f32.mrf.mxu0
        %v3394 = vadd.f32 %v3329, %v3393
        %v3395 = vpop.f32.mrf.mxu0
        %v3396 = vpop.f32.mrf.mxu0
        %v3397 = vadd.f32 %v3329, %v3396
        %v3398 = vpop.f32.mrf.mxu0
        %3399 = vdwg.mxu0
        %v3400 = vadd.f32 %v3243, %v3394
        %v3401 = vadd.f32 %v3244, %v3397
        %v3402 = vld [vmem:[%s877] sm:$0x1]
        %v3403 = vld [vmem:[%s880] sm:$0x1]
        %v3404 = vsel %vm917, %v3400, 0.0
        %3405 = vadd.xlane.f32.xlu0 %v3404
        %v3406 = vpop.xlane.xlu0 %3405
        %v3407 = vsel %vm917, %v3401, 0.0
        %3408 = vadd.xlane.f32.xlu0 %v3407
        %v3409 = vpop.xlane.xlu0 %3408
        %v3410 = vmul.f32 %v3406, %v3208
        %v3411 = vmul.f32 %v3409, %v3208
        %v3412 = vsub.f32 %v3400, %v3410
        %v3413 = vsub.f32 %v3401, %v3411
        %v3414 = vmul.f32 %v3412, %v3412
        %v3415 = vmul.f32 %v3413, %v3413
        %v3416 = vsel %vm917, %v3414, 0.0
        %3417 = vadd.xlane.f32.xlu0 %v3416
        %v3418 = vpop.xlane.xlu0 %3417
        %v3419 = vsel %vm917, %v3415, 0.0
        %3420 = vadd.xlane.f32.xlu0 %v3419
        %v3421 = vpop.xlane.xlu0 %3420
        %v3422 = vmul.f32 %v3418, %v3208
        %v3423 = vmul.f32 %v3421, %v3208
        %v3424 = vadd.f32 %v3422, 1e-05
        %v3425 = vadd.f32 %v3423, 1e-05
        %v3426 = vrsqrt.pop %v3424
        %v3427 = vrsqrt.pop %v3425
        %v3428 = vmul.f32 %v3412, %v3426
        %v3429 = vmul.f32 %v3413, %v3427
        %v3431 = vlaneseq
        %v3432 = vshrl.u32 %v3431, 7
        %v3433 = vsub.s32 0, %v3432
        %v3434 = vrot.slane %v3402, %v3433
        %v3436 = vmul.f32 %v3428, %v3434
        %v3437 = vmul.f32 %v3429, %v3434
        %v3439 = vlaneseq
        %v3440 = vshrl.u32 %v3439, 7
        %v3441 = vsub.s32 0, %v3440
        %v3442 = vrot.slane %v3403, %v3441
        %v3444 = vadd.f32 %v3436, %v3442
        %v3445 = vadd.f32 %v3437, %v3442
        %3446 = vst.msk [vmem:[#allocation2] sm:$0xff] %vm917, %v3444
        %3447 = vst.msk [vmem:[#allocation2 + $0x8] sm:$0xff] %vm917, %v3445
        %p3448 = scmp.eq.s32.totalorder %s35, 1
        // Predicated region
        $region113: #{tpu_custom_call.1} parent=95 // pred_check
          %p3449 = pneg %p3448
        $region114: #{tpu_custom_call.1} parent=95 // pred_check_branch
          %3451 = sbr.rel (%p3449) target = $region116
        $region115: #{tpu_custom_call.1} parent=95 // pred_region
          %v3452 = vld [vmem:[%s17] sm:$0x1]
          %v3453 = vld [vmem:[%s18] sm:$0x1]
          %v3454 = vsel %vm917, %v3444, 0.0
          %3455 = vadd.xlane.f32.xlu0 %v3454
          %v3456 = vpop.xlane.xlu0 %3455
          %v3457 = vsel %vm917, %v3445, 0.0
          %3458 = vadd.xlane.f32.xlu0 %v3457
          %v3459 = vpop.xlane.xlu0 %3458
          %v3460 = vmul.f32 %v3456, %v3208
          %v3461 = vmul.f32 %v3459, %v3208
          %v3462 = vsub.f32 %v3444, %v3460
          %v3463 = vsub.f32 %v3445, %v3461
          %v3464 = vmul.f32 %v3462, %v3462
          %v3465 = vmul.f32 %v3463, %v3463
          %v3466 = vsel %vm917, %v3464, 0.0
          %3467 = vadd.xlane.f32.xlu0 %v3466
          %v3468 = vpop.xlane.xlu0 %3467
          %v3469 = vsel %vm917, %v3465, 0.0
          %3470 = vadd.xlane.f32.xlu0 %v3469
          %v3471 = vpop.xlane.xlu0 %3470
          %v3472 = vmul.f32 %v3468, %v3208
          %v3473 = vmul.f32 %v3471, %v3208
          %v3474 = vadd.f32 %v3472, 1e-05
          %v3475 = vadd.f32 %v3473, 1e-05
          %v3476 = vrsqrt.pop %v3474
          %v3477 = vrsqrt.pop %v3475
          %v3478 = vmul.f32 %v3462, %v3476
          %v3479 = vmul.f32 %v3463, %v3477
          %v3481 = vlaneseq
          %v3482 = vshrl.u32 %v3481, 7
          %v3483 = vsub.s32 0, %v3482
          %v3484 = vrot.slane %v3452, %v3483
          %v3486 = vmul.f32 %v3478, %v3484
          %v3487 = vmul.f32 %v3479, %v3484
          %v3489 = vlaneseq
          %v3490 = vshrl.u32 %v3489, 7
          %v3491 = vsub.s32 0, %v3490
          %v3492 = vrot.slane %v3453, %v3491
          %v3494 = vadd.f32 %v3486, %v3492
          %v3495 = vadd.f32 %v3487, %v3492
          %3496 = vst.msk [vmem:[#allocation9] sm:$0xff] %vm917, %v3494
          %3497 = vst.msk [vmem:[#allocation9 + $0x8] sm:$0xff] %vm917, %v3495
        $region116: #{tpu_custom_call.1} parent=95 // pred_fallthru
          _
        // Predicated region
        $region117: #{tpu_custom_call.1} parent=95 // pred_check
          %p3498 = pneg %p527
        $region118: #{tpu_custom_call.1} parent=95 // pred_check_branch
          %3500 = sbr.rel (%p3498) target = $region120
        $region119: #{tpu_custom_call.1} parent=95 // pred_region
          %s3502 = ssub.s32 256, 256
          %3503 = vsyncadd [#allocation5], %s3502
          %s3504 = sshll.u32 [#allocation9], 4
          %s3505 = int_to_ptr.vmem [resolvable:$true] %s3504
          %3510 = dma.vmem_to_hbm [thread:$0]  %s3505, 256, %s19, [#allocation5], 128, 128, 8
        $region120: #{tpu_custom_call.1} parent=95 // pred_fallthru
          _
        // Predicated region
        $region121: #{tpu_custom_call.1} parent=95 // pred_check
          %p3511 = pneg %p527
        $region122: #{tpu_custom_call.1} parent=95 // pred_check_branch
          %3513 = sbr.rel (%p3511) target = $region124
        $region123: #{tpu_custom_call.1} parent=95 // pred_region
          %3514 = dma.done [#allocation5], 256
        $region124: #{tpu_custom_call.1} parent=95 // pred_fallthru
          _
      $region96: #{tpu_custom_call.1} parent=5 // pred_fallthru
        _
      %p3515 = scmp.le.s32.totalorder 2, %s30
      // Predicated region
      $region125: #{tpu_custom_call.1} parent=5 // pred_check
        %p3516 = pneg %p3515
      $region126: #{tpu_custom_call.1} parent=5 // pred_check_branch
        %3518 = sbr.rel (%p3516) target = $region128
      $region127: #{tpu_custom_call.1} parent=5 // pred_region
        %s3519 = ssub.s32 %s30, 2
      $region128: #{tpu_custom_call.1} parent=5 // pred_fallthru
        _
    $region6: #{tpu_custom_call.1} parent=1 // loop_footer
      %s34 = sadd.s32 1, %s30
    $region7: #{tpu_custom_call.1} parent=1 // loop_footer_branch
      %29 = sbr.rel target = $region3
    $region8: #{tpu_custom_call.1} parent=1 // loop_exit
      _
    %3520 = vsyncpa [#allocation4], 1
    %s3521 = scalar_lea.sflag [#allocation4], 1
    %3522 = vsyncpa %s3521, 1
    %3523 = vsyncpa [#allocation7], 1
    %s3524 = scalar_lea.sflag [#allocation7], 1
    %3525 = vsyncpa %s3524, 1
    %3526 = vsyncpa [#allocation5], 1
    %s3527 = scalar_lea.sflag [#allocation5], 1
    %3528 = vsyncpa %s3527, 1

</llo_original>
